<compile_context>
chip_gen: v7x
topology: tpu7x:2x2x1
jax: 0.10.0
libtpu: 0.0.40
codegen_flags: <defaults>
</compile_context>

<pallas_src>
import functools

import jax
import jax.numpy as jnp
from jax.experimental import pallas as pl
from jax.experimental.pallas import tpu as pltpu

_EPS = 1e-5
_NEG_SLOPE = 0.01


# ---------------------------------------------------------------------------
# Fused (previous-stage BN+LeakyReLU prologue) + Conv3d(k3,p1) + BN stats.
# One grid step = one (batch, D-tile).
# ---------------------------------------------------------------------------
def _conv_stage_kernel(xc_ref, xp_ref, xn_ref, w_ref, b_ref, pre_ref,
                       y_ref, stats_ref, slab_ref, *,
                       tile_d, H, WCin, WCout, num_dt):
    """Lane-dense fused conv stage.

    xc_ref   : (tile_d, H, WCin)     bf16  center D-tile (C fused into lanes)
    xp_ref   : (H, WCin)             bf16  plane tile_start-1 (clamped)
    xn_ref   : (H, WCin)             bf16  plane tile_end     (clamped)
    w_ref    : (3, 3, WCin, WCout)   bf16  block-tridiagonal folded weights
    b_ref    : (1, WCout)            f32   conv bias tiled over W
    pre_ref  : (3, WCin)             f32   prologue [scale, shift, neg_slope]
    y_ref    : (tile_d, H, WCout)    bf16  raw conv output (pre-BN)
    stats_ref: (2, WCout)            f32   per-tile [sum, sum of squares]
    slab_ref : (tile_d+2, H+2, WCin) bf16  zero-halo activated-input slab
    """
    dt = pl.program_id(1)

    scale = pre_ref[0:1, :]
    shift = pre_ref[1:2, :]
    slope = pre_ref[2:3, :]

    def prologue(x):
        # Previous stage's BN-affine + LeakyReLU (identity rows when unused).
        z = x.astype(jnp.float32) * scale + shift
        return jnp.where(z >= 0.0, z, z * slope).astype(jnp.bfloat16)

    # Zero-halo slab assembly (replaces wrapper-side jnp.pad + im2col scratch).
    slab_ref[...] = jnp.zeros(slab_ref.shape, slab_ref.dtype)
    slab_ref[1:tile_d + 1, 1:H + 1, :] = prologue(xc_ref[...])

    @pl.when(dt > 0)
    def _():
        slab_ref[0:1, 1:H + 1, :] = prologue(xp_ref[...]).reshape(1, H, WCin)

    @pl.when(dt < num_dt - 1)
    def _():
        slab_ref[tile_d + 1:tile_d + 2, 1:H + 1, :] = (
            prologue(xn_ref[...]).reshape(1, H, WCin))

    bias = b_ref[...]

    def plane_body(d, carry):
        s_acc, q_acc = carry
        acc = jnp.zeros((H, WCout), jnp.float32)
        for kd in range(3):
            plane = slab_ref[pl.ds(d + kd, 1)].reshape(H + 2, WCin)
            for kh in range(3):
                acc = acc + jnp.dot(plane[kh:kh + H, :], w_ref[kd, kh],
                                    preferred_element_type=jnp.float32)
        acc = acc + bias
        y_ref[pl.ds(d, 1)] = acc.astype(y_ref.dtype).reshape(1, H, WCout)
        s_acc = s_acc + jnp.sum(acc, axis=0, keepdims=True)
        q_acc = q_acc + jnp.sum(acc * acc, axis=0, keepdims=True)
        return s_acc, q_acc

    zero = jnp.zeros((1, WCout), jnp.float32)
    s_tot, q_tot = jax.lax.fori_loop(0, tile_d, plane_body, (zero, zero))
    stats_ref[0:1, :] = s_tot
    stats_ref[1:2, :] = q_tot


# ---------------------------------------------------------------------------
# Standalone lane-dense BN-affine + LeakyReLU (final stage / pad fallback).
# ---------------------------------------------------------------------------
def _bn_lrelu_kernel(y_ref, scale_ref, shift_ref, o_ref, *, neg_slope):
    z = y_ref[...].astype(jnp.float32) * scale_ref[...] + shift_ref[...]
    o_ref[...] = jnp.where(z >= 0.0, z, neg_slope * z).astype(o_ref.dtype)


def _bn_lrelu(y_fused, scale_c, shift_c, *, W, out_dtype, neg_slope=_NEG_SLOPE):
    N, D, H, WC = y_fused.shape
    R = N * D * H
    y2 = y_fused.reshape(R, WC)
    scale = jnp.tile(scale_c.astype(jnp.float32), W).reshape(1, WC)
    shift = jnp.tile(shift_c.astype(jnp.float32), W).reshape(1, WC)

    rows_blk = R
    if R * WC * 12 > (8 << 20):            # split only if one block is large
        for cand in range(4096, 7, -8):
            if R % cand == 0:
                rows_blk = cand
                break

    out = pl.pallas_call(
        functools.partial(_bn_lrelu_kernel, neg_slope=neg_slope),
        grid=(R // rows_blk,),
        in_specs=[pl.BlockSpec((rows_blk, WC), lambda r: (r, 0)),
                  pl.BlockSpec((1, WC), lambda r: (0, 0)),
                  pl.BlockSpec((1, WC), lambda r: (0, 0))],
        out_specs=pl.BlockSpec((rows_blk, WC), lambda r: (r, 0)),
        out_shape=jax.ShapeDtypeStruct((R, WC), out_dtype),
        compiler_params=pltpu.CompilerParams(
            dimension_semantics=("parallel",), vmem_limit_bytes=32 << 20),
    )(y2, scale, shift)
    return out.reshape(N, D, H, WC)


# ---------------------------------------------------------------------------
# Weight folding: (3,3,3,Cin,Cout) -> (3,3,W*Cin,W*Cout) block-tridiagonal.
# ---------------------------------------------------------------------------
def _fold_conv_weights(w, W):
    _, _, _, Cin, Cout = w.shape
    wbig = jnp.zeros((3, 3, W * Cin, W * Cout), w.dtype)
    for kw in range(3):
        for wo in range(W):
            wi = wo + kw - 1
            if 0 <= wi < W:
                wbig = wbig.at[:, :, wi * Cin:(wi + 1) * Cin,
                               wo * Cout:(wo + 1) * Cout].set(w[:, :, kw])
    return wbig


# ---------------------------------------------------------------------------
# One fused Conv3d stage on a lane-dense (N, D, H, W*Cin) input.
# ---------------------------------------------------------------------------
def _conv3d_raw(x_fused, w, b, pre, *, W):
    """Returns raw (pre-BN) conv output (N, D, H, W*Cout) bf16 plus the
    train-mode batch mean/variance of that output (per channel)."""
    N, D, H, WCin = x_fused.shape
    Cin = WCin // W
    Cout = w.shape[-1]
    WCout = W * Cout
    assert w.shape == (3, 3, 3, Cin, Cout), (w.shape, Cin, Cout)

    # Largest divisor of D <= 8: bounds the per-step VMEM footprint (v7x has
    # 64 MiB / TensorCore) while keeping enough grid steps to pipeline.
    tile_d = 1
    for t in range(min(8, D), 0, -1):
        if D % t == 0:
            tile_d = t
            break
    num_dt = D // tile_d

    wbig = _fold_conv_weights(w.astype(jnp.float32), W).astype(jnp.bfloat16)
    b_f = jnp.tile(b.astype(jnp.float32), W).reshape(1, WCout)
    if pre is None:
        pre = (jnp.ones((Cin,), jnp.float32),
               jnp.zeros((Cin,), jnp.float32),
               jnp.ones((Cin,), jnp.float32))
    pre_mat = jnp.stack([jnp.tile(p.astype(jnp.float32), W) for p in pre])

    # Per-step VMEM footprint -> limit (double-buffered blocks + slab scratch).
    step_bytes = (2 * tile_d * H * WCin * 2 + 4 * H * WCin * 2
                  + 2 * 9 * WCin * WCout * 2 + 2 * tile_d * H * WCout * 2
                  + (tile_d + 2) * (H + 2) * WCin * 2)
    vmem_limit = int(min(48 << 20, max(16 << 20, 4 * step_bytes)))

    kernel = functools.partial(_conv_stage_kernel, tile_d=tile_d, H=H,
                               WCin=WCin, WCout=WCout, num_dt=num_dt)
    x_bf = x_fused.astype(jnp.bfloat16)

    y_raw, stats = pl.pallas_call(
        kernel,
        grid=(N, num_dt),
        in_specs=[
            # center D-tile (halo-only residency; not the full batch element)
            pl.BlockSpec((None, tile_d, H, WCin), lambda n, dt: (n, dt, 0, 0)),
            # previous / next single halo planes of the same array (clamped)
            pl.BlockSpec((None, None, H, WCin),
                         lambda n, dt: (n, jnp.maximum(dt * tile_d - 1, 0),
                                        0, 0)),
            pl.BlockSpec((None, None, H, WCin),
                         lambda n, dt: (n, jnp.minimum((dt + 1) * tile_d,
                                                       D - 1), 0, 0)),
            pl.BlockSpec((3, 3, WCin, WCout), lambda n, dt: (0, 0, 0, 0)),
            pl.BlockSpec((1, WCout), lambda n, dt: (0, 0)),
            pl.BlockSpec((3, WCin), lambda n, dt: (0, 0)),
        ],
        out_specs=[
            pl.BlockSpec((None, tile_d, H, WCout), lambda n, dt: (n, dt, 0, 0)),
            pl.BlockSpec((None, None, 2, WCout), lambda n, dt: (n, dt, 0, 0)),
        ],
        out_shape=[
            jax.ShapeDtypeStruct((N, D, H, WCout), jnp.bfloat16),
            jax.ShapeDtypeStruct((N, num_dt, 2, WCout), jnp.float32),
        ],
        scratch_shapes=[pltpu.VMEM((tile_d + 2, H + 2, WCin), jnp.bfloat16)],
        compiler_params=pltpu.CompilerParams(
            dimension_semantics=("parallel", "parallel"),
            vmem_limit_bytes=vmem_limit),
    )(x_bf, x_bf, x_bf, wbig, b_f, pre_mat)

    # Finalize train-mode BatchNorm statistics (tiny cross-tile reduction).
    # TODO(synk): E[x^2]-E[x]^2 from f32 partial sums can cancel for huge
    # volumes; fine at these sizes and tolerances.
    tot = jnp.sum(stats, axis=(0, 1)).reshape(2, W, Cout).sum(axis=1)
    cnt = jnp.float32(N * D * H * W)
    mean = tot[0] / cnt
    var = tot[1] / cnt - mean * mean          # biased (train-mode) variance
    return y_raw, mean, var


# ---------------------------------------------------------------------------
# Trilinear upsample x2 (align_corners=True): gather + VPU lerp, plain JAX.
# ---------------------------------------------------------------------------
def _linear_upsample_axis_x2(x, axis):
    s_in = x.shape[axis]
    s_out = 2 * s_in
    if s_in == 1:
        return jnp.concatenate([x, x], axis=axis)
    pos = jnp.arange(s_out, dtype=jnp.float32) * ((s_in - 1) / (s_out - 1))
    lo = jnp.clip(jnp.floor(pos).astype(jnp.int32), 0, s_in - 2)
    frac = pos - lo.astype(jnp.float32)
    xlo = jnp.take(x, lo, axis=axis)
    xhi = jnp.take(x, lo + 1, axis=axis)
    shape = [1] * x.ndim
    shape[axis] = s_out
    return xlo + frac.reshape(shape) * (xhi - xlo)


def _trilinear_upsample_x2(x):
    # TODO(synk): upsample / pad / concat are pure data movement kept in plain
    # JAX (gather + lerp on the VPU) rather than Pallas kernels.
    x = _linear_upsample_axis_x2(x, 1)
    x = _linear_upsample_axis_x2(x, 2)
    x = _linear_upsample_axis_x2(x, 3)
    return x


# ---------------------------------------------------------------------------
# UpConvBlock forward (PyTorch NCDHW in / NCDHW out, train-mode BatchNorm).
# ---------------------------------------------------------------------------
def upconv_block_forward(x1_ncdhw, x2_ncdhw, params):
    eps, slope = _EPS, _NEG_SLOPE
    x1 = jnp.transpose(x1_ncdhw, (0, 2, 3, 4, 1)).astype(jnp.float32)
    x2 = jnp.transpose(x2_ncdhw, (0, 2, 3, 4, 1)).astype(jnp.float32)

    # Upsample(scale=2, trilinear, align_corners=True)
    x1u = _trilinear_upsample_x2(x1)
    N, D, H, W, Cin = x1u.shape
    Cu = params["wu"].shape[-1]

    # upconv conv (identity prologue); its BN+LeakyReLU is deferred into the
    # next stage's prologue (epilogue fusion, no extra HBM round trip).
    yu_raw, mu, vu = _conv3d_raw(
        x1u.astype(jnp.bfloat16).reshape(N, D, H, W * Cin),
        params["wu"], params["bu"], None, W=W)
    scale_u = params["gu"].astype(jnp.float32) * jax.lax.rsqrt(vu + eps)
    shift_u = params["betau"].astype(jnp.float32) - mu * scale_u

    dz = x2.shape[1] - D
    dy = x2.shape[2] - H
    dx = x2.shape[3] - W
    if (dz, dy, dx) != (0, 0, 0):
        # Zero padding happens *after* the activation in the reference module,
        # so the fused-prologue shortcut is invalid: apply it standalone here.
        yu = _bn_lrelu(yu_raw, scale_u, shift_u, W=W,
                       out_dtype=jnp.bfloat16).reshape(N, D, H, W, Cu)
        yu = jnp.pad(yu, ((0, 0), (dz // 2, dz - dz // 2),
                          (dy // 2, dy - dy // 2), (dx // 2, dx - dx // 2),
                          (0, 0)))
        pre_u = (jnp.ones((Cu,), jnp.float32), jnp.zeros((Cu,), jnp.float32),
                 jnp.ones((Cu,), jnp.float32))
    else:
        yu = yu_raw.reshape(N, D, H, W, Cu)
        pre_u = (scale_u, shift_u, jnp.full((Cu,), slope, jnp.float32))

    # concat([x2, x1], C).  TODO(synk): still materialized in plain JAX (one
    # small bf16 round trip) instead of writing into a channel slice in-kernel.
    N2, D2, H2, W2, C2 = x2.shape
    xcat = jnp.concatenate([x2.astype(jnp.bfloat16), yu.astype(jnp.bfloat16)],
                           axis=-1)
    Ccat = C2 + Cu
    pre_cat = (jnp.concatenate([jnp.ones((C2,), jnp.float32), pre_u[0]]),
               jnp.concatenate([jnp.zeros((C2,), jnp.float32), pre_u[1]]),
               jnp.concatenate([jnp.ones((C2,), jnp.float32), pre_u[2]]))

    # ConvBlock stage 1 (prologue = pending upconv BN+LeakyReLU on x1 channels,
    # identity on x2 channels).
    y1_raw, m1, v1 = _conv3d_raw(xcat.reshape(N2, D2, H2, W2 * Ccat),
                                 params["w1"], params["b1"], pre_cat, W=W2)
    Cout1 = params["w1"].shape[-1]
    scale_1 = params["g1"].astype(jnp.float32) * jax.lax.rsqrt(v1 + eps)
    shift_1 = params["beta1"].astype(jnp.float32) - m1 * scale_1

    # ConvBlock stage 2 (prologue = stage-1 BN+LeakyReLU); input already in the
    # fused lane-dense layout -> zero relayout between stages.
    y2_raw, m2, v2 = _conv3d_raw(
        y1_raw, params["w2"], params["b2"],
        (scale_1, shift_1, jnp.full((Cout1,), slope, jnp.float32)), W=W2)
    Cout2 = params["w2"].shape[-1]
    scale_2 = params["g2"].astype(jnp.float32) * jax.lax.rsqrt(v2 + eps)
    shift_2 = params["beta2"].astype(jnp.float32) - m2 * scale_2

    # Final standalone BN+LeakyReLU epilogue (lane-dense, large blocks).
    out = _bn_lrelu(y2_raw, scale_2, shift_2, W=W2, out_dtype=jnp.float32)
    out = out.reshape(N2, D2, H2, W2, Cout2)
    return jnp.transpose(out, (0, 4, 1, 2, 3))


def init_params(key, in_channels, out_channels):
    ks = jax.random.split(key, 12)

    def conv_w(k, cin, cout):
        return 0.1 * jax.random.normal(k, (3, 3, 3, cin, cout), jnp.float32)

    return {
        "wu": conv_w(ks[0], in_channels, out_channels),
        "bu": 0.1 * jax.random.normal(ks[1], (out_channels,), jnp.float32),
        "gu": 1.0 + 0.1 * jax.random.normal(ks[2], (out_channels,), jnp.float32),
        "betau": 0.1 * jax.random.normal(ks[3], (out_channels,), jnp.float32),
        "w1": conv_w(ks[4], in_channels, out_channels),
        "b1": 0.1 * jax.random.normal(ks[5], (out_channels,), jnp.float32),
        "g1": 1.0 + 0.1 * jax.random.normal(ks[6], (out_channels,), jnp.float32),
        "beta1": 0.1 * jax.random.normal(ks[7], (out_channels,), jnp.float32),
        "w2": conv_w(ks[8], out_channels, out_channels),
        "b2": 0.1 * jax.random.normal(ks[9], (out_channels,), jnp.float32),
        "g2": 1.0 + 0.1 * jax.random.normal(ks[10], (out_channels,), jnp.float32),
        "beta2": 0.1 * jax.random.normal(ks[11], (out_channels,), jnp.float32),
    }


# ---------------------------------------------------------------------------
# Plain-JAX reference (mirrors the kernel's bf16 cast points so the comparison
# isolates kernel logic from the deliberate bf16-MXU quantization).
# ---------------------------------------------------------------------------
def _bf(x):
    return x.astype(jnp.bfloat16).astype(jnp.float32)


def _ref_conv_raw(x, w, b):
    y = jax.lax.conv_general_dilated(
        x.astype(jnp.bfloat16), w.astype(jnp.bfloat16),
        window_strides=(1, 1, 1), padding="SAME",
        dimension_numbers=("NDHWC", "DHWIO", "NDHWC"),
        preferred_element_type=jnp.float32) + b.astype(jnp.float32)
    mean = jnp.mean(y, axis=(0, 1, 2, 3))
    var = jnp.mean(y * y, axis=(0, 1, 2, 3)) - mean * mean
    return y, mean, var


def _ref_act(y_raw, g, bt, mean, var, eps=_EPS, slope=_NEG_SLOPE):
    scale = g * jax.lax.rsqrt(var + eps)
    shift = bt - mean * scale
    z = _bf(y_raw) * scale + shift          # kernel stores raw conv out as bf16
    return jnp.where(z >= 0.0, z, slope * z)


def _ref_forward(x1_ncdhw, x2_ncdhw, p):
    x1 = jnp.transpose(x1_ncdhw, (0, 2, 3, 4, 1)).astype(jnp.float32)
    x2 = jnp.transpose(x2_ncdhw, (0, 2, 3, 4, 1)).astype(jnp.float32)
    x1u = _trilinear_upsample_x2(x1)

    yu_raw, mu, vu = _ref_conv_raw(_bf(x1u), p["wu"], p["bu"])
    yu = _ref_act(yu_raw, p["gu"], p["betau"], mu, vu)
    dz = x2.shape[1] - yu.shape[1]
    dy = x2.shape[2] - yu.shape[2]
    dx = x2.shape[3] - yu.shape[3]
    yu = jnp.pad(yu, ((0, 0), (dz // 2, dz - dz // 2),
                      (dy // 2, dy - dy // 2), (dx // 2, dx - dx // 2), (0, 0)))
    xc = jnp.concatenate([x2, yu], axis=-1)
    y1_raw, m1, v1 = _ref_conv_raw(_bf(xc), p["w1"], p["b1"])
    y1 = _ref_act(y1_raw, p["g1"], p["beta1"], m1, v1)
    y2_raw, m2, v2 = _ref_conv_raw(_bf(y1), p["w2"], p["b2"])
    y2 = _ref_act(y2_raw, p["g2"], p["beta2"], m2, v2)
    return jnp.transpose(y2, (0, 4, 1, 2, 3))


if __name__ == "__main__":
    key = jax.random.PRNGKey(0)
    k1, k2, kp = jax.random.split(key, 3)

    N = 2
    in_channels, out_channels = 16, 8
    D1 = H1 = W1 = 8                      # x1 (deep feature) spatial size
    D2 = H2 = W2 = 16                     # x2 (skip connection) spatial size

    x1 = jax.random.normal(k1, (N, in_channels, D1, H1, W1), jnp.float32)
    x2 = jax.random.normal(k2, (N, in_channels - out_channels, D2, H2, W2),
                           jnp.float32)
    params = init_params(kp, in_channels, out_channels)

    fwd = jax.jit(upconv_block_forward)
    out = jax.block_until_ready(fwd(x1, x2, params))
    assert out.shape == (N, out_channels, D2, H2, W2), out.shape

    ref = jax.block_until_ready(jax.jit(_ref_forward)(x1, x2, params))
    # Relative L2 check (robust to isolated 1-ulp bf16 rounding divergences).
    rel = jnp.sqrt(jnp.sum((out - ref) ** 2)) / jnp.sqrt(jnp.sum(ref ** 2))
    assert rel < 2e-2, f"relative L2 error too large: {rel}"

    print("KERNEL_OK")
</pallas_src>

<mosaic_0001>
module attributes {stable_mosaic.version = 11 : i64} {
  func.func @_conv_stage_kernel(%arg0: i32, %arg1: i32, %arg2: memref<1x8x16x256xbf16, #tpu.memory_space<vmem>>, %arg3: memref<1x1x16x256xbf16, #tpu.memory_space<vmem>>, %arg4: memref<1x1x16x256xbf16, #tpu.memory_space<vmem>>, %arg5: memref<3x3x256x128xbf16, #tpu.memory_space<vmem>>, %arg6: memref<1x128xf32, #tpu.memory_space<vmem>>, %arg7: memref<3x256xf32, #tpu.memory_space<vmem>>, %arg8: memref<1x8x16x128xbf16, #tpu.memory_space<vmem>>, %arg9: memref<1x1x2x128xf32, #tpu.memory_space<vmem>>, %arg10: memref<10x18x256xbf16, #tpu.memory_space<vmem>>) attributes {dimension_semantics = [#tpu.dimension_semantics<parallel>, #tpu.dimension_semantics<parallel>], iteration_bounds = array<i64: 2, 2>, scalar_prefetch = 0 : i64, scratch_operands = 1 : i64, tpu.core_type = #tpu.core_type<tc>, window_params = [{transform_indices = @transform_0, window_bounds = array<i64: 1, 8, 16, 256>}, {transform_indices = @transform_1, window_bounds = array<i64: 1, 1, 16, 256>}, {transform_indices = @transform_2, window_bounds = array<i64: 1, 1, 16, 256>}, {pipeline_mode = #tpu.pipeline_mode<synchronous>, transform_indices = @transform_3, window_bounds = array<i64: 3, 3, 256, 128>}, {pipeline_mode = #tpu.pipeline_mode<synchronous>, transform_indices = @transform_4, window_bounds = array<i64: 1, 128>}, {pipeline_mode = #tpu.pipeline_mode<synchronous>, transform_indices = @transform_5, window_bounds = array<i64: 3, 256>}, {transform_indices = @transform_6, window_bounds = array<i64: 1, 8, 16, 128>}, {transform_indices = @transform_7, window_bounds = array<i64: 1, 1, 2, 128>}]} {
    %c0 = arith.constant 0 : index
    %c0_0 = arith.constant 0 : index
    %0 = vector.load %arg7[%c0, %c0_0] : memref<3x256xf32, #tpu.memory_space<vmem>>, vector<1x256xf32>
    %c1 = arith.constant 1 : index
    %c0_1 = arith.constant 0 : index
    %1 = vector.load %arg7[%c1, %c0_1] : memref<3x256xf32, #tpu.memory_space<vmem>>, vector<1x256xf32>
    %c2 = arith.constant 2 : index
    %c0_2 = arith.constant 0 : index
    %2 = vector.load %arg7[%c2, %c0_2] : memref<3x256xf32, #tpu.memory_space<vmem>>, vector<1x256xf32>
    %cst = arith.constant 0.000000e+00 : bf16
    %3 = vector.broadcast %cst : bf16 to vector<10x18x256xbf16>
    %c0_3 = arith.constant 0 : index
    %c0_4 = arith.constant 0 : index
    %c0_5 = arith.constant 0 : index
    %4 = vector.load %arg10[%c0_3, %c0_4, %c0_5] : memref<10x18x256xbf16, #tpu.memory_space<vmem>>, vector<10x18x256xbf16>
    tpu.vector_store %arg10[%c0_3, %c0_4, %c0_5], %3 {strides = array<i32>} : memref<10x18x256xbf16, #tpu.memory_space<vmem>>, vector<10x18x256xbf16>,
    %c0_6 = arith.constant 0 : index
    %c0_7 = arith.constant 0 : index
    %c0_8 = arith.constant 0 : index
    %c0_9 = arith.constant 0 : index
    %5 = vector.load %arg2[%c0_6, %c0_7, %c0_8, %c0_9] : memref<1x8x16x256xbf16, #tpu.memory_space<vmem>>, vector<1x8x16x256xbf16>
    %6 = vector.shape_cast %5 : vector<1x8x16x256xbf16> to vector<8x16x256xbf16>
    %7 = arith.extf %6 : vector<8x16x256xbf16> to vector<8x16x256xf32>
    %8 = vector.shape_cast %0 : vector<1x256xf32> to vector<1x1x256xf32>
    %9 = vector.broadcast %8 : vector<1x1x256xf32> to vector<8x16x256xf32>
    %10 = arith.mulf %7, %9 : vector<8x16x256xf32>
    %11 = vector.shape_cast %1 : vector<1x256xf32> to vector<1x1x256xf32>
    %12 = vector.broadcast %11 : vector<1x1x256xf32> to vector<8x16x256xf32>
    %13 = arith.addf %10, %12 : vector<8x16x256xf32>
    %cst_10 = arith.constant 0.000000e+00 : f32
    %14 = vector.broadcast %cst_10 : f32 to vector<8x16x256xf32>
    %15 = arith.cmpf oge, %13, %14 : vector<8x16x256xf32>
    %16 = vector.shape_cast %2 : vector<1x256xf32> to vector<1x1x256xf32>
    %17 = vector.broadcast %16 : vector<1x1x256xf32> to vector<8x16x256xf32>
    %18 = arith.mulf %13, %17 : vector<8x16x256xf32>
    %19 = arith.select %15, %13, %18 : vector<8x16x256xi1>, vector<8x16x256xf32>
    %20 = arith.truncf %19 : vector<8x16x256xf32> to vector<8x16x256xbf16>
    %c1_11 = arith.constant 1 : index
    %c1_12 = arith.constant 1 : index
    %c0_13 = arith.constant 0 : index
    %21 = vector.load %arg10[%c1_11, %c1_12, %c0_13] : memref<10x18x256xbf16, #tpu.memory_space<vmem>>, vector<8x16x256xbf16>
    tpu.vector_store %arg10[%c1_11, %c1_12, %c0_13], %20 {strides = array<i32>} : memref<10x18x256xbf16, #tpu.memory_space<vmem>>, vector<8x16x256xbf16>,
    %c0_i32 = arith.constant 0 : i32
    %22 = arith.cmpi sgt, %arg1, %c0_i32 : i32
    %23 = arith.extui %22 : i1 to i32
    %c0_i32_14 = arith.constant 0 : i32
    %24 = arith.cmpi ne, %23, %c0_i32_14 : i32
    scf.if %24 {
      %c0_30 = arith.constant 0 : index
      %c0_31 = arith.constant 0 : index
      %c0_32 = arith.constant 0 : index
      %c0_33 = arith.constant 0 : index
      %38 = vector.load %arg3[%c0_30, %c0_31, %c0_32, %c0_33] : memref<1x1x16x256xbf16, #tpu.memory_space<vmem>>, vector<1x1x16x256xbf16>
      %39 = vector.shape_cast %38 : vector<1x1x16x256xbf16> to vector<16x256xbf16>
      %40 = arith.extf %39 : vector<16x256xbf16> to vector<16x256xf32>
      %41 = vector.broadcast %0 : vector<1x256xf32> to vector<16x256xf32>
      %42 = arith.mulf %40, %41 : vector<16x256xf32>
      %43 = vector.broadcast %1 : vector<1x256xf32> to vector<16x256xf32>
      %44 = arith.addf %42, %43 : vector<16x256xf32>
      %cst_34 = arith.constant 0.000000e+00 : f32
      %45 = vector.broadcast %cst_34 : f32 to vector<16x256xf32>
      %46 = arith.cmpf oge, %44, %45 : vector<16x256xf32>
      %47 = vector.broadcast %2 : vector<1x256xf32> to vector<16x256xf32>
      %48 = arith.mulf %44, %47 : vector<16x256xf32>
      %49 = arith.select %46, %44, %48 : vector<16x256xi1>, vector<16x256xf32>
      %50 = arith.truncf %49 : vector<16x256xf32> to vector<16x256xbf16>
      %51 = vector.shape_cast %50 : vector<16x256xbf16> to vector<1x16x256xbf16>
      %c0_35 = arith.constant 0 : index
      %c1_36 = arith.constant 1 : index
      %c0_37 = arith.constant 0 : index
      %52 = vector.load %arg10[%c0_35, %c1_36, %c0_37] : memref<10x18x256xbf16, #tpu.memory_space<vmem>>, vector<1x16x256xbf16>
      tpu.vector_store %arg10[%c0_35, %c1_36, %c0_37], %51 {strides = array<i32>} : memref<10x18x256xbf16, #tpu.memory_space<vmem>>, vector<1x16x256xbf16>,
    } else {
    }
    %c1_i32 = arith.constant 1 : i32
    %25 = arith.cmpi slt, %arg1, %c1_i32 : i32
    %26 = arith.extui %25 : i1 to i32
    %c0_i32_15 = arith.constant 0 : i32
    %27 = arith.cmpi ne, %26, %c0_i32_15 : i32
    scf.if %27 {
      %c0_30 = arith.constant 0 : index
      %c0_31 = arith.constant 0 : index
      %c0_32 = arith.constant 0 : index
      %c0_33 = arith.constant 0 : index
      %38 = vector.load %arg4[%c0_30, %c0_31, %c0_32, %c0_33] : memref<1x1x16x256xbf16, #tpu.memory_space<vmem>>, vector<1x1x16x256xbf16>
      %39 = vector.shape_cast %38 : vector<1x1x16x256xbf16> to vector<16x256xbf16>
      %40 = arith.extf %39 : vector<16x256xbf16> to vector<16x256xf32>
      %41 = vector.broadcast %0 : vector<1x256xf32> to vector<16x256xf32>
      %42 = arith.mulf %40, %41 : vector<16x256xf32>
      %43 = vector.broadcast %1 : vector<1x256xf32> to vector<16x256xf32>
      %44 = arith.addf %42, %43 : vector<16x256xf32>
      %cst_34 = arith.constant 0.000000e+00 : f32
      %45 = vector.broadcast %cst_34 : f32 to vector<16x256xf32>
      %46 = arith.cmpf oge, %44, %45 : vector<16x256xf32>
      %47 = vector.broadcast %2 : vector<1x256xf32> to vector<16x256xf32>
      %48 = arith.mulf %44, %47 : vector<16x256xf32>
      %49 = arith.select %46, %44, %48 : vector<16x256xi1>, vector<16x256xf32>
      %50 = arith.truncf %49 : vector<16x256xf32> to vector<16x256xbf16>
      %51 = vector.shape_cast %50 : vector<16x256xbf16> to vector<1x16x256xbf16>
      %c9 = arith.constant 9 : index
      %c1_35 = arith.constant 1 : index
      %c0_36 = arith.constant 0 : index
      %52 = vector.load %arg10[%c9, %c1_35, %c0_36] : memref<10x18x256xbf16, #tpu.memory_space<vmem>>, vector<1x16x256xbf16>
      tpu.vector_store %arg10[%c9, %c1_35, %c0_36], %51 {strides = array<i32>} : memref<10x18x256xbf16, #tpu.memory_space<vmem>>, vector<1x16x256xbf16>,
    } else {
    }
    %c0_16 = arith.constant 0 : index
    %c0_17 = arith.constant 0 : index
    %28 = vector.load %arg6[%c0_16, %c0_17] : memref<1x128xf32, #tpu.memory_space<vmem>>, vector<1x128xf32>
    %cst_18 = arith.constant 0.000000e+00 : f32
    %29 = vector.broadcast %cst_18 : f32 to vector<1x128xf32>
    %c0_i32_19 = arith.constant 0 : i32
    %c8_i32 = arith.constant 8 : i32
    %30 = arith.addi %c0_i32_19, %c8_i32 : i32
    %c1_i32_20 = arith.constant 1 : i32
    %31:2 = scf.for %arg11 = %c0_i32_19 to %30 step %c1_i32_20 iter_args(%arg12 = %29, %arg13 = %29) -> (vector<1x128xf32>, vector<1x128xf32>)  : i32 {
      %cst_30 = arith.constant 0.000000e+00 : f32
      %38 = vector.broadcast %cst_30 : f32 to vector<16x128xf32>
      %c0_i32_31 = arith.constant 0 : i32
      %39 = arith.addi %arg11, %c0_i32_31 : i32
      %40 = arith.index_cast %39 : i32 to index
      %c0_32 = arith.constant 0 : index
      %c0_33 = arith.constant 0 : index
      %41 = vector.load %arg10[%40, %c0_32, %c0_33] : memref<10x18x256xbf16, #tpu.memory_space<vmem>>, vector<1x18x256xbf16>
      %42 = vector.shape_cast %41 : vector<1x18x256xbf16> to vector<18x256xbf16>
      %43 = vector.extract_strided_slice %42 {offsets = [0, 0], sizes = [16, 256], strides = [1, 1]} : vector<18x256xbf16> to vector<16x256xbf16>
      %c0_34 = arith.constant 0 : index
      %c0_35 = arith.constant 0 : index
      %c0_36 = arith.constant 0 : index
      %c0_37 = arith.constant 0 : index
      %44 = vector.load %arg5[%c0_34, %c0_35, %c0_36, %c0_37] : memref<3x3x256x128xbf16, #tpu.memory_space<vmem>>, vector<1x1x256x128xbf16>
      %45 = vector.shape_cast %44 : vector<1x1x256x128xbf16> to vector<256x128xbf16>
      %cst_38 = arith.constant dense<0.000000e+00> : vector<16x128xf32>
      %46 = tpu.matmul %43, %45, %cst_38 {dimension_numbers = #tpu.dot_dimension_numbers<[1], [0], [0], [1], [0, 0, 1, 1], [], []>} : vector<16x256xbf16>, vector<256x128xbf16>, vector<16x128xf32> -> vector<16x128xf32>
      %47 = arith.addf %38, %46 : vector<16x128xf32>
      %48 = vector.extract_strided_slice %42 {offsets = [1, 0], sizes = [16, 256], strides = [1, 1]} : vector<18x256xbf16> to vector<16x256xbf16>
      %c0_39 = arith.constant 0 : index
      %c1_40 = arith.constant 1 : index
      %c0_41 = arith.constant 0 : index
      %c0_42 = arith.constant 0 : index
      %49 = vector.load %arg5[%c0_39, %c1_40, %c0_41, %c0_42] : memref<3x3x256x128xbf16, #tpu.memory_space<vmem>>, vector<1x1x256x128xbf16>
      %50 = vector.shape_cast %49 : vector<1x1x256x128xbf16> to vector<256x128xbf16>
      %cst_43 = arith.constant dense<0.000000e+00> : vector<16x128xf32>
      %51 = tpu.matmul %48, %50, %cst_43 {dimension_numbers = #tpu.dot_dimension_numbers<[1], [0], [0], [1], [0, 0, 1, 1], [], []>} : vector<16x256xbf16>, vector<256x128xbf16>, vector<16x128xf32> -> vector<16x128xf32>
      %52 = arith.addf %47, %51 : vector<16x128xf32>
      %53 = vector.extract_strided_slice %42 {offsets = [2, 0], sizes = [16, 256], strides = [1, 1]} : vector<18x256xbf16> to vector<16x256xbf16>
      %c0_44 = arith.constant 0 : index
      %c2_45 = arith.constant 2 : index
      %c0_46 = arith.constant 0 : index
      %c0_47 = arith.constant 0 : index
      %54 = vector.load %arg5[%c0_44, %c2_45, %c0_46, %c0_47] : memref<3x3x256x128xbf16, #tpu.memory_space<vmem>>, vector<1x1x256x128xbf16>
      %55 = vector.shape_cast %54 : vector<1x1x256x128xbf16> to vector<256x128xbf16>
      %cst_48 = arith.constant dense<0.000000e+00> : vector<16x128xf32>
      %56 = tpu.matmul %53, %55, %cst_48 {dimension_numbers = #tpu.dot_dimension_numbers<[1], [0], [0], [1], [0, 0, 1, 1], [], []>} : vector<16x256xbf16>, vector<256x128xbf16>, vector<16x128xf32> -> vector<16x128xf32>
      %57 = arith.addf %52, %56 : vector<16x128xf32>
      %c1_i32_49 = arith.constant 1 : i32
      %58 = arith.addi %arg11, %c1_i32_49 : i32
      %59 = arith.index_cast %58 : i32 to index
      %c0_50 = arith.constant 0 : index
      %c0_51 = arith.constant 0 : index
      %60 = vector.load %arg10[%59, %c0_50, %c0_51] : memref<10x18x256xbf16, #tpu.memory_space<vmem>>, vector<1x18x256xbf16>
      %61 = vector.shape_cast %60 : vector<1x18x256xbf16> to vector<18x256xbf16>
      %62 = vector.extract_strided_slice %61 {offsets = [0, 0], sizes = [16, 256], strides = [1, 1]} : vector<18x256xbf16> to vector<16x256xbf16>
      %c1_52 = arith.constant 1 : index
      %c0_53 = arith.constant 0 : index
      %c0_54 = arith.constant 0 : index
      %c0_55 = arith.constant 0 : index
      %63 = vector.load %arg5[%c1_52, %c0_53, %c0_54, %c0_55] : memref<3x3x256x128xbf16, #tpu.memory_space<vmem>>, vector<1x1x256x128xbf16>
      %64 = vector.shape_cast %63 : vector<1x1x256x128xbf16> to vector<256x128xbf16>
      %cst_56 = arith.constant dense<0.000000e+00> : vector<16x128xf32>
      %65 = tpu.matmul %62, %64, %cst_56 {dimension_numbers = #tpu.dot_dimension_numbers<[1], [0], [0], [1], [0, 0, 1, 1], [], []>} : vector<16x256xbf16>, vector<256x128xbf16>, vector<16x128xf32> -> vector<16x128xf32>
      %66 = arith.addf %57, %65 : vector<16x128xf32>
      %67 = vector.extract_strided_slice %61 {offsets = [1, 0], sizes = [16, 256], strides = [1, 1]} : vector<18x256xbf16> to vector<16x256xbf16>
      %c1_57 = arith.constant 1 : index
      %c1_58 = arith.constant 1 : index
      %c0_59 = arith.constant 0 : index
      %c0_60 = arith.constant 0 : index
      %68 = vector.load %arg5[%c1_57, %c1_58, %c0_59, %c0_60] : memref<3x3x256x128xbf16, #tpu.memory_space<vmem>>, vector<1x1x256x128xbf16>
      %69 = vector.shape_cast %68 : vector<1x1x256x128xbf16> to vector<256x128xbf16>
      %cst_61 = arith.constant dense<0.000000e+00> : vector<16x128xf32>
      %70 = tpu.matmul %67, %69, %cst_61 {dimension_numbers = #tpu.dot_dimension_numbers<[1], [0], [0], [1], [0, 0, 1, 1], [], []>} : vector<16x256xbf16>, vector<256x128xbf16>, vector<16x128xf32> -> vector<16x128xf32>
      %71 = arith.addf %66, %70 : vector<16x128xf32>
      %72 = vector.extract_strided_slice %61 {offsets = [2, 0], sizes = [16, 256], strides = [1, 1]} : vector<18x256xbf16> to vector<16x256xbf16>
      %c1_62 = arith.constant 1 : index
      %c2_63 = arith.constant 2 : index
      %c0_64 = arith.constant 0 : index
      %c0_65 = arith.constant 0 : index
      %73 = vector.load %arg5[%c1_62, %c2_63, %c0_64, %c0_65] : memref<3x3x256x128xbf16, #tpu.memory_space<vmem>>, vector<1x1x256x128xbf16>
      %74 = vector.shape_cast %73 : vector<1x1x256x128xbf16> to vector<256x128xbf16>
      %cst_66 = arith.constant dense<0.000000e+00> : vector<16x128xf32>
      %75 = tpu.matmul %72, %74, %cst_66 {dimension_numbers = #tpu.dot_dimension_numbers<[1], [0], [0], [1], [0, 0, 1, 1], [], []>} : vector<16x256xbf16>, vector<256x128xbf16>, vector<16x128xf32> -> vector<16x128xf32>
      %76 = arith.addf %71, %75 : vector<16x128xf32>
      %c2_i32 = arith.constant 2 : i32
      %77 = arith.addi %arg11, %c2_i32 : i32
      %78 = arith.index_cast %77 : i32 to index
      %c0_67 = arith.constant 0 : index
      %c0_68 = arith.constant 0 : index
      %79 = vector.load %arg10[%78, %c0_67, %c0_68] : memref<10x18x256xbf16, #tpu.memory_space<vmem>>, vector<1x18x256xbf16>
      %80 = vector.shape_cast %79 : vector<1x18x256xbf16> to vector<18x256xbf16>
      %81 = vector.extract_strided_slice %80 {offsets = [0, 0], sizes = [16, 256], strides = [1, 1]} : vector<18x256xbf16> to vector<16x256xbf16>
      %c2_69 = arith.constant 2 : index
      %c0_70 = arith.constant 0 : index
      %c0_71 = arith.constant 0 : index
      %c0_72 = arith.constant 0 : index
      %82 = vector.load %arg5[%c2_69, %c0_70, %c0_71, %c0_72] : memref<3x3x256x128xbf16, #tpu.memory_space<vmem>>, vector<1x1x256x128xbf16>
      %83 = vector.shape_cast %82 : vector<1x1x256x128xbf16> to vector<256x128xbf16>
      %cst_73 = arith.constant dense<0.000000e+00> : vector<16x128xf32>
      %84 = tpu.matmul %81, %83, %cst_73 {dimension_numbers = #tpu.dot_dimension_numbers<[1], [0], [0], [1], [0, 0, 1, 1], [], []>} : vector<16x256xbf16>, vector<256x128xbf16>, vector<16x128xf32> -> vector<16x128xf32>
      %85 = arith.addf %76, %84 : vector<16x128xf32>
      %86 = vector.extract_strided_slice %80 {offsets = [1, 0], sizes = [16, 256], strides = [1, 1]} : vector<18x256xbf16> to vector<16x256xbf16>
      %c2_74 = arith.constant 2 : index
      %c1_75 = arith.constant 1 : index
      %c0_76 = arith.constant 0 : index
      %c0_77 = arith.constant 0 : index
      %87 = vector.load %arg5[%c2_74, %c1_75, %c0_76, %c0_77] : memref<3x3x256x128xbf16, #tpu.memory_space<vmem>>, vector<1x1x256x128xbf16>
      %88 = vector.shape_cast %87 : vector<1x1x256x128xbf16> to vector<256x128xbf16>
      %cst_78 = arith.constant dense<0.000000e+00> : vector<16x128xf32>
      %89 = tpu.matmul %86, %88, %cst_78 {dimension_numbers = #tpu.dot_dimension_numbers<[1], [0], [0], [1], [0, 0, 1, 1], [], []>} : vector<16x256xbf16>, vector<256x128xbf16>, vector<16x128xf32> -> vector<16x128xf32>
      %90 = arith.addf %85, %89 : vector<16x128xf32>
      %91 = vector.extract_strided_slice %80 {offsets = [2, 0], sizes = [16, 256], strides = [1, 1]} : vector<18x256xbf16> to vector<16x256xbf16>
      %c2_79 = arith.constant 2 : index
      %c2_80 = arith.constant 2 : index
      %c0_81 = arith.constant 0 : index
      %c0_82 = arith.constant 0 : index
      %92 = vector.load %arg5[%c2_79, %c2_80, %c0_81, %c0_82] : memref<3x3x256x128xbf16, #tpu.memory_space<vmem>>, vector<1x1x256x128xbf16>
      %93 = vector.shape_cast %92 : vector<1x1x256x128xbf16> to vector<256x128xbf16>
      %cst_83 = arith.constant dense<0.000000e+00> : vector<16x128xf32>
      %94 = tpu.matmul %91, %93, %cst_83 {dimension_numbers = #tpu.dot_dimension_numbers<[1], [0], [0], [1], [0, 0, 1, 1], [], []>} : vector<16x256xbf16>, vector<256x128xbf16>, vector<16x128xf32> -> vector<16x128xf32>
      %95 = arith.addf %90, %94 : vector<16x128xf32>
      %96 = vector.broadcast %28 : vector<1x128xf32> to vector<16x128xf32>
      %97 = arith.addf %95, %96 : vector<16x128xf32>
      %98 = arith.truncf %97 : vector<16x128xf32> to vector<16x128xbf16>
      %99 = vector.shape_cast %98 : vector<16x128xbf16> to vector<1x16x128xbf16>
      %c0_84 = arith.constant 0 : index
      %100 = arith.index_cast %arg11 : i32 to index
      %c0_85 = arith.constant 0 : index
      %c0_86 = arith.constant 0 : index
      %101 = vector.load %arg8[%c0_84, %100, %c0_85, %c0_86] : memref<1x8x16x128xbf16, #tpu.memory_space<vmem>>, vector<1x1x16x128xbf16>
      %102 = vector.shape_cast %101 : vector<1x1x16x128xbf16> to vector<1x16x128xbf16>
      %103 = vector.shape_cast %99 : vector<1x16x128xbf16> to vector<1x1x16x128xbf16>
      tpu.vector_store %arg8[%c0_84, %100, %c0_85, %c0_86], %103 {strides = array<i32>} : memref<1x8x16x128xbf16, #tpu.memory_space<vmem>>, vector<1x1x16x128xbf16>,
      %cst_87 = arith.constant dense<0.000000e+00> : vector<128xf32>
      %104 = vector.multi_reduction <add>, %97, %cst_87 [0] : vector<16x128xf32> to vector<128xf32>
      %105 = vector.shape_cast %104 : vector<128xf32> to vector<1x128xf32>
      %106 = arith.addf %arg12, %105 : vector<1x128xf32>
      %107 = arith.mulf %97, %97 : vector<16x128xf32>
      %cst_88 = arith.constant dense<0.000000e+00> : vector<128xf32>
      %108 = vector.multi_reduction <add>, %107, %cst_88 [0] : vector<16x128xf32> to vector<128xf32>
      %109 = vector.shape_cast %108 : vector<128xf32> to vector<1x128xf32>
      %110 = arith.addf %arg13, %109 : vector<1x128xf32>
      scf.yield %106, %110 : vector<1x128xf32>, vector<1x128xf32>
    }
    %c8_i32_21 = arith.constant 8 : i32
    %c0_22 = arith.constant 0 : index
    %c0_23 = arith.constant 0 : index
    %c0_24 = arith.constant 0 : index
    %c0_25 = arith.constant 0 : index
    %32 = vector.load %arg9[%c0_22, %c0_23, %c0_24, %c0_25] : memref<1x1x2x128xf32, #tpu.memory_space<vmem>>, vector<1x1x1x128xf32>
    %33 = vector.shape_cast %32 : vector<1x1x1x128xf32> to vector<1x128xf32>
    %34 = vector.shape_cast %31#0 : vector<1x128xf32> to vector<1x1x1x128xf32>
    tpu.vector_store %arg9[%c0_22, %c0_23, %c0_24, %c0_25], %34 {strides = array<i32>} : memref<1x1x2x128xf32, #tpu.memory_space<vmem>>, vector<1x1x1x128xf32>,
    %c0_26 = arith.constant 0 : index
    %c0_27 = arith.constant 0 : index
    %c1_28 = arith.constant 1 : index
    %c0_29 = arith.constant 0 : index
    %35 = vector.load %arg9[%c0_26, %c0_27, %c1_28, %c0_29] : memref<1x1x2x128xf32, #tpu.memory_space<vmem>>, vector<1x1x1x128xf32>
    %36 = vector.shape_cast %35 : vector<1x1x1x128xf32> to vector<1x128xf32>
    %37 = vector.shape_cast %31#1 : vector<1x128xf32> to vector<1x1x1x128xf32>
    tpu.vector_store %arg9[%c0_26, %c0_27, %c1_28, %c0_29], %37 {strides = array<i32>} : memref<1x1x2x128xf32, #tpu.memory_space<vmem>>, vector<1x1x1x128xf32>,
    return
  }
  func.func @transform_0(%arg0: i32, %arg1: i32) -> (i32, i32, i32, i32) {
    %c0_i32 = arith.constant 0 : i32
    %c0_i32_0 = arith.constant 0 : i32
    %c0_i32_1 = arith.constant 0 : i32
    return %arg0, %arg1, %c0_i32, %c0_i32_0 : i32, i32, i32, i32
  }
  func.func @transform_1(%arg0: i32, %arg1: i32) -> (i32, i32, i32, i32) {
    %c8_i32 = arith.constant 8 : i32
    %0 = arith.muli %arg1, %c8_i32 : i32
    %c1_i32 = arith.constant 1 : i32
    %1 = arith.subi %0, %c1_i32 : i32
    %c0_i32 = arith.constant 0 : i32
    %2 = arith.maxsi %1, %c0_i32 : i32
    %c0_i32_0 = arith.constant 0 : i32
    %c0_i32_1 = arith.constant 0 : i32
    %c0_i32_2 = arith.constant 0 : i32
    return %arg0, %2, %c0_i32_0, %c0_i32_1 : i32, i32, i32, i32
  }
  func.func @transform_2(%arg0: i32, %arg1: i32) -> (i32, i32, i32, i32) {
    %c1_i32 = arith.constant 1 : i32
    %0 = arith.addi %arg1, %c1_i32 : i32
    %c8_i32 = arith.constant 8 : i32
    %1 = arith.muli %0, %c8_i32 : i32
    %c15_i32 = arith.constant 15 : i32
    %2 = arith.minsi %1, %c15_i32 : i32
    %c0_i32 = arith.constant 0 : i32
    %c0_i32_0 = arith.constant 0 : i32
    %c0_i32_1 = arith.constant 0 : i32
    return %arg0, %2, %c0_i32, %c0_i32_0 : i32, i32, i32, i32
  }
  func.func @transform_3(%arg0: i32, %arg1: i32) -> (i32, i32, i32, i32) {
    %c0_i32 = arith.constant 0 : i32
    %c0_i32_0 = arith.constant 0 : i32
    %c0_i32_1 = arith.constant 0 : i32
    %c0_i32_2 = arith.constant 0 : i32
    %c0_i32_3 = arith.constant 0 : i32
    return %c0_i32, %c0_i32_0, %c0_i32_1, %c0_i32_2 : i32, i32, i32, i32
  }
  func.func @transform_4(%arg0: i32, %arg1: i32) -> (i32, i32) {
    %c0_i32 = arith.constant 0 : i32
    %c0_i32_0 = arith.constant 0 : i32
    %c0_i32_1 = arith.constant 0 : i32
    return %c0_i32, %c0_i32_0 : i32, i32
  }
  func.func @transform_5(%arg0: i32, %arg1: i32) -> (i32, i32) {
    %c0_i32 = arith.constant 0 : i32
    %c0_i32_0 = arith.constant 0 : i32
    %c0_i32_1 = arith.constant 0 : i32
    return %c0_i32, %c0_i32_0 : i32, i32
  }
  func.func @transform_6(%arg0: i32, %arg1: i32) -> (i32, i32, i32, i32) {
    %c0_i32 = arith.constant 0 : i32
    %c0_i32_0 = arith.constant 0 : i32
    %c0_i32_1 = arith.constant 0 : i32
    return %arg0, %arg1, %c0_i32, %c0_i32_0 : i32, i32, i32, i32
  }
  func.func @transform_7(%arg0: i32, %arg1: i32) -> (i32, i32, i32, i32) {
    %c0_i32 = arith.constant 0 : i32
    %c0_i32_0 = arith.constant 0 : i32
    %c0_i32_1 = arith.constant 0 : i32
    return %arg0, %arg1, %c0_i32, %c0_i32_0 : i32, i32, i32, i32
  }
}

module attributes {stable_mosaic.version = 11 : i64} {
  func.func @_conv_stage_kernel(%arg0: i32, %arg1: i32, %arg2: memref<1x8x16x128xbf16, #tpu.memory_space<vmem>>, %arg3: memref<1x1x16x128xbf16, #tpu.memory_space<vmem>>, %arg4: memref<1x1x16x128xbf16, #tpu.memory_space<vmem>>, %arg5: memref<3x3x128x128xbf16, #tpu.memory_space<vmem>>, %arg6: memref<1x128xf32, #tpu.memory_space<vmem>>, %arg7: memref<3x128xf32, #tpu.memory_space<vmem>>, %arg8: memref<1x8x16x128xbf16, #tpu.memory_space<vmem>>, %arg9: memref<1x1x2x128xf32, #tpu.memory_space<vmem>>, %arg10: memref<10x18x128xbf16, #tpu.memory_space<vmem>>) attributes {dimension_semantics = [#tpu.dimension_semantics<parallel>, #tpu.dimension_semantics<parallel>], iteration_bounds = array<i64: 2, 2>, scalar_prefetch = 0 : i64, scratch_operands = 1 : i64, tpu.core_type = #tpu.core_type<tc>, window_params = [{transform_indices = @transform_0, window_bounds = array<i64: 1, 8, 16, 128>}, {transform_indices = @transform_1, window_bounds = array<i64: 1, 1, 16, 128>}, {transform_indices = @transform_2, window_bounds = array<i64: 1, 1, 16, 128>}, {pipeline_mode = #tpu.pipeline_mode<synchronous>, transform_indices = @transform_3, window_bounds = array<i64: 3, 3, 128, 128>}, {pipeline_mode = #tpu.pipeline_mode<synchronous>, transform_indices = @transform_4, window_bounds = array<i64: 1, 128>}, {pipeline_mode = #tpu.pipeline_mode<synchronous>, transform_indices = @transform_5, window_bounds = array<i64: 3, 128>}, {transform_indices = @transform_6, window_bounds = array<i64: 1, 8, 16, 128>}, {transform_indices = @transform_7, window_bounds = array<i64: 1, 1, 2, 128>}]} {
    %c0 = arith.constant 0 : index
    %c0_0 = arith.constant 0 : index
    %0 = vector.load %arg7[%c0, %c0_0] : memref<3x128xf32, #tpu.memory_space<vmem>>, vector<1x128xf32>
    %c1 = arith.constant 1 : index
    %c0_1 = arith.constant 0 : index
    %1 = vector.load %arg7[%c1, %c0_1] : memref<3x128xf32, #tpu.memory_space<vmem>>, vector<1x128xf32>
    %c2 = arith.constant 2 : index
    %c0_2 = arith.constant 0 : index
    %2 = vector.load %arg7[%c2, %c0_2] : memref<3x128xf32, #tpu.memory_space<vmem>>, vector<1x128xf32>
    %cst = arith.constant 0.000000e+00 : bf16
    %3 = vector.broadcast %cst : bf16 to vector<10x18x128xbf16>
    %c0_3 = arith.constant 0 : index
    %c0_4 = arith.constant 0 : index
    %c0_5 = arith.constant 0 : index
    %4 = vector.load %arg10[%c0_3, %c0_4, %c0_5] : memref<10x18x128xbf16, #tpu.memory_space<vmem>>, vector<10x18x128xbf16>
    tpu.vector_store %arg10[%c0_3, %c0_4, %c0_5], %3 {strides = array<i32>} : memref<10x18x128xbf16, #tpu.memory_space<vmem>>, vector<10x18x128xbf16>,
    %c0_6 = arith.constant 0 : index
    %c0_7 = arith.constant 0 : index
    %c0_8 = arith.constant 0 : index
    %c0_9 = arith.constant 0 : index
    %5 = vector.load %arg2[%c0_6, %c0_7, %c0_8, %c0_9] : memref<1x8x16x128xbf16, #tpu.memory_space<vmem>>, vector<1x8x16x128xbf16>
    %6 = vector.shape_cast %5 : vector<1x8x16x128xbf16> to vector<8x16x128xbf16>
    %7 = arith.extf %6 : vector<8x16x128xbf16> to vector<8x16x128xf32>
    %8 = vector.shape_cast %0 : vector<1x128xf32> to vector<1x1x128xf32>
    %9 = vector.broadcast %8 : vector<1x1x128xf32> to vector<8x16x128xf32>
    %10 = arith.mulf %7, %9 : vector<8x16x128xf32>
    %11 = vector.shape_cast %1 : vector<1x128xf32> to vector<1x1x128xf32>
    %12 = vector.broadcast %11 : vector<1x1x128xf32> to vector<8x16x128xf32>
    %13 = arith.addf %10, %12 : vector<8x16x128xf32>
    %cst_10 = arith.constant 0.000000e+00 : f32
    %14 = vector.broadcast %cst_10 : f32 to vector<8x16x128xf32>
    %15 = arith.cmpf oge, %13, %14 : vector<8x16x128xf32>
    %16 = vector.shape_cast %2 : vector<1x128xf32> to vector<1x1x128xf32>
    %17 = vector.broadcast %16 : vector<1x1x128xf32> to vector<8x16x128xf32>
    %18 = arith.mulf %13, %17 : vector<8x16x128xf32>
    %19 = arith.select %15, %13, %18 : vector<8x16x128xi1>, vector<8x16x128xf32>
    %20 = arith.truncf %19 : vector<8x16x128xf32> to vector<8x16x128xbf16>
    %c1_11 = arith.constant 1 : index
    %c1_12 = arith.constant 1 : index
    %c0_13 = arith.constant 0 : index
    %21 = vector.load %arg10[%c1_11, %c1_12, %c0_13] : memref<10x18x128xbf16, #tpu.memory_space<vmem>>, vector<8x16x128xbf16>
    tpu.vector_store %arg10[%c1_11, %c1_12, %c0_13], %20 {strides = array<i32>} : memref<10x18x128xbf16, #tpu.memory_space<vmem>>, vector<8x16x128xbf16>,
    %c0_i32 = arith.constant 0 : i32
    %22 = arith.cmpi sgt, %arg1, %c0_i32 : i32
    %23 = arith.extui %22 : i1 to i32
    %c0_i32_14 = arith.constant 0 : i32
    %24 = arith.cmpi ne, %23, %c0_i32_14 : i32
    scf.if %24 {
      %c0_30 = arith.constant 0 : index
      %c0_31 = arith.constant 0 : index
      %c0_32 = arith.constant 0 : index
      %c0_33 = arith.constant 0 : index
      %38 = vector.load %arg3[%c0_30, %c0_31, %c0_32, %c0_33] : memref<1x1x16x128xbf16, #tpu.memory_space<vmem>>, vector<1x1x16x128xbf16>
      %39 = vector.shape_cast %38 : vector<1x1x16x128xbf16> to vector<16x128xbf16>
      %40 = arith.extf %39 : vector<16x128xbf16> to vector<16x128xf32>
      %41 = vector.broadcast %0 : vector<1x128xf32> to vector<16x128xf32>
      %42 = arith.mulf %40, %41 : vector<16x128xf32>
      %43 = vector.broadcast %1 : vector<1x128xf32> to vector<16x128xf32>
      %44 = arith.addf %42, %43 : vector<16x128xf32>
      %cst_34 = arith.constant 0.000000e+00 : f32
      %45 = vector.broadcast %cst_34 : f32 to vector<16x128xf32>
      %46 = arith.cmpf oge, %44, %45 : vector<16x128xf32>
      %47 = vector.broadcast %2 : vector<1x128xf32> to vector<16x128xf32>
      %48 = arith.mulf %44, %47 : vector<16x128xf32>
      %49 = arith.select %46, %44, %48 : vector<16x128xi1>, vector<16x128xf32>
      %50 = arith.truncf %49 : vector<16x128xf32> to vector<16x128xbf16>
      %51 = vector.shape_cast %50 : vector<16x128xbf16> to vector<1x16x128xbf16>
      %c0_35 = arith.constant 0 : index
      %c1_36 = arith.constant 1 : index
      %c0_37 = arith.constant 0 : index
      %52 = vector.load %arg10[%c0_35, %c1_36, %c0_37] : memref<10x18x128xbf16, #tpu.memory_space<vmem>>, vector<1x16x128xbf16>
      tpu.vector_store %arg10[%c0_35, %c1_36, %c0_37], %51 {strides = array<i32>} : memref<10x18x128xbf16, #tpu.memory_space<vmem>>, vector<1x16x128xbf16>,
    } else {
    }
    %c1_i32 = arith.constant 1 : i32
    %25 = arith.cmpi slt, %arg1, %c1_i32 : i32
    %26 = arith.extui %25 : i1 to i32
    %c0_i32_15 = arith.constant 0 : i32
    %27 = arith.cmpi ne, %26, %c0_i32_15 : i32
    scf.if %27 {
      %c0_30 = arith.constant 0 : index
      %c0_31 = arith.constant 0 : index
      %c0_32 = arith.constant 0 : index
      %c0_33 = arith.constant 0 : index
      %38 = vector.load %arg4[%c0_30, %c0_31, %c0_32, %c0_33] : memref<1x1x16x128xbf16, #tpu.memory_space<vmem>>, vector<1x1x16x128xbf16>
      %39 = vector.shape_cast %38 : vector<1x1x16x128xbf16> to vector<16x128xbf16>
      %40 = arith.extf %39 : vector<16x128xbf16> to vector<16x128xf32>
      %41 = vector.broadcast %0 : vector<1x128xf32> to vector<16x128xf32>
      %42 = arith.mulf %40, %41 : vector<16x128xf32>
      %43 = vector.broadcast %1 : vector<1x128xf32> to vector<16x128xf32>
      %44 = arith.addf %42, %43 : vector<16x128xf32>
      %cst_34 = arith.constant 0.000000e+00 : f32
      %45 = vector.broadcast %cst_34 : f32 to vector<16x128xf32>
      %46 = arith.cmpf oge, %44, %45 : vector<16x128xf32>
      %47 = vector.broadcast %2 : vector<1x128xf32> to vector<16x128xf32>
      %48 = arith.mulf %44, %47 : vector<16x128xf32>
      %49 = arith.select %46, %44, %48 : vector<16x128xi1>, vector<16x128xf32>
      %50 = arith.truncf %49 : vector<16x128xf32> to vector<16x128xbf16>
      %51 = vector.shape_cast %50 : vector<16x128xbf16> to vector<1x16x128xbf16>
      %c9 = arith.constant 9 : index
      %c1_35 = arith.constant 1 : index
      %c0_36 = arith.constant 0 : index
      %52 = vector.load %arg10[%c9, %c1_35, %c0_36] : memref<10x18x128xbf16, #tpu.memory_space<vmem>>, vector<1x16x128xbf16>
      tpu.vector_store %arg10[%c9, %c1_35, %c0_36], %51 {strides = array<i32>} : memref<10x18x128xbf16, #tpu.memory_space<vmem>>, vector<1x16x128xbf16>,
    } else {
    }
    %c0_16 = arith.constant 0 : index
    %c0_17 = arith.constant 0 : index
    %28 = vector.load %arg6[%c0_16, %c0_17] : memref<1x128xf32, #tpu.memory_space<vmem>>, vector<1x128xf32>
    %cst_18 = arith.constant 0.000000e+00 : f32
    %29 = vector.broadcast %cst_18 : f32 to vector<1x128xf32>
    %c0_i32_19 = arith.constant 0 : i32
    %c8_i32 = arith.constant 8 : i32
    %30 = arith.addi %c0_i32_19, %c8_i32 : i32
    %c1_i32_20 = arith.constant 1 : i32
    %31:2 = scf.for %arg11 = %c0_i32_19 to %30 step %c1_i32_20 iter_args(%arg12 = %29, %arg13 = %29) -> (vector<1x128xf32>, vector<1x128xf32>)  : i32 {
      %cst_30 = arith.constant 0.000000e+00 : f32
      %38 = vector.broadcast %cst_30 : f32 to vector<16x128xf32>
      %c0_i32_31 = arith.constant 0 : i32
      %39 = arith.addi %arg11, %c0_i32_31 : i32
      %40 = arith.index_cast %39 : i32 to index
      %c0_32 = arith.constant 0 : index
      %c0_33 = arith.constant 0 : index
      %41 = vector.load %arg10[%40, %c0_32, %c0_33] : memref<10x18x128xbf16, #tpu.memory_space<vmem>>, vector<1x18x128xbf16>
      %42 = vector.shape_cast %41 : vector<1x18x128xbf16> to vector<18x128xbf16>
      %43 = vector.extract_strided_slice %42 {offsets = [0, 0], sizes = [16, 128], strides = [1, 1]} : vector<18x128xbf16> to vector<16x128xbf16>
      %c0_34 = arith.constant 0 : index
      %c0_35 = arith.constant 0 : index
      %c0_36 = arith.constant 0 : index
      %c0_37 = arith.constant 0 : index
      %44 = vector.load %arg5[%c0_34, %c0_35, %c0_36, %c0_37] : memref<3x3x128x128xbf16, #tpu.memory_space<vmem>>, vector<1x1x128x128xbf16>
      %45 = vector.shape_cast %44 : vector<1x1x128x128xbf16> to vector<128x128xbf16>
      %cst_38 = arith.constant dense<0.000000e+00> : vector<16x128xf32>
      %46 = tpu.matmul %43, %45, %cst_38 {dimension_numbers = #tpu.dot_dimension_numbers<[1], [0], [0], [1], [0, 0, 1, 1], [], []>} : vector<16x128xbf16>, vector<128x128xbf16>, vector<16x128xf32> -> vector<16x128xf32>
      %47 = arith.addf %38, %46 : vector<16x128xf32>
      %48 = vector.extract_strided_slice %42 {offsets = [1, 0], sizes = [16, 128], strides = [1, 1]} : vector<18x128xbf16> to vector<16x128xbf16>
      %c0_39 = arith.constant 0 : index
      %c1_40 = arith.constant 1 : index
      %c0_41 = arith.constant 0 : index
      %c0_42 = arith.constant 0 : index
      %49 = vector.load %arg5[%c0_39, %c1_40, %c0_41, %c0_42] : memref<3x3x128x128xbf16, #tpu.memory_space<vmem>>, vector<1x1x128x128xbf16>
      %50 = vector.shape_cast %49 : vector<1x1x128x128xbf16> to vector<128x128xbf16>
      %cst_43 = arith.constant dense<0.000000e+00> : vector<16x128xf32>
      %51 = tpu.matmul %48, %50, %cst_43 {dimension_numbers = #tpu.dot_dimension_numbers<[1], [0], [0], [1], [0, 0, 1, 1], [], []>} : vector<16x128xbf16>, vector<128x128xbf16>, vector<16x128xf32> -> vector<16x128xf32>
      %52 = arith.addf %47, %51 : vector<16x128xf32>
      %53 = vector.extract_strided_slice %42 {offsets = [2, 0], sizes = [16, 128], strides = [1, 1]} : vector<18x128xbf16> to vector<16x128xbf16>
      %c0_44 = arith.constant 0 : index
      %c2_45 = arith.constant 2 : index
      %c0_46 = arith.constant 0 : index
      %c0_47 = arith.constant 0 : index
      %54 = vector.load %arg5[%c0_44, %c2_45, %c0_46, %c0_47] : memref<3x3x128x128xbf16, #tpu.memory_space<vmem>>, vector<1x1x128x128xbf16>
      %55 = vector.shape_cast %54 : vector<1x1x128x128xbf16> to vector<128x128xbf16>
      %cst_48 = arith.constant dense<0.000000e+00> : vector<16x128xf32>
      %56 = tpu.matmul %53, %55, %cst_48 {dimension_numbers = #tpu.dot_dimension_numbers<[1], [0], [0], [1], [0, 0, 1, 1], [], []>} : vector<16x128xbf16>, vector<128x128xbf16>, vector<16x128xf32> -> vector<16x128xf32>
      %57 = arith.addf %52, %56 : vector<16x128xf32>
      %c1_i32_49 = arith.constant 1 : i32
      %58 = arith.addi %arg11, %c1_i32_49 : i32
      %59 = arith.index_cast %58 : i32 to index
      %c0_50 = arith.constant 0 : index
      %c0_51 = arith.constant 0 : index
      %60 = vector.load %arg10[%59, %c0_50, %c0_51] : memref<10x18x128xbf16, #tpu.memory_space<vmem>>, vector<1x18x128xbf16>
      %61 = vector.shape_cast %60 : vector<1x18x128xbf16> to vector<18x128xbf16>
      %62 = vector.extract_strided_slice %61 {offsets = [0, 0], sizes = [16, 128], strides = [1, 1]} : vector<18x128xbf16> to vector<16x128xbf16>
      %c1_52 = arith.constant 1 : index
      %c0_53 = arith.constant 0 : index
      %c0_54 = arith.constant 0 : index
      %c0_55 = arith.constant 0 : index
      %63 = vector.load %arg5[%c1_52, %c0_53, %c0_54, %c0_55] : memref<3x3x128x128xbf16, #tpu.memory_space<vmem>>, vector<1x1x128x128xbf16>
      %64 = vector.shape_cast %63 : vector<1x1x128x128xbf16> to vector<128x128xbf16>
      %cst_56 = arith.constant dense<0.000000e+00> : vector<16x128xf32>
      %65 = tpu.matmul %62, %64, %cst_56 {dimension_numbers = #tpu.dot_dimension_numbers<[1], [0], [0], [1], [0, 0, 1, 1], [], []>} : vector<16x128xbf16>, vector<128x128xbf16>, vector<16x128xf32> -> vector<16x128xf32>
      %66 = arith.addf %57, %65 : vector<16x128xf32>
      %67 = vector.extract_strided_slice %61 {offsets = [1, 0], sizes = [16, 128], strides = [1, 1]} : vector<18x128xbf16> to vector<16x128xbf16>
      %c1_57 = arith.constant 1 : index
      %c1_58 = arith.constant 1 : index
      %c0_59 = arith.constant 0 : index
      %c0_60 = arith.constant 0 : index
      %68 = vector.load %arg5[%c1_57, %c1_58, %c0_59, %c0_60] : memref<3x3x128x128xbf16, #tpu.memory_space<vmem>>, vector<1x1x128x128xbf16>
      %69 = vector.shape_cast %68 : vector<1x1x128x128xbf16> to vector<128x128xbf16>
      %cst_61 = arith.constant dense<0.000000e+00> : vector<16x128xf32>
      %70 = tpu.matmul %67, %69, %cst_61 {dimension_numbers = #tpu.dot_dimension_numbers<[1], [0], [0], [1], [0, 0, 1, 1], [], []>} : vector<16x128xbf16>, vector<128x128xbf16>, vector<16x128xf32> -> vector<16x128xf32>
      %71 = arith.addf %66, %70 : vector<16x128xf32>
      %72 = vector.extract_strided_slice %61 {offsets = [2, 0], sizes = [16, 128], strides = [1, 1]} : vector<18x128xbf16> to vector<16x128xbf16>
      %c1_62 = arith.constant 1 : index
      %c2_63 = arith.constant 2 : index
      %c0_64 = arith.constant 0 : index
      %c0_65 = arith.constant 0 : index
      %73 = vector.load %arg5[%c1_62, %c2_63, %c0_64, %c0_65] : memref<3x3x128x128xbf16, #tpu.memory_space<vmem>>, vector<1x1x128x128xbf16>
      %74 = vector.shape_cast %73 : vector<1x1x128x128xbf16> to vector<128x128xbf16>
      %cst_66 = arith.constant dense<0.000000e+00> : vector<16x128xf32>
      %75 = tpu.matmul %72, %74, %cst_66 {dimension_numbers = #tpu.dot_dimension_numbers<[1], [0], [0], [1], [0, 0, 1, 1], [], []>} : vector<16x128xbf16>, vector<128x128xbf16>, vector<16x128xf32> -> vector<16x128xf32>
      %76 = arith.addf %71, %75 : vector<16x128xf32>
      %c2_i32 = arith.constant 2 : i32
      %77 = arith.addi %arg11, %c2_i32 : i32
      %78 = arith.index_cast %77 : i32 to index
      %c0_67 = arith.constant 0 : index
      %c0_68 = arith.constant 0 : index
      %79 = vector.load %arg10[%78, %c0_67, %c0_68] : memref<10x18x128xbf16, #tpu.memory_space<vmem>>, vector<1x18x128xbf16>
      %80 = vector.shape_cast %79 : vector<1x18x128xbf16> to vector<18x128xbf16>
      %81 = vector.extract_strided_slice %80 {offsets = [0, 0], sizes = [16, 128], strides = [1, 1]} : vector<18x128xbf16> to vector<16x128xbf16>
      %c2_69 = arith.constant 2 : index
      %c0_70 = arith.constant 0 : index
      %c0_71 = arith.constant 0 : index
      %c0_72 = arith.constant 0 : index
      %82 = vector.load %arg5[%c2_69, %c0_70, %c0_71, %c0_72] : memref<3x3x128x128xbf16, #tpu.memory_space<vmem>>, vector<1x1x128x128xbf16>
      %83 = vector.shape_cast %82 : vector<1x1x128x128xbf16> to vector<128x128xbf16>
      %cst_73 = arith.constant dense<0.000000e+00> : vector<16x128xf32>
      %84 = tpu.matmul %81, %83, %cst_73 {dimension_numbers = #tpu.dot_dimension_numbers<[1], [0], [0], [1], [0, 0, 1, 1], [], []>} : vector<16x128xbf16>, vector<128x128xbf16>, vector<16x128xf32> -> vector<16x128xf32>
      %85 = arith.addf %76, %84 : vector<16x128xf32>
      %86 = vector.extract_strided_slice %80 {offsets = [1, 0], sizes = [16, 128], strides = [1, 1]} : vector<18x128xbf16> to vector<16x128xbf16>
      %c2_74 = arith.constant 2 : index
      %c1_75 = arith.constant 1 : index
      %c0_76 = arith.constant 0 : index
      %c0_77 = arith.constant 0 : index
      %87 = vector.load %arg5[%c2_74, %c1_75, %c0_76, %c0_77] : memref<3x3x128x128xbf16, #tpu.memory_space<vmem>>, vector<1x1x128x128xbf16>
      %88 = vector.shape_cast %87 : vector<1x1x128x128xbf16> to vector<128x128xbf16>
      %cst_78 = arith.constant dense<0.000000e+00> : vector<16x128xf32>
      %89 = tpu.matmul %86, %88, %cst_78 {dimension_numbers = #tpu.dot_dimension_numbers<[1], [0], [0], [1], [0, 0, 1, 1], [], []>} : vector<16x128xbf16>, vector<128x128xbf16>, vector<16x128xf32> -> vector<16x128xf32>
      %90 = arith.addf %85, %89 : vector<16x128xf32>
      %91 = vector.extract_strided_slice %80 {offsets = [2, 0], sizes = [16, 128], strides = [1, 1]} : vector<18x128xbf16> to vector<16x128xbf16>
      %c2_79 = arith.constant 2 : index
      %c2_80 = arith.constant 2 : index
      %c0_81 = arith.constant 0 : index
      %c0_82 = arith.constant 0 : index
      %92 = vector.load %arg5[%c2_79, %c2_80, %c0_81, %c0_82] : memref<3x3x128x128xbf16, #tpu.memory_space<vmem>>, vector<1x1x128x128xbf16>
      %93 = vector.shape_cast %92 : vector<1x1x128x128xbf16> to vector<128x128xbf16>
      %cst_83 = arith.constant dense<0.000000e+00> : vector<16x128xf32>
      %94 = tpu.matmul %91, %93, %cst_83 {dimension_numbers = #tpu.dot_dimension_numbers<[1], [0], [0], [1], [0, 0, 1, 1], [], []>} : vector<16x128xbf16>, vector<128x128xbf16>, vector<16x128xf32> -> vector<16x128xf32>
      %95 = arith.addf %90, %94 : vector<16x128xf32>
      %96 = vector.broadcast %28 : vector<1x128xf32> to vector<16x128xf32>
      %97 = arith.addf %95, %96 : vector<16x128xf32>
      %98 = arith.truncf %97 : vector<16x128xf32> to vector<16x128xbf16>
      %99 = vector.shape_cast %98 : vector<16x128xbf16> to vector<1x16x128xbf16>
      %c0_84 = arith.constant 0 : index
      %100 = arith.index_cast %arg11 : i32 to index
      %c0_85 = arith.constant 0 : index
      %c0_86 = arith.constant 0 : index
      %101 = vector.load %arg8[%c0_84, %100, %c0_85, %c0_86] : memref<1x8x16x128xbf16, #tpu.memory_space<vmem>>, vector<1x1x16x128xbf16>
      %102 = vector.shape_cast %101 : vector<1x1x16x128xbf16> to vector<1x16x128xbf16>
      %103 = vector.shape_cast %99 : vector<1x16x128xbf16> to vector<1x1x16x128xbf16>
      tpu.vector_store %arg8[%c0_84, %100, %c0_85, %c0_86], %103 {strides = array<i32>} : memref<1x8x16x128xbf16, #tpu.memory_space<vmem>>, vector<1x1x16x128xbf16>,
      %cst_87 = arith.constant dense<0.000000e+00> : vector<128xf32>
      %104 = vector.multi_reduction <add>, %97, %cst_87 [0] : vector<16x128xf32> to vector<128xf32>
      %105 = vector.shape_cast %104 : vector<128xf32> to vector<1x128xf32>
      %106 = arith.addf %arg12, %105 : vector<1x128xf32>
      %107 = arith.mulf %97, %97 : vector<16x128xf32>
      %cst_88 = arith.constant dense<0.000000e+00> : vector<128xf32>
      %108 = vector.multi_reduction <add>, %107, %cst_88 [0] : vector<16x128xf32> to vector<128xf32>
      %109 = vector.shape_cast %108 : vector<128xf32> to vector<1x128xf32>
      %110 = arith.addf %arg13, %109 : vector<1x128xf32>
      scf.yield %106, %110 : vector<1x128xf32>, vector<1x128xf32>
    }
    %c8_i32_21 = arith.constant 8 : i32
    %c0_22 = arith.constant 0 : index
    %c0_23 = arith.constant 0 : index
    %c0_24 = arith.constant 0 : index
    %c0_25 = arith.constant 0 : index
    %32 = vector.load %arg9[%c0_22, %c0_23, %c0_24, %c0_25] : memref<1x1x2x128xf32, #tpu.memory_space<vmem>>, vector<1x1x1x128xf32>
    %33 = vector.shape_cast %32 : vector<1x1x1x128xf32> to vector<1x128xf32>
    %34 = vector.shape_cast %31#0 : vector<1x128xf32> to vector<1x1x1x128xf32>
    tpu.vector_store %arg9[%c0_22, %c0_23, %c0_24, %c0_25], %34 {strides = array<i32>} : memref<1x1x2x128xf32, #tpu.memory_space<vmem>>, vector<1x1x1x128xf32>,
    %c0_26 = arith.constant 0 : index
    %c0_27 = arith.constant 0 : index
    %c1_28 = arith.constant 1 : index
    %c0_29 = arith.constant 0 : index
    %35 = vector.load %arg9[%c0_26, %c0_27, %c1_28, %c0_29] : memref<1x1x2x128xf32, #tpu.memory_space<vmem>>, vector<1x1x1x128xf32>
    %36 = vector.shape_cast %35 : vector<1x1x1x128xf32> to vector<1x128xf32>
    %37 = vector.shape_cast %31#1 : vector<1x128xf32> to vector<1x1x1x128xf32>
    tpu.vector_store %arg9[%c0_26, %c0_27, %c1_28, %c0_29], %37 {strides = array<i32>} : memref<1x1x2x128xf32, #tpu.memory_space<vmem>>, vector<1x1x1x128xf32>,
    return
  }
  func.func @transform_0(%arg0: i32, %arg1: i32) -> (i32, i32, i32, i32) {
    %c0_i32 = arith.constant 0 : i32
    %c0_i32_0 = arith.constant 0 : i32
    %c0_i32_1 = arith.constant 0 : i32
    return %arg0, %arg1, %c0_i32, %c0_i32_0 : i32, i32, i32, i32
  }
  func.func @transform_1(%arg0: i32, %arg1: i32) -> (i32, i32, i32, i32) {
    %c8_i32 = arith.constant 8 : i32
    %0 = arith.muli %arg1, %c8_i32 : i32
    %c1_i32 = arith.constant 1 : i32
    %1 = arith.subi %0, %c1_i32 : i32
    %c0_i32 = arith.constant 0 : i32
    %2 = arith.maxsi %1, %c0_i32 : i32
    %c0_i32_0 = arith.constant 0 : i32
    %c0_i32_1 = arith.constant 0 : i32
    %c0_i32_2 = arith.constant 0 : i32
    return %arg0, %2, %c0_i32_0, %c0_i32_1 : i32, i32, i32, i32
  }
  func.func @transform_2(%arg0: i32, %arg1: i32) -> (i32, i32, i32, i32) {
    %c1_i32 = arith.constant 1 : i32
    %0 = arith.addi %arg1, %c1_i32 : i32
    %c8_i32 = arith.constant 8 : i32
    %1 = arith.muli %0, %c8_i32 : i32
    %c15_i32 = arith.constant 15 : i32
    %2 = arith.minsi %1, %c15_i32 : i32
    %c0_i32 = arith.constant 0 : i32
    %c0_i32_0 = arith.constant 0 : i32
    %c0_i32_1 = arith.constant 0 : i32
    return %arg0, %2, %c0_i32, %c0_i32_0 : i32, i32, i32, i32
  }
  func.func @transform_3(%arg0: i32, %arg1: i32) -> (i32, i32, i32, i32) {
    %c0_i32 = arith.constant 0 : i32
    %c0_i32_0 = arith.constant 0 : i32
    %c0_i32_1 = arith.constant 0 : i32
    %c0_i32_2 = arith.constant 0 : i32
    %c0_i32_3 = arith.constant 0 : i32
    return %c0_i32, %c0_i32_0, %c0_i32_1, %c0_i32_2 : i32, i32, i32, i32
  }
  func.func @transform_4(%arg0: i32, %arg1: i32) -> (i32, i32) {
    %c0_i32 = arith.constant 0 : i32
    %c0_i32_0 = arith.constant 0 : i32
    %c0_i32_1 = arith.constant 0 : i32
    return %c0_i32, %c0_i32_0 : i32, i32
  }
  func.func @transform_5(%arg0: i32, %arg1: i32) -> (i32, i32) {
    %c0_i32 = arith.constant 0 : i32
    %c0_i32_0 = arith.constant 0 : i32
    %c0_i32_1 = arith.constant 0 : i32
    return %c0_i32, %c0_i32_0 : i32, i32
  }
  func.func @transform_6(%arg0: i32, %arg1: i32) -> (i32, i32, i32, i32) {
    %c0_i32 = arith.constant 0 : i32
    %c0_i32_0 = arith.constant 0 : i32
    %c0_i32_1 = arith.constant 0 : i32
    return %arg0, %arg1, %c0_i32, %c0_i32_0 : i32, i32, i32, i32
  }
  func.func @transform_7(%arg0: i32, %arg1: i32) -> (i32, i32, i32, i32) {
    %c0_i32 = arith.constant 0 : i32
    %c0_i32_0 = arith.constant 0 : i32
    %c0_i32_1 = arith.constant 0 : i32
    return %arg0, %arg1, %c0_i32, %c0_i32_0 : i32, i32, i32, i32
  }
}

module attributes {stable_mosaic.version = 11 : i64} {
  func.func @_bn_lrelu_kernel(%arg0: i32, %arg1: memref<512x128xbf16, #tpu.memory_space<vmem>>, %arg2: memref<1x128xf32, #tpu.memory_space<vmem>>, %arg3: memref<1x128xf32, #tpu.memory_space<vmem>>, %arg4: memref<512x128xf32, #tpu.memory_space<vmem>>) attributes {dimension_semantics = [#tpu.dimension_semantics<parallel>], iteration_bounds = array<i64: 1>, scalar_prefetch = 0 : i64, scratch_operands = 0 : i64, tpu.core_type = #tpu.core_type<tc>, window_params = [{transform_indices = @transform_0, window_bounds = array<i64: 512, 128>}, {pipeline_mode = #tpu.pipeline_mode<synchronous>, transform_indices = @transform_1, window_bounds = array<i64: 1, 128>}, {pipeline_mode = #tpu.pipeline_mode<synchronous>, transform_indices = @transform_2, window_bounds = array<i64: 1, 128>}, {transform_indices = @transform_3, window_bounds = array<i64: 512, 128>}]} {
    %c0 = arith.constant 0 : index
    %c0_0 = arith.constant 0 : index
    %0 = vector.load %arg1[%c0, %c0_0] : memref<512x128xbf16, #tpu.memory_space<vmem>>, vector<512x128xbf16>
    %1 = arith.extf %0 : vector<512x128xbf16> to vector<512x128xf32>
    %c0_1 = arith.constant 0 : index
    %c0_2 = arith.constant 0 : index
    %2 = vector.load %arg2[%c0_1, %c0_2] : memref<1x128xf32, #tpu.memory_space<vmem>>, vector<1x128xf32>
    %3 = vector.broadcast %2 : vector<1x128xf32> to vector<512x128xf32>
    %4 = arith.mulf %1, %3 : vector<512x128xf32>
    %c0_3 = arith.constant 0 : index
    %c0_4 = arith.constant 0 : index
    %5 = vector.load %arg3[%c0_3, %c0_4] : memref<1x128xf32, #tpu.memory_space<vmem>>, vector<1x128xf32>
    %6 = vector.broadcast %5 : vector<1x128xf32> to vector<512x128xf32>
    %7 = arith.addf %4, %6 : vector<512x128xf32>
    %cst = arith.constant 0.000000e+00 : f32
    %8 = vector.broadcast %cst : f32 to vector<512x128xf32>
    %9 = arith.cmpf oge, %7, %8 : vector<512x128xf32>
    %cst_5 = arith.constant 0.00999999977 : f32
    %10 = vector.broadcast %cst_5 : f32 to vector<512x128xf32>
    %11 = arith.mulf %10, %7 : vector<512x128xf32>
    %12 = arith.select %9, %7, %11 : vector<512x128xi1>, vector<512x128xf32>
    %c0_6 = arith.constant 0 : index
    %c0_7 = arith.constant 0 : index
    %13 = vector.load %arg4[%c0_6, %c0_7] : memref<512x128xf32, #tpu.memory_space<vmem>>, vector<512x128xf32>
    tpu.vector_store %arg4[%c0_6, %c0_7], %12 {strides = array<i32>} : memref<512x128xf32, #tpu.memory_space<vmem>>, vector<512x128xf32>,
    return
  }
  func.func @transform_0(%arg0: i32) -> (i32, i32) {
    %c0_i32 = arith.constant 0 : i32
    %c0_i32_0 = arith.constant 0 : i32
    return %arg0, %c0_i32 : i32, i32
  }
  func.func @transform_1(%arg0: i32) -> (i32, i32) {
    %c0_i32 = arith.constant 0 : i32
    %c0_i32_0 = arith.constant 0 : i32
    %c0_i32_1 = arith.constant 0 : i32
    return %c0_i32, %c0_i32_0 : i32, i32
  }
  func.func @transform_2(%arg0: i32) -> (i32, i32) {
    %c0_i32 = arith.constant 0 : i32
    %c0_i32_0 = arith.constant 0 : i32
    %c0_i32_1 = arith.constant 0 : i32
    return %c0_i32, %c0_i32_0 : i32, i32
  }
  func.func @transform_3(%arg0: i32) -> (i32, i32) {
    %c0_i32 = arith.constant 0 : i32
    %c0_i32_0 = arith.constant 0 : i32
    return %arg0, %c0_i32 : i32, i32
  }
}

</mosaic_0001>

<llo_original>
// kernel: tile.54
$region0: #{tile.54}
  #allocation0 [shape = 's32[1]{0}', space=sflag, size = 0x4, scoped, tag = 'scoped memory for tile.54']
  %s0 = inlined_call_operand.vmem [shape: f32[8], index: 0, kind: input, shape index: {}]
  %s1 = inlined_call_operand.vmem [shape: f32[16,8], index: 1, kind: output, shape index: {}]
  // Predicated region
  $region2: #{tile.54} parent=0 // pred_check
    _
  $region3: #{tile.54} parent=0 // pred_check_branch
    %3 = sbr.rel (0) target = $region5
  $region4: #{tile.54} parent=0 // pred_region
    _
  $region5: #{tile.54} parent=0 // pred_fallthru
    _
  %v4 = vld [vmem:[%s0] ss:$0 sm:$0xff]
  %5 = vst [vmem:[%s1] sm:$0xff] %v4
  %s6 = scalar_lea.vmem %s1, 8
  %7 = vst [vmem:[%s6] sm:$0xff] %v4

// kernel: tile.55
$region0: #{tile.55}
  %s0 = inlined_call_operand.vmem [shape: f32[16,8], index: 0, kind: input, shape index: {}]
  %s1 = inlined_call_operand.vmem [shape: f32[1,128], index: 1, kind: output, shape index: {}]
  $region1: #{tile.55} parent=0
    #allocation0 [shape = 'u8[4096]{0}', space=vmem, size = 0x1000, scoped, tag = 'scoped mem for output reshape']
    %v2 = vld [vmem:[%s0] sm:$0x1]
    %vm3 = vcmask 64512
    %4 = vst.msk [vmem:[#allocation0] sm:$0x1] %vm3, %v2
    %s5 = scalar_lea.vmem %s0, 15
    %v6 = vld [vmem:[%s5] sm:$0x1]
    %7 = vrot.lane.b32.xlu0 %v6, 120
    %v8 = vpop.permute.xlu0 %7
    %vm9 = vcmask 1048512
    %10 = vst.msk [vmem:[#allocation0] sm:$0x1] %vm9, %v8
    %s11 = scalar_lea.vmem %s0, 14
    %v12 = vld [vmem:[%s11] sm:$0x1]
    %13 = vrot.lane.b32.xlu0 %v12, 112
    %v14 = vpop.permute.xlu0 %13
    %vm15 = vcmask 982912
    %16 = vst.msk [vmem:[#allocation0] sm:$0x1] %vm15, %v14
    %s17 = scalar_lea.vmem %s0, 13
    %v18 = vld [vmem:[%s17] sm:$0x1]
    %19 = vrot.lane.b32.xlu0 %v18, 104
    %v20 = vpop.permute.xlu0 %19
    %vm21 = vcmask 917312
    %22 = vst.msk [vmem:[#allocation0] sm:$0x1] %vm21, %v20
    %s23 = scalar_lea.vmem %s0, 12
    %v24 = vld [vmem:[%s23] sm:$0x1]
    %25 = vrot.lane.b32.xlu0 %v24, 96
    %v26 = vpop.permute.xlu0 %25
    %vm27 = vcmask 851712
    %28 = vst.msk [vmem:[#allocation0] sm:$0x1] %vm27, %v26
    %s29 = scalar_lea.vmem %s0, 11
    %v30 = vld [vmem:[%s29] sm:$0x1]
    %31 = vrot.lane.b32.xlu0 %v30, 88
    %v32 = vpop.permute.xlu0 %31
    %vm33 = vcmask 786112
    %34 = vst.msk [vmem:[#allocation0] sm:$0x1] %vm33, %v32
    %s35 = scalar_lea.vmem %s0, 10
    %v36 = vld [vmem:[%s35] sm:$0x1]
    %37 = vrot.lane.b32.xlu0 %v36, 80
    %v38 = vpop.permute.xlu0 %37
    %vm39 = vcmask 720512
    %40 = vst.msk [vmem:[#allocation0] sm:$0x1] %vm39, %v38
    %s41 = scalar_lea.vmem %s0, 9
    %v42 = vld [vmem:[%s41] sm:$0x1]
    %43 = vrot.lane.b32.xlu0 %v42, 72
    %v44 = vpop.permute.xlu0 %43
    %vm45 = vcmask 654912
    %46 = vst.msk [vmem:[#allocation0] sm:$0x1] %vm45, %v44
    %s47 = scalar_lea.vmem %s0, 8
    %v48 = vld [vmem:[%s47] sm:$0x1]
    %49 = vrot.lane.b32.xlu0 %v48, 64
    %v50 = vpop.permute.xlu0 %49
    %vm51 = vcmask 589312
    %52 = vst.msk [vmem:[#allocation0] sm:$0x1] %vm51, %v50
    %s53 = scalar_lea.vmem %s0, 7
    %v54 = vld [vmem:[%s53] sm:$0x1]
    %55 = vrot.lane.b32.xlu0 %v54, 56
    %v56 = vpop.permute.xlu0 %55
    %vm57 = vcmask 523712
    %58 = vst.msk [vmem:[#allocation0] sm:$0x1] %vm57, %v56
    %s59 = scalar_lea.vmem %s0, 6
    %v60 = vld [vmem:[%s59] sm:$0x1]
    %61 = vrot.lane.b32.xlu0 %v60, 48
    %v62 = vpop.permute.xlu0 %61
    %vm63 = vcmask 458112
    %64 = vst.msk [vmem:[#allocation0] sm:$0x1] %vm63, %v62
    %s65 = scalar_lea.vmem %s0, 5
    %v66 = vld [vmem:[%s65] sm:$0x1]
    %67 = vrot.lane.b32.xlu0 %v66, 40
    %v68 = vpop.permute.xlu0 %67
    %vm69 = vcmask 392512
    %70 = vst.msk [vmem:[#allocation0] sm:$0x1] %vm69, %v68
    %s71 = scalar_lea.vmem %s0, 4
    %v72 = vld [vmem:[%s71] sm:$0x1]
    %73 = vrot.lane.b32.xlu0 %v72, 32
    %v74 = vpop.permute.xlu0 %73
    %vm75 = vcmask 326912
    %76 = vst.msk [vmem:[#allocation0] sm:$0x1] %vm75, %v74
    %s77 = scalar_lea.vmem %s0, 3
    %v78 = vld [vmem:[%s77] sm:$0x1]
    %79 = vrot.lane.b32.xlu0 %v78, 24
    %v80 = vpop.permute.xlu0 %79
    %vm81 = vcmask 261312
    %82 = vst.msk [vmem:[#allocation0] sm:$0x1] %vm81, %v80
    %s83 = scalar_lea.vmem %s0, 2
    %v84 = vld [vmem:[%s83] sm:$0x1]
    %85 = vrot.lane.b32.xlu0 %v84, 16
    %v86 = vpop.permute.xlu0 %85
    %vm87 = vcmask 195712
    %88 = vst.msk [vmem:[#allocation0] sm:$0x1] %vm87, %v86
    %s89 = scalar_lea.vmem %s0, 1
    %v90 = vld [vmem:[%s89] sm:$0x1]
    %91 = vrot.lane.b32.xlu0 %v90, 8
    %v92 = vpop.permute.xlu0 %91
    %vm93 = vcmask 130112
    %94 = vst.msk [vmem:[#allocation0] sm:$0x1] %vm93, %v92
    %s96 = sshllo.u32 0, 1
    %v98 = vld [vmem:[#allocation0] sm:%s96]
    %s99 = sshllo.u32 0, 1
    %100 = vst [vmem:[%s1] sm:%s99] %v98

// kernel: upconv_block_forward.4
$region0: #{upconv_block_forward.4}
  #allocation0 [shape = 'u32[]', space=smem, size = 0x4, offset = 0x4, fixed_abs, tag = 'smem constant byte address 0x4 - core index']
  #allocation1 [shape = 'u32[144,128]{1,0:T(1,128)}', space=vmem, size = 0x12000, scoped, tag = 'internal scratch']
  #allocation2 [shape = 'bf16[10,18,256]{2,1,0:T(8,128)(2,1)}', space=vmem, size = 0x1e000, scoped, tag = 'scratch operand']
  %s0 = inlined_call_operand.vmem [shape: bf16[2,16,16,256], index: 0, kind: input, shape index: {}, may-alias: {0,1,2}]
  %s1 = inlined_call_operand.vmem [shape: bf16[2,16,16,256], index: 1, kind: input, shape index: {}, may-alias: {0,1,2}]
  %s2 = inlined_call_operand.vmem [shape: bf16[2,16,16,256], index: 2, kind: input, shape index: {}, may-alias: {0,1,2}]
  %s3 = inlined_call_operand.vmem [shape: bf16[3,3,256,128], index: 3, kind: input, shape index: {}]
  %s4 = inlined_call_operand.vmem [shape: f32[1,128], index: 4, kind: input, shape index: {}]
  %s5 = inlined_call_operand.vmem [shape: f32[3,256], index: 5, kind: input, shape index: {}]
  %s6 = inlined_call_operand.vmem [shape: bf16[2,16,16,128], index: 6, kind: output, shape index: {0}]
  %s7 = inlined_call_operand.vmem [shape: f32[2,2,2,128], index: 7, kind: output, shape index: {1}]
  %8 = xla_tuple %s6, %s7
  %s9 = sld [smem:[#allocation0]]
  $region80: #{upconv_block_forward.4} parent=0
    _
  %s11 = ssub.s32 1, %s9
  %s12 = scalar_select 0, %s11, %s9
  loop: start=0, step=1, limit=6
  $region2: #{upconv_block_forward.4} parent=0 // loop_pre_header
    _
  $region3: #{upconv_block_forward.4} parent=0 // loop_header
    %s14 = sphi 0, %s18
    %p15 = scmp.ge.s32.totalorder %s14, 6
    %s21 = sphi 0, %s33
    %s22 = sphi 0, %s29
    %s23 = sphi 0, %s21
    %s24 = sphi 0, %s22
    %s25 = sphi 0, %s23
    %s26 = sphi 0, %s24
    %s38 = sphi 0, %s40
    %s41 = sphi 0, %s38
    %s42 = sphi 0, %s41
    %s58 = sphi 0, %s42
    %s74 = sphi 0, %s76
    %s77 = sphi 0, %s74
    %s78 = sphi 0, %s77
    %s94 = sphi 0, %s78
    %s110 = sphi 0, %s112
    %s113 = sphi 0, %s110
    %s114 = sphi 0, %s113
    %s130 = sphi 0, %s114
    %s134 = sphi 0, %s134
    %s136 = sphi 0, %s134
    %s137 = sphi 0, %s136
    %s151 = sphi 0, %s137
    %s155 = sphi 0, %s155
    %s157 = sphi 0, %s155
    %s158 = sphi 0, %s157
    %s172 = sphi 0, %s158
    %s176 = sphi 0, %s176
    %s178 = sphi 0, %s176
    %s179 = sphi 0, %s178
    %s193 = sphi 0, %s179
    %s201 = sphi 0, %s203
    %s204 = sphi 0, %s201
    %s205 = sphi 0, %s204
    %s221 = sphi 0, %s205
    %s229 = sphi 0, %s231
    %s232 = sphi 0, %s229
    %s233 = sphi 0, %s232
    %s249 = sphi 0, %s233
  $region4: #{upconv_block_forward.4} parent=0 // loop_header_branch
    %17 = sbr.rel (%p15) target = $region8
  $region5: #{upconv_block_forward.4} parent=0 // loop_body
    %s19 = ssub.s32 %s14, 1
    %s20 = ssub.s32 %s14, 2
    %s27 = sadd.s32 1, %s22
    %p28 = scmp.ge.s32.totalorder %s27, 2
    %s29 = scalar_select %p28, 0, %s27
    %s30 = sadd.s32 1, %s21
    %s31 = scalar_select %p28, %s30, %s21
    %p32 = scmp.ge.s32.totalorder %s31, 2
    %s33 = scalar_select %p32, 0, %s31
    %s34 = ssub.s32 %s21, %s33
    %s35 = ssub.s32 %s22, %s29
    %s36 = sor.u32 %s34, %s35
    %p37 = scmp.eq.s32.totalorder %s36, 0
    %s39 = sadd.s32 %s38, 1
    %s40 = scalar_select %p37, %s38, %s39
    %p43 = pneg %p37
    %p44 = scmp.eq.s32.totalorder %s14, 3
    %p45 = por %p43, %p44
    %p46 = scmp.ne.s32.totalorder %s38, %s41
    %p47 = scmp.eq.s32.totalorder %s14, 0
    %p48 = por %p46, %p47
    %p49 = scmp.ne.s32.totalorder %s38, %s41
    %p50 = scmp.eq.s32.totalorder %s19, 3
    %p51 = por %p49, %p50
    %p52 = scmp.ne.s32.totalorder %s41, %s42
    %p53 = scmp.eq.s32.totalorder %s19, 0
    %p54 = por %p52, %p53
    %p55 = scmp.ne.s32.totalorder %s41, %s42
    %p56 = scmp.eq.s32.totalorder %s20, 3
    %p57 = por %p55, %p56
    %p59 = scmp.ne.s32.totalorder %s42, %s58
    %p60 = scmp.eq.s32.totalorder %s20, 0
    %p61 = por %p59, %p60
    %s62 = smul.u32 %s22, 8
    %s63 = ssub.s32 %s62, 1
    %p64 = scmp.gt.s32.totalorder %s63, 0
    %s65 = scalar_select %p64, %s63, 0
    %s66 = smul.u32 %s29, 8
    %s67 = ssub.s32 %s66, 1
    %p68 = scmp.gt.s32.totalorder %s67, 0
    %s69 = scalar_select %p68, %s67, 0
    %s70 = ssub.s32 %s21, %s33
    %s71 = ssub.s32 %s65, %s69
    %s72 = sor.u32 %s70, %s71
    %p73 = scmp.eq.s32.totalorder %s72, 0
    %s75 = sadd.s32 %s74, 1
    %s76 = scalar_select %p73, %s74, %s75
    %p79 = pneg %p73
    %p80 = scmp.eq.s32.totalorder %s14, 3
    %p81 = por %p79, %p80
    %p82 = scmp.ne.s32.totalorder %s74, %s77
    %p83 = scmp.eq.s32.totalorder %s14, 0
    %p84 = por %p82, %p83
    %p85 = scmp.ne.s32.totalorder %s74, %s77
    %p86 = scmp.eq.s32.totalorder %s19, 3
    %p87 = por %p85, %p86
    %p88 = scmp.ne.s32.totalorder %s77, %s78
    %p89 = scmp.eq.s32.totalorder %s19, 0
    %p90 = por %p88, %p89
    %p91 = scmp.ne.s32.totalorder %s77, %s78
    %p92 = scmp.eq.s32.totalorder %s20, 3
    %p93 = por %p91, %p92
    %p95 = scmp.ne.s32.totalorder %s78, %s94
    %p96 = scmp.eq.s32.totalorder %s20, 0
    %p97 = por %p95, %p96
    %s98 = sadd.s32 %s22, 1
    %s99 = smul.u32 %s98, 8
    %p100 = scmp.lt.s32.totalorder %s99, 15
    %s101 = scalar_select %p100, %s99, 15
    %s102 = sadd.s32 %s29, 1
    %s103 = smul.u32 %s102, 8
    %p104 = scmp.lt.s32.totalorder %s103, 15
    %s105 = scalar_select %p104, %s103, 15
    %s106 = ssub.s32 %s21, %s33
    %s107 = ssub.s32 %s101, %s105
    %s108 = sor.u32 %s106, %s107
    %p109 = scmp.eq.s32.totalorder %s108, 0
    %s111 = sadd.s32 %s110, 1
    %s112 = scalar_select %p109, %s110, %s111
    %p115 = pneg %p109
    %p116 = scmp.eq.s32.totalorder %s14, 3
    %p117 = por %p115, %p116
    %p118 = scmp.ne.s32.totalorder %s110, %s113
    %p119 = scmp.eq.s32.totalorder %s14, 0
    %p120 = por %p118, %p119
    %p121 = scmp.ne.s32.totalorder %s110, %s113
    %p122 = scmp.eq.s32.totalorder %s19, 3
    %p123 = por %p121, %p122
    %p124 = scmp.ne.s32.totalorder %s113, %s114
    %p125 = scmp.eq.s32.totalorder %s19, 0
    %p126 = por %p124, %p125
    %p127 = scmp.ne.s32.totalorder %s113, %s114
    %p128 = scmp.eq.s32.totalorder %s20, 3
    %p129 = por %p127, %p128
    %p131 = scmp.ne.s32.totalorder %s114, %s130
    %p132 = scmp.eq.s32.totalorder %s20, 0
    %p133 = por %p131, %p132
    %s135 = sadd.s32 %s134, 1
    %p138 = scmp.eq.s32.totalorder %s14, 3
    %p139 = scmp.ne.s32.totalorder %s134, %s136
    %p140 = scmp.eq.s32.totalorder %s14, 0
    %p141 = por %p139, %p140
    %p142 = scmp.ne.s32.totalorder %s134, %s136
    %p143 = scmp.eq.s32.totalorder %s19, 3
    %p144 = por %p142, %p143
    %p145 = scmp.ne.s32.totalorder %s136, %s137
    %p146 = scmp.eq.s32.totalorder %s19, 0
    %p147 = por %p145, %p146
    %p148 = scmp.ne.s32.totalorder %s136, %s137
    %p149 = scmp.eq.s32.totalorder %s20, 3
    %p150 = por %p148, %p149
    %p152 = scmp.ne.s32.totalorder %s137, %s151
    %p153 = scmp.eq.s32.totalorder %s20, 0
    %p154 = por %p152, %p153
    %s156 = sadd.s32 %s155, 1
    %p159 = scmp.eq.s32.totalorder %s14, 3
    %p160 = scmp.ne.s32.totalorder %s155, %s157
    %p161 = scmp.eq.s32.totalorder %s14, 0
    %p162 = por %p160, %p161
    %p163 = scmp.ne.s32.totalorder %s155, %s157
    %p164 = scmp.eq.s32.totalorder %s19, 3
    %p165 = por %p163, %p164
    %p166 = scmp.ne.s32.totalorder %s157, %s158
    %p167 = scmp.eq.s32.totalorder %s19, 0
    %p168 = por %p166, %p167
    %p169 = scmp.ne.s32.totalorder %s157, %s158
    %p170 = scmp.eq.s32.totalorder %s20, 3
    %p171 = por %p169, %p170
    %p173 = scmp.ne.s32.totalorder %s158, %s172
    %p174 = scmp.eq.s32.totalorder %s20, 0
    %p175 = por %p173, %p174
    %s177 = sadd.s32 %s176, 1
    %p180 = scmp.eq.s32.totalorder %s14, 3
    %p181 = scmp.ne.s32.totalorder %s176, %s178
    %p182 = scmp.eq.s32.totalorder %s14, 0
    %p183 = por %p181, %p182
    %p184 = scmp.ne.s32.totalorder %s176, %s178
    %p185 = scmp.eq.s32.totalorder %s19, 3
    %p186 = por %p184, %p185
    %p187 = scmp.ne.s32.totalorder %s178, %s179
    %p188 = scmp.eq.s32.totalorder %s19, 0
    %p189 = por %p187, %p188
    %p190 = scmp.ne.s32.totalorder %s178, %s179
    %p191 = scmp.eq.s32.totalorder %s20, 3
    %p192 = por %p190, %p191
    %p194 = scmp.ne.s32.totalorder %s179, %s193
    %p195 = scmp.eq.s32.totalorder %s20, 0
    %p196 = por %p194, %p195
    %s197 = ssub.s32 %s21, %s33
    %s198 = ssub.s32 %s22, %s29
    %s199 = sor.u32 %s197, %s198
    %p200 = scmp.eq.s32.totalorder %s199, 0
    %s202 = sadd.s32 %s201, 1
    %s203 = scalar_select %p200, %s201, %s202
    %p206 = pneg %p200
    %p207 = scmp.eq.s32.totalorder %s14, 3
    %p208 = por %p206, %p207
    %p209 = scmp.ne.s32.totalorder %s201, %s204
    %p210 = scmp.eq.s32.totalorder %s14, 0
    %p211 = por %p209, %p210
    %p212 = scmp.ne.s32.totalorder %s201, %s204
    %p213 = scmp.eq.s32.totalorder %s19, 3
    %p214 = por %p212, %p213
    %p215 = scmp.ne.s32.totalorder %s204, %s205
    %p216 = scmp.eq.s32.totalorder %s19, 0
    %p217 = por %p215, %p216
    %p218 = scmp.ne.s32.totalorder %s204, %s205
    %p219 = scmp.eq.s32.totalorder %s20, 3
    %p220 = por %p218, %p219
    %p222 = scmp.ne.s32.totalorder %s205, %s221
    %p223 = scmp.eq.s32.totalorder %s20, 0
    %p224 = por %p222, %p223
    %s225 = ssub.s32 %s21, %s33
    %s226 = ssub.s32 %s22, %s29
    %s227 = sor.u32 %s225, %s226
    %p228 = scmp.eq.s32.totalorder %s227, 0
    %s230 = sadd.s32 %s229, 1
    %s231 = scalar_select %p228, %s229, %s230
    %p234 = pneg %p228
    %p235 = scmp.eq.s32.totalorder %s14, 3
    %p236 = por %p234, %p235
    %p237 = scmp.ne.s32.totalorder %s229, %s232
    %p238 = scmp.eq.s32.totalorder %s14, 0
    %p239 = por %p237, %p238
    %p240 = scmp.ne.s32.totalorder %s229, %s232
    %p241 = scmp.eq.s32.totalorder %s19, 3
    %p242 = por %p240, %p241
    %p243 = scmp.ne.s32.totalorder %s232, %s233
    %p244 = scmp.eq.s32.totalorder %s19, 0
    %p245 = por %p243, %p244
    %p246 = scmp.ne.s32.totalorder %s232, %s233
    %p247 = scmp.eq.s32.totalorder %s20, 3
    %p248 = por %p246, %p247
    %p250 = scmp.ne.s32.totalorder %s233, %s249
    %p251 = scmp.eq.s32.totalorder %s20, 0
    %p252 = por %p250, %p251
    %p253 = scmp.le.s32.totalorder 1, %s14
    %p254 = scmp.lt.s32.totalorder %s14, 5
    %p255 = pnand %p253, %p254
    %p256 = pneg %p255
    // Predicated region
    $region9: #{upconv_block_forward.4} parent=5 // pred_check
      _
    $region10: #{upconv_block_forward.4} parent=5 // pred_check_branch
      %258 = sbr.rel (%p255) target = $region12
    $region11: #{upconv_block_forward.4} parent=5 // pred_region
      %s259 = ssub.s32 %s14, 1
      // Predicated region
      $region13: #{upconv_block_forward.4} parent=11 // pred_check
        %p260 = pneg %p147
      $region14: #{upconv_block_forward.4} parent=11 // pred_check_branch
        %262 = sbr.rel (%p260) target = $region16
      $region15: #{upconv_block_forward.4} parent=11 // pred_region
        _
      $region16: #{upconv_block_forward.4} parent=11 // pred_fallthru
        _
      // Predicated region
      $region17: #{upconv_block_forward.4} parent=11 // pred_check
        %p263 = pneg %p168
      $region18: #{upconv_block_forward.4} parent=11 // pred_check_branch
        %265 = sbr.rel (%p263) target = $region20
      $region19: #{upconv_block_forward.4} parent=11 // pred_region
        _
      $region20: #{upconv_block_forward.4} parent=11 // pred_fallthru
        _
      // Predicated region
      $region21: #{upconv_block_forward.4} parent=11 // pred_check
        %p266 = pneg %p189
      $region22: #{upconv_block_forward.4} parent=11 // pred_check_branch
        %268 = sbr.rel (%p266) target = $region24
      $region23: #{upconv_block_forward.4} parent=11 // pred_region
        _
      $region24: #{upconv_block_forward.4} parent=11 // pred_fallthru
        _
    $region12: #{upconv_block_forward.4} parent=5 // pred_fallthru
      _
    %p269 = scmp.lt.s32.totalorder %s14, 4
    // Predicated region
    $region25: #{upconv_block_forward.4} parent=5 // pred_check
      %p270 = pneg %p269
    $region26: #{upconv_block_forward.4} parent=5 // pred_check_branch
      %272 = sbr.rel (%p270) target = $region28
    $region27: #{upconv_block_forward.4} parent=5 // pred_region
      // Predicated region
      $region29: #{upconv_block_forward.4} parent=27 // pred_check
        %p273 = pneg %p48
      $region30: #{upconv_block_forward.4} parent=27 // pred_check_branch
        %275 = sbr.rel (%p273) target = $region32
      $region31: #{upconv_block_forward.4} parent=27 // pred_region
        %s276 = smul.u32 8, %s22
        %p277 = scmp.lt.s32.totalorder %s21, 1
        %s278 = scalar_select %p277, %s21, 1
        %p279 = scmp.lt.s32.totalorder %s276, 15
        %s280 = scalar_select %p279, %s276, 15
        %s281 = smul.addr %s280, 4
        %s282 = smul.addr %s278, 64
        %s283 = sadd.s32 %s281, %s282
        %s284 = smul.addr %s283, 4
        %s285 = scalar_lea.vmem %s0, %s284
        %s286 = smul.u32 8, %s22
      $region32: #{upconv_block_forward.4} parent=27 // pred_fallthru
        _
      // Predicated region
      $region33: #{upconv_block_forward.4} parent=27 // pred_check
        %p287 = pneg %p84
      $region34: #{upconv_block_forward.4} parent=27 // pred_check_branch
        %289 = sbr.rel (%p287) target = $region36
      $region35: #{upconv_block_forward.4} parent=27 // pred_region
        %s290 = smul.u32 %s22, 8
        %s291 = ssub.s32 %s290, 1
        %p292 = scmp.gt.s32.totalorder %s291, 0
        %s293 = scalar_select %p292, %s291, 0
        %p294 = scmp.lt.s32.totalorder %s21, 1
        %s295 = scalar_select %p294, %s21, 1
        %p296 = scmp.lt.s32.totalorder %s293, 15
        %s297 = scalar_select %p296, %s293, 15
        %s298 = smul.addr %s297, 4
        %s299 = smul.addr %s295, 64
        %s300 = sadd.s32 %s298, %s299
        %s301 = smul.addr %s300, 4
        %s302 = scalar_lea.vmem %s1, %s301
        %s303 = smul.u32 %s22, 8
        %s304 = ssub.s32 %s303, 1
        %p305 = scmp.gt.s32.totalorder %s304, 0
        %s306 = scalar_select %p305, %s304, 0
      $region36: #{upconv_block_forward.4} parent=27 // pred_fallthru
        _
      // Predicated region
      $region37: #{upconv_block_forward.4} parent=27 // pred_check
        %p307 = pneg %p120
      $region38: #{upconv_block_forward.4} parent=27 // pred_check_branch
        %309 = sbr.rel (%p307) target = $region40
      $region39: #{upconv_block_forward.4} parent=27 // pred_region
        %s310 = sadd.s32 %s22, 1
        %s311 = smul.u32 %s310, 8
        %p312 = scmp.lt.s32.totalorder %s311, 15
        %s313 = scalar_select %p312, %s311, 15
        %p314 = scmp.lt.s32.totalorder %s21, 1
        %s315 = scalar_select %p314, %s21, 1
        %p316 = scmp.lt.s32.totalorder %s313, 15
        %s317 = scalar_select %p316, %s313, 15
        %s318 = smul.addr %s317, 4
        %s319 = smul.addr %s315, 64
        %s320 = sadd.s32 %s318, %s319
        %s321 = smul.addr %s320, 4
        %s322 = scalar_lea.vmem %s2, %s321
        %s323 = sadd.s32 %s22, 1
        %s324 = smul.u32 %s323, 8
        %p325 = scmp.lt.s32.totalorder %s324, 15
        %s326 = scalar_select %p325, %s324, 15
      $region40: #{upconv_block_forward.4} parent=27 // pred_fallthru
        _
    $region28: #{upconv_block_forward.4} parent=5 // pred_fallthru
      _
    %p327 = scmp.le.s32.totalorder 1, %s14
    %p328 = scmp.lt.s32.totalorder %s14, 5
    %p329 = pnand %p327, %p328
    %p330 = pneg %p329
    // Predicated region
    $region41: #{upconv_block_forward.4} parent=5 // pred_check
      _
    $region42: #{upconv_block_forward.4} parent=5 // pred_check_branch
      %332 = sbr.rel (%p329) target = $region44
    $region43: #{upconv_block_forward.4} parent=5 // pred_region
      %s333 = ssub.s32 %s14, 1
      %s334 = smul.u32 8, %s24
      %p335 = scmp.lt.s32.totalorder %s23, 1
      %s336 = scalar_select %p335, %s23, 1
      %p337 = scmp.lt.s32.totalorder %s334, 15
      %s338 = scalar_select %p337, %s334, 15
      %s339 = smul.addr %s338, 4
      %s340 = smul.addr %s336, 64
      %s341 = sadd.s32 %s339, %s340
      %s342 = smul.addr %s341, 4
      %s343 = scalar_lea.vmem %s0, %s342
      %p344 = pneg %p54
      %p345 = pneg %p51
      %s346 = smul.u32 %s24, 8
      %s347 = ssub.s32 %s346, 1
      %p348 = scmp.gt.s32.totalorder %s347, 0
      %s349 = scalar_select %p348, %s347, 0
      %p350 = scmp.lt.s32.totalorder %s23, 1
      %s351 = scalar_select %p350, %s23, 1
      %p352 = scmp.lt.s32.totalorder %s349, 15
      %s353 = scalar_select %p352, %s349, 15
      %s354 = smul.addr %s353, 4
      %s355 = smul.addr %s351, 64
      %s356 = sadd.s32 %s354, %s355
      %s357 = smul.addr %s356, 4
      %s358 = scalar_lea.vmem %s1, %s357
      %p359 = pneg %p90
      %p360 = pneg %p87
      %s361 = sadd.s32 %s24, 1
      %s362 = smul.u32 %s361, 8
      %p363 = scmp.lt.s32.totalorder %s362, 15
      %s364 = scalar_select %p363, %s362, 15
      %p365 = scmp.lt.s32.totalorder %s23, 1
      %s366 = scalar_select %p365, %s23, 1
      %p367 = scmp.lt.s32.totalorder %s364, 15
      %s368 = scalar_select %p367, %s364, 15
      %s369 = smul.addr %s368, 4
      %s370 = smul.addr %s366, 64
      %s371 = sadd.s32 %s369, %s370
      %s372 = smul.addr %s371, 4
      %s373 = scalar_lea.vmem %s2, %s372
      %p374 = pneg %p126
      %p375 = pneg %p123
      %p376 = pneg %p147
      %p377 = pneg %p144
      %p378 = pneg %p168
      %p379 = pneg %p165
      %p380 = pneg %p189
      %p381 = pneg %p186
      %p382 = pneg %p217
      %p383 = pneg %p214
      %s384 = smul.u32 8, %s24
      %p385 = scmp.lt.s32.totalorder %s23, 1
      %s386 = scalar_select %p385, %s23, 1
      %p387 = scmp.lt.s32.totalorder %s384, 15
      %s388 = scalar_select %p387, %s384, 15
      %s389 = smul.addr %s388, 2
      %s390 = smul.addr %s386, 32
      %s391 = sadd.s32 %s389, %s390
      %s392 = smul.addr %s391, 4
      %s393 = scalar_lea.vmem %s6, %s392
      %p394 = pneg %p245
      %p395 = pneg %p242
      %p396 = scmp.lt.s32.totalorder %s23, 1
      %s397 = scalar_select %p396, %s23, 1
      %p398 = scmp.lt.s32.totalorder %s24, 1
      %s399 = scalar_select %p398, %s24, 1
      %s400 = smul.addr %s397, 2
      %s401 = sadd.s32 %s399, %s400
      %s402 = smul.addr %s401, 2
      %s403 = scalar_lea.vmem %s7, %s402
      %s404 = smul.u32 8, %s24
      %p405 = scmp.lt.s32.totalorder %s23, 1
      %s406 = scalar_select %p405, %s23, 1
      %p407 = scmp.lt.s32.totalorder %s404, 15
      %s408 = scalar_select %p407, %s404, 15
      %s409 = smul.addr %s408, 4
      %s410 = smul.addr %s406, 64
      %s411 = sadd.s32 %s409, %s410
      %s412 = smul.addr %s411, 4
      %s413 = scalar_lea.vmem %s0, %s412
      %s414 = smul.u32 8, %s24
      %s415 = smul.u32 %s24, 8
      %s416 = ssub.s32 %s415, 1
      %p417 = scmp.gt.s32.totalorder %s416, 0
      %s418 = scalar_select %p417, %s416, 0
      %p419 = scmp.lt.s32.totalorder %s23, 1
      %s420 = scalar_select %p419, %s23, 1
      %p421 = scmp.lt.s32.totalorder %s418, 15
      %s422 = scalar_select %p421, %s418, 15
      %s423 = smul.addr %s422, 4
      %s424 = smul.addr %s420, 64
      %s425 = sadd.s32 %s423, %s424
      %s426 = smul.addr %s425, 4
      %s427 = scalar_lea.vmem %s1, %s426
      %s428 = smul.u32 %s24, 8
      %s429 = ssub.s32 %s428, 1
      %p430 = scmp.gt.s32.totalorder %s429, 0
      %s431 = scalar_select %p430, %s429, 0
      %s432 = sadd.s32 %s24, 1
      %s433 = smul.u32 %s432, 8
      %p434 = scmp.lt.s32.totalorder %s433, 15
      %s435 = scalar_select %p434, %s433, 15
      %p436 = scmp.lt.s32.totalorder %s23, 1
      %s437 = scalar_select %p436, %s23, 1
      %p438 = scmp.lt.s32.totalorder %s435, 15
      %s439 = scalar_select %p438, %s435, 15
      %s440 = smul.addr %s439, 4
      %s441 = smul.addr %s437, 64
      %s442 = sadd.s32 %s440, %s441
      %s443 = smul.addr %s442, 4
      %s444 = scalar_lea.vmem %s2, %s443
      %s445 = sadd.s32 %s24, 1
      %s446 = smul.u32 %s445, 8
      %p447 = scmp.lt.s32.totalorder %s446, 15
      %s448 = scalar_select %p447, %s446, 15
      %s449 = smul.u32 8, %s24
      %p450 = scmp.lt.s32.totalorder %s23, 1
      %s451 = scalar_select %p450, %s23, 1
      %p452 = scmp.lt.s32.totalorder %s449, 15
      %s453 = scalar_select %p452, %s449, 15
      %s454 = smul.addr %s453, 2
      %s455 = smul.addr %s451, 32
      %s456 = sadd.s32 %s454, %s455
      %s457 = smul.addr %s456, 4
      %s458 = scalar_lea.vmem %s6, %s457
      %s459 = smul.u32 8, %s24
      %p460 = scmp.lt.s32.totalorder %s23, 1
      %s461 = scalar_select %p460, %s23, 1
      %p462 = scmp.lt.s32.totalorder %s24, 1
      %s463 = scalar_select %p462, %s24, 1
      %s464 = smul.addr %s461, 2
      %s465 = sadd.s32 %s463, %s464
      %s466 = smul.addr %s465, 2
      %s467 = scalar_lea.vmem %s7, %s466
      %v469 = vld [vmem:[%s5] ss:$4 sm:$0x3]
      %s470 = scalar_lea.vmem %s5, 1
      %v471 = vld [vmem:[%s470] ss:$4 sm:$0x3]
      %s472 = scalar_lea.vmem %s5, 2
      %v473 = vld [vmem:[%s472] ss:$4 sm:$0x3]
      %474 = vst [vmem:[#allocation2] sm:$0xff] 0
      %475 = vst [vmem:[#allocation2 + $0x8] sm:$0xff] 0
      %476 = vst [vmem:[#allocation2 + $0x10] sm:$0x11] 0
      %477 = vst [vmem:[#allocation2 + $0x18] sm:$0xff] 0
      %478 = vst [vmem:[#allocation2 + $0x20] sm:$0xff] 0
      %479 = vst [vmem:[#allocation2 + $0x28] sm:$0x11] 0
      %480 = vst [vmem:[#allocation2 + $0x30] sm:$0xff] 0
      %481 = vst [vmem:[#allocation2 + $0x38] sm:$0xff] 0
      %482 = vst [vmem:[#allocation2 + $0x40] sm:$0x11] 0
      %483 = vst [vmem:[#allocation2 + $0x48] sm:$0xff] 0
      %484 = vst [vmem:[#allocation2 + $0x50] sm:$0xff] 0
      %485 = vst [vmem:[#allocation2 + $0x58] sm:$0x11] 0
      %486 = vst [vmem:[#allocation2 + $0x60] sm:$0xff] 0
      %487 = vst [vmem:[#allocation2 + $0x68] sm:$0xff] 0
      %488 = vst [vmem:[#allocation2 + $0x70] sm:$0x11] 0
      %489 = vst [vmem:[#allocation2 + $0x78] sm:$0xff] 0
      %490 = vst [vmem:[#allocation2 + $0x80] sm:$0xff] 0
      %491 = vst [vmem:[#allocation2 + $0x88] sm:$0x11] 0
      %492 = vst [vmem:[#allocation2 + $0x90] sm:$0xff] 0
      %493 = vst [vmem:[#allocation2 + $0x98] sm:$0xff] 0
      %494 = vst [vmem:[#allocation2 + $0xa0] sm:$0x11] 0
      %495 = vst [vmem:[#allocation2 + $0xa8] sm:$0xff] 0
      %496 = vst [vmem:[#allocation2 + $0xb0] sm:$0xff] 0
      %497 = vst [vmem:[#allocation2 + $0xb8] sm:$0x11] 0
      %498 = vst [vmem:[#allocation2 + $0xc0] sm:$0xff] 0
      %499 = vst [vmem:[#allocation2 + $0xc8] sm:$0xff] 0
      %500 = vst [vmem:[#allocation2 + $0xd0] sm:$0x11] 0
      %501 = vst [vmem:[#allocation2 + $0xd8] sm:$0xff] 0
      %502 = vst [vmem:[#allocation2 + $0xe0] sm:$0xff] 0
      %503 = vst [vmem:[#allocation2 + $0xe8] sm:$0x11] 0
      %v504 = vld [vmem:[%s413] sm:$0xff]
      %v505 = vld [vmem:[%s413 + $0x8] sm:$0xff]
      %v506 = vld [vmem:[%s413 + $0x10] sm:$0xff]
      %v507 = vld [vmem:[%s413 + $0x18] sm:$0xff]
      %v508 = vld [vmem:[%s413 + $0x20] sm:$0xff]
      %v509 = vld [vmem:[%s413 + $0x28] sm:$0xff]
      %v510 = vld [vmem:[%s413 + $0x30] sm:$0xff]
      %v511 = vld [vmem:[%s413 + $0x38] sm:$0xff]
      %v512 = vld [vmem:[%s413 + $0x40] sm:$0xff]
      %v513 = vld [vmem:[%s413 + $0x48] sm:$0xff]
      %v514 = vld [vmem:[%s413 + $0x50] sm:$0xff]
      %v515 = vld [vmem:[%s413 + $0x58] sm:$0xff]
      %v516 = vld [vmem:[%s413 + $0x60] sm:$0xff]
      %v517 = vld [vmem:[%s413 + $0x68] sm:$0xff]
      %v518 = vld [vmem:[%s413 + $0x70] sm:$0xff]
      %v519 = vld [vmem:[%s413 + $0x78] sm:$0xff]
      %v520 = vunpack.c.l.bf16 %v504
      %v521 = vunpack.c.h.bf16 %v504
      %v522 = vunpack.c.l.bf16 %v505
      %v523 = vunpack.c.h.bf16 %v505
      %v524 = vunpack.c.l.bf16 %v506
      %v525 = vunpack.c.h.bf16 %v506
      %v526 = vunpack.c.l.bf16 %v507
      %v527 = vunpack.c.h.bf16 %v507
      %v528 = vunpack.c.l.bf16 %v508
      %v529 = vunpack.c.h.bf16 %v508
      %v530 = vunpack.c.l.bf16 %v509
      %v531 = vunpack.c.h.bf16 %v509
      %v532 = vunpack.c.l.bf16 %v510
      %v533 = vunpack.c.h.bf16 %v510
      %v534 = vunpack.c.l.bf16 %v511
      %v535 = vunpack.c.h.bf16 %v511
      %v536 = vunpack.c.l.bf16 %v512
      %v537 = vunpack.c.h.bf16 %v512
      %v538 = vunpack.c.l.bf16 %v513
      %v539 = vunpack.c.h.bf16 %v513
      %v540 = vunpack.c.l.bf16 %v514
      %v541 = vunpack.c.h.bf16 %v514
      %v542 = vunpack.c.l.bf16 %v515
      %v543 = vunpack.c.h.bf16 %v515
      %v544 = vunpack.c.l.bf16 %v516
      %v545 = vunpack.c.h.bf16 %v516
      %v546 = vunpack.c.l.bf16 %v517
      %v547 = vunpack.c.h.bf16 %v517
      %v548 = vunpack.c.l.bf16 %v518
      %v549 = vunpack.c.h.bf16 %v518
      %v550 = vunpack.c.l.bf16 %v519
      %v551 = vunpack.c.h.bf16 %v519
      %v553 = vlaneseq
      %v554 = vshrl.u32 %v553, 7
      %v555 = vsub.s32 0, %v554
      %v556 = vrot.slane %v469, %v555
      %v557 = vlaneseq
      %v558 = vshrl.u32 %v557, 7
      %v559 = vsub.s32 1, %v558
      %v560 = vrot.slane %v469, %v559
      %v563 = vmul.f32 %v520, %v556
      %v564 = vmul.f32 %v521, %v560
      %v565 = vmul.f32 %v522, %v556
      %v566 = vmul.f32 %v523, %v560
      %v567 = vmul.f32 %v524, %v556
      %v568 = vmul.f32 %v525, %v560
      %v569 = vmul.f32 %v526, %v556
      %v570 = vmul.f32 %v527, %v560
      %v571 = vmul.f32 %v528, %v556
      %v572 = vmul.f32 %v529, %v560
      %v573 = vmul.f32 %v530, %v556
      %v574 = vmul.f32 %v531, %v560
      %v575 = vmul.f32 %v532, %v556
      %v576 = vmul.f32 %v533, %v560
      %v577 = vmul.f32 %v534, %v556
      %v578 = vmul.f32 %v535, %v560
      %v579 = vmul.f32 %v536, %v556
      %v580 = vmul.f32 %v537, %v560
      %v581 = vmul.f32 %v538, %v556
      %v582 = vmul.f32 %v539, %v560
      %v583 = vmul.f32 %v540, %v556
      %v584 = vmul.f32 %v541, %v560
      %v585 = vmul.f32 %v542, %v556
      %v586 = vmul.f32 %v543, %v560
      %v587 = vmul.f32 %v544, %v556
      %v588 = vmul.f32 %v545, %v560
      %v589 = vmul.f32 %v546, %v556
      %v590 = vmul.f32 %v547, %v560
      %v591 = vmul.f32 %v548, %v556
      %v592 = vmul.f32 %v549, %v560
      %v593 = vmul.f32 %v550, %v556
      %v594 = vmul.f32 %v551, %v560
      %v596 = vlaneseq
      %v597 = vshrl.u32 %v596, 7
      %v598 = vsub.s32 0, %v597
      %v599 = vrot.slane %v471, %v598
      %v600 = vlaneseq
      %v601 = vshrl.u32 %v600, 7
      %v602 = vsub.s32 1, %v601
      %v603 = vrot.slane %v471, %v602
      %v606 = vadd.f32 %v563, %v599
      %v607 = vadd.f32 %v564, %v603
      %v608 = vadd.f32 %v565, %v599
      %v609 = vadd.f32 %v566, %v603
      %v610 = vadd.f32 %v567, %v599
      %v611 = vadd.f32 %v568, %v603
      %v612 = vadd.f32 %v569, %v599
      %v613 = vadd.f32 %v570, %v603
      %v614 = vadd.f32 %v571, %v599
      %v615 = vadd.f32 %v572, %v603
      %v616 = vadd.f32 %v573, %v599
      %v617 = vadd.f32 %v574, %v603
      %v618 = vadd.f32 %v575, %v599
      %v619 = vadd.f32 %v576, %v603
      %v620 = vadd.f32 %v577, %v599
      %v621 = vadd.f32 %v578, %v603
      %v622 = vadd.f32 %v579, %v599
      %v623 = vadd.f32 %v580, %v603
      %v624 = vadd.f32 %v581, %v599
      %v625 = vadd.f32 %v582, %v603
      %v626 = vadd.f32 %v583, %v599
      %v627 = vadd.f32 %v584, %v603
      %v628 = vadd.f32 %v585, %v599
      %v629 = vadd.f32 %v586, %v603
      %v630 = vadd.f32 %v587, %v599
      %v631 = vadd.f32 %v588, %v603
      %v632 = vadd.f32 %v589, %v599
      %v633 = vadd.f32 %v590, %v603
      %v634 = vadd.f32 %v591, %v599
      %v635 = vadd.f32 %v592, %v603
      %v636 = vadd.f32 %v593, %v599
      %v637 = vadd.f32 %v594, %v603
      %vm638 = vcmp.ge.f32.partialorder %v606, 0.0
      %vm639 = vcmp.ge.f32.partialorder %v607, 0.0
      %vm640 = vcmp.ge.f32.partialorder %v608, 0.0
      %vm641 = vcmp.ge.f32.partialorder %v609, 0.0
      %vm642 = vcmp.ge.f32.partialorder %v610, 0.0
      %vm643 = vcmp.ge.f32.partialorder %v611, 0.0
      %vm644 = vcmp.ge.f32.partialorder %v612, 0.0
      %vm645 = vcmp.ge.f32.partialorder %v613, 0.0
      %vm646 = vcmp.ge.f32.partialorder %v614, 0.0
      %vm647 = vcmp.ge.f32.partialorder %v615, 0.0
      %vm648 = vcmp.ge.f32.partialorder %v616, 0.0
      %vm649 = vcmp.ge.f32.partialorder %v617, 0.0
      %vm650 = vcmp.ge.f32.partialorder %v618, 0.0
      %vm651 = vcmp.ge.f32.partialorder %v619, 0.0
      %vm652 = vcmp.ge.f32.partialorder %v620, 0.0
      %vm653 = vcmp.ge.f32.partialorder %v621, 0.0
      %vm654 = vcmp.ge.f32.partialorder %v622, 0.0
      %vm655 = vcmp.ge.f32.partialorder %v623, 0.0
      %vm656 = vcmp.ge.f32.partialorder %v624, 0.0
      %vm657 = vcmp.ge.f32.partialorder %v625, 0.0
      %vm658 = vcmp.ge.f32.partialorder %v626, 0.0
      %vm659 = vcmp.ge.f32.partialorder %v627, 0.0
      %vm660 = vcmp.ge.f32.partialorder %v628, 0.0
      %vm661 = vcmp.ge.f32.partialorder %v629, 0.0
      %vm662 = vcmp.ge.f32.partialorder %v630, 0.0
      %vm663 = vcmp.ge.f32.partialorder %v631, 0.0
      %vm664 = vcmp.ge.f32.partialorder %v632, 0.0
      %vm665 = vcmp.ge.f32.partialorder %v633, 0.0
      %vm666 = vcmp.ge.f32.partialorder %v634, 0.0
      %vm667 = vcmp.ge.f32.partialorder %v635, 0.0
      %vm668 = vcmp.ge.f32.partialorder %v636, 0.0
      %vm669 = vcmp.ge.f32.partialorder %v637, 0.0
      %v671 = vlaneseq
      %v672 = vshrl.u32 %v671, 7
      %v673 = vsub.s32 0, %v672
      %v674 = vrot.slane %v473, %v673
      %v675 = vlaneseq
      %v676 = vshrl.u32 %v675, 7
      %v677 = vsub.s32 1, %v676
      %v678 = vrot.slane %v473, %v677
      %v681 = vmul.f32 %v606, %v674
      %v682 = vmul.f32 %v607, %v678
      %v683 = vmul.f32 %v608, %v674
      %v684 = vmul.f32 %v609, %v678
      %v685 = vmul.f32 %v610, %v674
      %v686 = vmul.f32 %v611, %v678
      %v687 = vmul.f32 %v612, %v674
      %v688 = vmul.f32 %v613, %v678
      %v689 = vmul.f32 %v614, %v674
      %v690 = vmul.f32 %v615, %v678
      %v691 = vmul.f32 %v616, %v674
      %v692 = vmul.f32 %v617, %v678
      %v693 = vmul.f32 %v618, %v674
      %v694 = vmul.f32 %v619, %v678
      %v695 = vmul.f32 %v620, %v674
      %v696 = vmul.f32 %v621, %v678
      %v697 = vmul.f32 %v622, %v674
      %v698 = vmul.f32 %v623, %v678
      %v699 = vmul.f32 %v624, %v674
      %v700 = vmul.f32 %v625, %v678
      %v701 = vmul.f32 %v626, %v674
      %v702 = vmul.f32 %v627, %v678
      %v703 = vmul.f32 %v628, %v674
      %v704 = vmul.f32 %v629, %v678
      %v705 = vmul.f32 %v630, %v674
      %v706 = vmul.f32 %v631, %v678
      %v707 = vmul.f32 %v632, %v674
      %v708 = vmul.f32 %v633, %v678
      %v709 = vmul.f32 %v634, %v674
      %v710 = vmul.f32 %v635, %v678
      %v711 = vmul.f32 %v636, %v674
      %v712 = vmul.f32 %v637, %v678
      %v713 = vsel %vm638, %v606, %v681
      %v714 = vsel %vm639, %v607, %v682
      %v715 = vsel %vm640, %v608, %v683
      %v716 = vsel %vm641, %v609, %v684
      %v717 = vsel %vm642, %v610, %v685
      %v718 = vsel %vm643, %v611, %v686
      %v719 = vsel %vm644, %v612, %v687
      %v720 = vsel %vm645, %v613, %v688
      %v721 = vsel %vm646, %v614, %v689
      %v722 = vsel %vm647, %v615, %v690
      %v723 = vsel %vm648, %v616, %v691
      %v724 = vsel %vm649, %v617, %v692
      %v725 = vsel %vm650, %v618, %v693
      %v726 = vsel %vm651, %v619, %v694
      %v727 = vsel %vm652, %v620, %v695
      %v728 = vsel %vm653, %v621, %v696
      %v729 = vsel %vm654, %v622, %v697
      %v730 = vsel %vm655, %v623, %v698
      %v731 = vsel %vm656, %v624, %v699
      %v732 = vsel %vm657, %v625, %v700
      %v733 = vsel %vm658, %v626, %v701
      %v734 = vsel %vm659, %v627, %v702
      %v735 = vsel %vm660, %v628, %v703
      %v736 = vsel %vm661, %v629, %v704
      %v737 = vsel %vm662, %v630, %v705
      %v738 = vsel %vm663, %v631, %v706
      %v739 = vsel %vm664, %v632, %v707
      %v740 = vsel %vm665, %v633, %v708
      %v741 = vsel %vm666, %v634, %v709
      %v742 = vsel %vm667, %v635, %v710
      %v743 = vsel %vm668, %v636, %v711
      %v744 = vsel %vm669, %v637, %v712
      %v745 = vpack.c.bf16 %v715, %v713
      %v746 = vpack.c.bf16 %v716, %v714
      %v747 = vpack.c.bf16 %v719, %v717
      %v748 = vpack.c.bf16 %v720, %v718
      %v749 = vpack.c.bf16 %v723, %v721
      %v750 = vpack.c.bf16 %v724, %v722
      %v751 = vpack.c.bf16 %v727, %v725
      %v752 = vpack.c.bf16 %v728, %v726
      %v753 = vpack.c.bf16 %v731, %v729
      %v754 = vpack.c.bf16 %v732, %v730
      %v755 = vpack.c.bf16 %v735, %v733
      %v756 = vpack.c.bf16 %v736, %v734
      %v757 = vpack.c.bf16 %v739, %v737
      %v758 = vpack.c.bf16 %v740, %v738
      %v759 = vpack.c.bf16 %v743, %v741
      %v760 = vpack.c.bf16 %v744, %v742
      %v777 = vunpack.c.l.b16 %v745
      %v778 = vunpack.c.l.b16 %v746
      %v779 = vunpack.c.h.b16 %v745
      %v780 = vunpack.c.h.b16 %v746
      %v781 = vunpack.c.l.b16 %v747
      %v782 = vunpack.c.l.b16 %v748
      %v783 = vunpack.c.h.b16 %v747
      %v784 = vunpack.c.h.b16 %v748
      %v785 = vunpack.c.l.b16 %v749
      %v786 = vunpack.c.l.b16 %v750
      %v787 = vunpack.c.h.b16 %v749
      %v788 = vunpack.c.h.b16 %v750
      %v789 = vunpack.c.l.b16 %v751
      %v790 = vunpack.c.l.b16 %v752
      %v791 = vunpack.c.h.b16 %v751
      %v792 = vunpack.c.h.b16 %v752
      %v793 = vunpack.c.l.b16 %v753
      %v794 = vunpack.c.l.b16 %v754
      %v795 = vunpack.c.h.b16 %v753
      %v796 = vunpack.c.h.b16 %v754
      %v797 = vunpack.c.l.b16 %v755
      %v798 = vunpack.c.l.b16 %v756
      %v799 = vunpack.c.h.b16 %v755
      %v800 = vunpack.c.h.b16 %v756
      %v801 = vunpack.c.l.b16 %v757
      %v802 = vunpack.c.l.b16 %v758
      %v803 = vunpack.c.h.b16 %v757
      %v804 = vunpack.c.h.b16 %v758
      %v805 = vunpack.c.l.b16 %v759
      %v806 = vunpack.c.l.b16 %v760
      %v807 = vunpack.c.h.b16 %v759
      %v808 = vunpack.c.h.b16 %v760
      %v809 = vpack.c.b16 %v778, %v777
      %v810 = vpack.c.b16 %v780, %v779
      %v811 = vpack.c.b16 %v782, %v781
      %v812 = vpack.c.b16 %v784, %v783
      %v813 = vpack.c.b16 %v786, %v785
      %v814 = vpack.c.b16 %v788, %v787
      %v815 = vpack.c.b16 %v790, %v789
      %v816 = vpack.c.b16 %v792, %v791
      %v817 = vpack.c.b16 %v794, %v793
      %v818 = vpack.c.b16 %v796, %v795
      %v819 = vpack.c.b16 %v798, %v797
      %v820 = vpack.c.b16 %v800, %v799
      %v821 = vpack.c.b16 %v802, %v801
      %v822 = vpack.c.b16 %v804, %v803
      %v823 = vpack.c.b16 %v806, %v805
      %v824 = vpack.c.b16 %v808, %v807
      %vm825 = vsmask.f32 256
      %vm826 = vsmask.f32 4368
      %vm827 = vmor %vm825, %vm826
      %v829 = vshrl.u32 %v809, 16
      %v831 = vrot.slane %v829, 7
      %v832 = vshll.u32 %v809, 16
      %v834 = vor.u32 %v831, %v832
      %v835 = vrot.slane %v831, 4
      %v837 = vshrl.u32 %v810, 16
      %v839 = vrot.slane %v837, 7
      %v840 = vshll.u32 %v810, 16
      %v842 = vor.u32 %v839, %v840
      %v843 = vsel %vm827, %v835, %v842
      %v844 = vrot.slane %v839, 4
      %v846 = vshrl.u32 %v811, 16
      %v848 = vrot.slane %v846, 7
      %v849 = vshll.u32 %v811, 16
      %v851 = vor.u32 %v848, %v849
      %v852 = vrot.slane %v848, 4
      %v854 = vshrl.u32 %v812, 16
      %v856 = vrot.slane %v854, 7
      %v857 = vshll.u32 %v812, 16
      %v859 = vor.u32 %v856, %v857
      %v860 = vsel %vm827, %v852, %v859
      %v861 = vrot.slane %v856, 4
      %v863 = vshrl.u32 %v813, 16
      %v865 = vrot.slane %v863, 7
      %v866 = vshll.u32 %v813, 16
      %v868 = vor.u32 %v865, %v866
      %v869 = vrot.slane %v865, 4
      %v871 = vshrl.u32 %v814, 16
      %v873 = vrot.slane %v871, 7
      %v874 = vshll.u32 %v814, 16
      %v876 = vor.u32 %v873, %v874
      %v877 = vsel %vm827, %v869, %v876
      %v878 = vrot.slane %v873, 4
      %v880 = vshrl.u32 %v815, 16
      %v882 = vrot.slane %v880, 7
      %v883 = vshll.u32 %v815, 16
      %v885 = vor.u32 %v882, %v883
      %v886 = vrot.slane %v882, 4
      %v888 = vshrl.u32 %v816, 16
      %v890 = vrot.slane %v888, 7
      %v891 = vshll.u32 %v816, 16
      %v893 = vor.u32 %v890, %v891
      %v894 = vsel %vm827, %v886, %v893
      %v895 = vrot.slane %v890, 4
      %v897 = vshrl.u32 %v817, 16
      %v899 = vrot.slane %v897, 7
      %v900 = vshll.u32 %v817, 16
      %v902 = vor.u32 %v899, %v900
      %v903 = vrot.slane %v899, 4
      %v905 = vshrl.u32 %v818, 16
      %v907 = vrot.slane %v905, 7
      %v908 = vshll.u32 %v818, 16
      %v910 = vor.u32 %v907, %v908
      %v911 = vsel %vm827, %v903, %v910
      %v912 = vrot.slane %v907, 4
      %v914 = vshrl.u32 %v819, 16
      %v916 = vrot.slane %v914, 7
      %v917 = vshll.u32 %v819, 16
      %v919 = vor.u32 %v916, %v917
      %v920 = vrot.slane %v916, 4
      %v922 = vshrl.u32 %v820, 16
      %v924 = vrot.slane %v922, 7
      %v925 = vshll.u32 %v820, 16
      %v927 = vor.u32 %v924, %v925
      %v928 = vsel %vm827, %v920, %v927
      %v929 = vrot.slane %v924, 4
      %v931 = vshrl.u32 %v821, 16
      %v933 = vrot.slane %v931, 7
      %v934 = vshll.u32 %v821, 16
      %v936 = vor.u32 %v933, %v934
      %v937 = vrot.slane %v933, 4
      %v939 = vshrl.u32 %v822, 16
      %v941 = vrot.slane %v939, 7
      %v942 = vshll.u32 %v822, 16
      %v944 = vor.u32 %v941, %v942
      %v945 = vsel %vm827, %v937, %v944
      %v946 = vrot.slane %v941, 4
      %v948 = vshrl.u32 %v823, 16
      %v950 = vrot.slane %v948, 7
      %v951 = vshll.u32 %v823, 16
      %v953 = vor.u32 %v950, %v951
      %v954 = vrot.slane %v950, 4
      %v956 = vshrl.u32 %v824, 16
      %v958 = vrot.slane %v956, 7
      %v959 = vshll.u32 %v824, 16
      %v961 = vor.u32 %v958, %v959
      %v962 = vsel %vm827, %v954, %v961
      %v963 = vrot.slane %v958, 4
      %s988 = scalar_lea.vmem [#allocation2], 24
      %vm989 = vcmask 1043456
      %vm990 = vsmask.f32 7938
      %vm991 = vmand %vm989, %vm990
      %vm992 = vcmask 1047556
      %vm993 = vsmask.f32 7954
      %vm994 = vmand %vm992, %vm993
      %vm995 = vmor %vm994, %vm991
      %v996 = vld [vmem:[%s988] sm:$0xff]
      %v997 = vsel %vm995, %v834, %v996
      %998 = vst [vmem:[%s988] sm:$0xff] %v997
      %999 = vst [vmem:[%s988 + $0x8] sm:$0xff] %v843
      %vm1000 = vcmask 1040384
      %vm1001 = vmand %vm1000, %vm825
      %vm1002 = vcmask 1044484
      %vm1003 = vsmask.f32 4352
      %vm1004 = vmand %vm1002, %vm1003
      %vm1005 = vmor %vm1004, %vm1001
      %v1006 = vld [vmem:[%s988 + $0x10] sm:$0x11]
      %v1007 = vsel %vm1005, %v844, %v1006
      %1008 = vst [vmem:[%s988 + $0x10] sm:$0x11] %v1007
      %v1009 = vld [vmem:[%s988 + $0x18] sm:$0xff]
      %v1010 = vsel %vm995, %v851, %v1009
      %1011 = vst [vmem:[%s988 + $0x18] sm:$0xff] %v1010
      %1012 = vst [vmem:[%s988 + $0x20] sm:$0xff] %v860
      %v1013 = vld [vmem:[%s988 + $0x28] sm:$0x11]
      %v1014 = vsel %vm1005, %v861, %v1013
      %1015 = vst [vmem:[%s988 + $0x28] sm:$0x11] %v1014
      %v1016 = vld [vmem:[%s988 + $0x30] sm:$0xff]
      %v1017 = vsel %vm995, %v868, %v1016
      %1018 = vst [vmem:[%s988 + $0x30] sm:$0xff] %v1017
      %1019 = vst [vmem:[%s988 + $0x38] sm:$0xff] %v877
      %v1020 = vld [vmem:[%s988 + $0x40] sm:$0x11]
      %v1021 = vsel %vm1005, %v878, %v1020
      %1022 = vst [vmem:[%s988 + $0x40] sm:$0x11] %v1021
      %v1023 = vld [vmem:[%s988 + $0x48] sm:$0xff]
      %v1024 = vsel %vm995, %v885, %v1023
      %1025 = vst [vmem:[%s988 + $0x48] sm:$0xff] %v1024
      %1026 = vst [vmem:[%s988 + $0x50] sm:$0xff] %v894
      %v1027 = vld [vmem:[%s988 + $0x58] sm:$0x11]
      %v1028 = vsel %vm1005, %v895, %v1027
      %1029 = vst [vmem:[%s988 + $0x58] sm:$0x11] %v1028
      %v1030 = vld [vmem:[%s988 + $0x60] sm:$0xff]
      %v1031 = vsel %vm995, %v902, %v1030
      %1032 = vst [vmem:[%s988 + $0x60] sm:$0xff] %v1031
      %1033 = vst [vmem:[%s988 + $0x68] sm:$0xff] %v911
      %v1034 = vld [vmem:[%s988 + $0x70] sm:$0x11]
      %v1035 = vsel %vm1005, %v912, %v1034
      %1036 = vst [vmem:[%s988 + $0x70] sm:$0x11] %v1035
      %v1037 = vld [vmem:[%s988 + $0x78] sm:$0xff]
      %v1038 = vsel %vm995, %v919, %v1037
      %1039 = vst [vmem:[%s988 + $0x78] sm:$0xff] %v1038
      %1040 = vst [vmem:[%s988 + $0x80] sm:$0xff] %v928
      %v1041 = vld [vmem:[%s988 + $0x88] sm:$0x11]
      %v1042 = vsel %vm1005, %v929, %v1041
      %1043 = vst [vmem:[%s988 + $0x88] sm:$0x11] %v1042
      %v1044 = vld [vmem:[%s988 + $0x90] sm:$0xff]
      %v1045 = vsel %vm995, %v936, %v1044
      %1046 = vst [vmem:[%s988 + $0x90] sm:$0xff] %v1045
      %1047 = vst [vmem:[%s988 + $0x98] sm:$0xff] %v945
      %v1048 = vld [vmem:[%s988 + $0xa0] sm:$0x11]
      %v1049 = vsel %vm1005, %v946, %v1048
      %1050 = vst [vmem:[%s988 + $0xa0] sm:$0x11] %v1049
      %v1051 = vld [vmem:[%s988 + $0xa8] sm:$0xff]
      %v1052 = vsel %vm995, %v953, %v1051
      %1053 = vst [vmem:[%s988 + $0xa8] sm:$0xff] %v1052
      %1054 = vst [vmem:[%s988 + $0xb0] sm:$0xff] %v962
      %v1055 = vld [vmem:[%s988 + $0xb8] sm:$0x11]
      %v1056 = vsel %vm1005, %v963, %v1055
      %1057 = vst [vmem:[%s988 + $0xb8] sm:$0x11] %v1056
      %p1058 = scmp.gt.s32.totalorder %s24, 0
      // Predicated region
      $region45: #{upconv_block_forward.4} parent=43 // pred_check
        %p1059 = pneg %p1058
      $region46: #{upconv_block_forward.4} parent=43 // pred_check_branch
        %1061 = sbr.rel (%p1059) target = $region48
      $region47: #{upconv_block_forward.4} parent=43 // pred_region
        %v1062 = vld [vmem:[%s427] sm:$0xff]
        %v1063 = vld [vmem:[%s427 + $0x8] sm:$0xff]
        %v1064 = vunpack.c.l.bf16 %v1062
        %v1065 = vunpack.c.h.bf16 %v1062
        %v1066 = vunpack.c.l.bf16 %v1063
        %v1067 = vunpack.c.h.bf16 %v1063
        %v1068 = vmul.f32 %v1064, %v556
        %v1069 = vmul.f32 %v1065, %v560
        %v1070 = vmul.f32 %v1066, %v556
        %v1071 = vmul.f32 %v1067, %v560
        %v1072 = vadd.f32 %v1068, %v599
        %v1073 = vadd.f32 %v1069, %v603
        %v1074 = vadd.f32 %v1070, %v599
        %v1075 = vadd.f32 %v1071, %v603
        %vm1076 = vcmp.ge.f32.partialorder %v1072, 0.0
        %vm1077 = vcmp.ge.f32.partialorder %v1073, 0.0
        %vm1078 = vcmp.ge.f32.partialorder %v1074, 0.0
        %vm1079 = vcmp.ge.f32.partialorder %v1075, 0.0
        %v1080 = vmul.f32 %v1072, %v674
        %v1081 = vmul.f32 %v1073, %v678
        %v1082 = vmul.f32 %v1074, %v674
        %v1083 = vmul.f32 %v1075, %v678
        %v1084 = vsel %vm1076, %v1072, %v1080
        %v1085 = vsel %vm1077, %v1073, %v1081
        %v1086 = vsel %vm1078, %v1074, %v1082
        %v1087 = vsel %vm1079, %v1075, %v1083
        %v1088 = vpack.c.bf16 %v1086, %v1084
        %v1089 = vpack.c.bf16 %v1087, %v1085
        %v1092 = vunpack.c.l.b16 %v1088
        %v1093 = vunpack.c.l.b16 %v1089
        %v1094 = vunpack.c.h.b16 %v1088
        %v1095 = vunpack.c.h.b16 %v1089
        %v1096 = vpack.c.b16 %v1093, %v1092
        %v1097 = vpack.c.b16 %v1095, %v1094
        %v1099 = vshrl.u32 %v1096, 16
        %v1101 = vrot.slane %v1099, 7
        %v1102 = vshll.u32 %v1096, 16
        %v1104 = vor.u32 %v1101, %v1102
        %v1105 = vrot.slane %v1101, 4
        %v1107 = vshrl.u32 %v1097, 16
        %v1109 = vrot.slane %v1107, 7
        %v1110 = vshll.u32 %v1097, 16
        %v1112 = vor.u32 %v1109, %v1110
        %v1113 = vsel %vm827, %v1105, %v1112
        %v1114 = vrot.slane %v1109, 4
        %v1118 = vld [vmem:[#allocation2] sm:$0xff]
        %v1119 = vsel %vm995, %v1104, %v1118
        %1120 = vst [vmem:[#allocation2] sm:$0xff] %v1119
        %1121 = vst [vmem:[#allocation2 + $0x8] sm:$0xff] %v1113
        %v1122 = vld [vmem:[#allocation2 + $0x10] sm:$0x11]
        %v1123 = vsel %vm1005, %v1114, %v1122
        %1124 = vst [vmem:[#allocation2 + $0x10] sm:$0x11] %v1123
      $region48: #{upconv_block_forward.4} parent=43 // pred_fallthru
        _
      %p1125 = scmp.lt.s32.totalorder %s24, 1
      // Predicated region
      $region49: #{upconv_block_forward.4} parent=43 // pred_check
        %p1126 = pneg %p1125
      $region50: #{upconv_block_forward.4} parent=43 // pred_check_branch
        %1128 = sbr.rel (%p1126) target = $region52
      $region51: #{upconv_block_forward.4} parent=43 // pred_region
        %v1129 = vld [vmem:[%s444] sm:$0xff]
        %v1130 = vld [vmem:[%s444 + $0x8] sm:$0xff]
        %v1131 = vunpack.c.l.bf16 %v1129
        %v1132 = vunpack.c.h.bf16 %v1129
        %v1133 = vunpack.c.l.bf16 %v1130
        %v1134 = vunpack.c.h.bf16 %v1130
        %v1135 = vmul.f32 %v1131, %v556
        %v1136 = vmul.f32 %v1132, %v560
        %v1137 = vmul.f32 %v1133, %v556
        %v1138 = vmul.f32 %v1134, %v560
        %v1139 = vadd.f32 %v1135, %v599
        %v1140 = vadd.f32 %v1136, %v603
        %v1141 = vadd.f32 %v1137, %v599
        %v1142 = vadd.f32 %v1138, %v603
        %vm1143 = vcmp.ge.f32.partialorder %v1139, 0.0
        %vm1144 = vcmp.ge.f32.partialorder %v1140, 0.0
        %vm1145 = vcmp.ge.f32.partialorder %v1141, 0.0
        %vm1146 = vcmp.ge.f32.partialorder %v1142, 0.0
        %v1147 = vmul.f32 %v1139, %v674
        %v1148 = vmul.f32 %v1140, %v678
        %v1149 = vmul.f32 %v1141, %v674
        %v1150 = vmul.f32 %v1142, %v678
        %v1151 = vsel %vm1143, %v1139, %v1147
        %v1152 = vsel %vm1144, %v1140, %v1148
        %v1153 = vsel %vm1145, %v1141, %v1149
        %v1154 = vsel %vm1146, %v1142, %v1150
        %v1155 = vpack.c.bf16 %v1153, %v1151
        %v1156 = vpack.c.bf16 %v1154, %v1152
        %v1159 = vunpack.c.l.b16 %v1155
        %v1160 = vunpack.c.l.b16 %v1156
        %v1161 = vunpack.c.h.b16 %v1155
        %v1162 = vunpack.c.h.b16 %v1156
        %v1163 = vpack.c.b16 %v1160, %v1159
        %v1164 = vpack.c.b16 %v1162, %v1161
        %v1166 = vshrl.u32 %v1163, 16
        %v1168 = vrot.slane %v1166, 7
        %v1169 = vshll.u32 %v1163, 16
        %v1171 = vor.u32 %v1168, %v1169
        %v1172 = vrot.slane %v1168, 4
        %v1174 = vshrl.u32 %v1164, 16
        %v1176 = vrot.slane %v1174, 7
        %v1177 = vshll.u32 %v1164, 16
        %v1179 = vor.u32 %v1176, %v1177
        %v1180 = vsel %vm827, %v1172, %v1179
        %v1181 = vrot.slane %v1176, 4
        %s1185 = scalar_lea.vmem [#allocation2], 216
        %v1186 = vld [vmem:[%s1185] sm:$0xff]
        %v1187 = vsel %vm995, %v1171, %v1186
        %1188 = vst [vmem:[%s1185] sm:$0xff] %v1187
        %1189 = vst [vmem:[%s1185 + $0x8] sm:$0xff] %v1180
        %v1190 = vld [vmem:[%s1185 + $0x10] sm:$0x11]
        %v1191 = vsel %vm1005, %v1181, %v1190
        %1192 = vst [vmem:[%s1185 + $0x10] sm:$0x11] %v1191
      $region52: #{upconv_block_forward.4} parent=43 // pred_fallthru
        _
      %v1193 = vld [vmem:[%s4] sm:$0x1]
      loop: start=0, step=1, limit=8
      $region53: #{upconv_block_forward.4} parent=43 // loop_pre_header
        _
      $region54: #{upconv_block_forward.4} parent=43 // loop_header
        %s1195 = sphi 0, %s1199
        %p1196 = scmp.ge.s32.totalorder %s1195, 8
        %v1200 = vphi 0.0, %v2942
        %v1201 = vphi 0.0, %v2952
      $region55: #{upconv_block_forward.4} parent=43 // loop_header_branch
        %1198 = sbr.rel (%p1196) target = $region59
      $region56: #{upconv_block_forward.4} parent=43 // loop_body
        %s1202 = smul.u32 %s1195, 6
        %s1203 = smul.addr %s1202, 4
        %s1204 = scalar_lea.vmem [#allocation2], %s1203
        %v1205 = vld [vmem:[%s1204] sm:$0xff]
        %v1206 = vld [vmem:[%s1204 + $0x8] sm:$0xff]
        %v1207 = vld [vmem:[%s1204 + $0x10] sm:$0x11]
        %v1208 = vld [vmem:[%s3] sm:$0xf]
        %v1209 = vld [vmem:[%s3 + $0x4] sm:$0xf]
        %v1210 = vld [vmem:[%s3 + $0x8] sm:$0xf]
        %v1211 = vld [vmem:[%s3 + $0xc] sm:$0xf]
        %v1212 = vld [vmem:[%s3 + $0x10] sm:$0xf]
        %v1213 = vld [vmem:[%s3 + $0x14] sm:$0xf]
        %v1214 = vld [vmem:[%s3 + $0x18] sm:$0xf]
        %v1215 = vld [vmem:[%s3 + $0x1c] sm:$0xf]
        %v1216 = vld [vmem:[%s3 + $0x20] sm:$0xf]
        %v1217 = vld [vmem:[%s3 + $0x24] sm:$0xf]
        %v1218 = vld [vmem:[%s3 + $0x28] sm:$0xf]
        %v1219 = vld [vmem:[%s3 + $0x2c] sm:$0xf]
        %v1220 = vld [vmem:[%s3 + $0x30] sm:$0xf]
        %v1221 = vld [vmem:[%s3 + $0x34] sm:$0xf]
        %v1222 = vld [vmem:[%s3 + $0x38] sm:$0xf]
        %v1223 = vld [vmem:[%s3 + $0x3c] sm:$0xf]
        %v1224 = vld [vmem:[%s3 + $0x40] sm:$0xf]
        %v1225 = vld [vmem:[%s3 + $0x44] sm:$0xf]
        %v1226 = vld [vmem:[%s3 + $0x48] sm:$0xf]
        %v1227 = vld [vmem:[%s3 + $0x4c] sm:$0xf]
        %v1228 = vld [vmem:[%s3 + $0x50] sm:$0xf]
        %v1229 = vld [vmem:[%s3 + $0x54] sm:$0xf]
        %v1230 = vld [vmem:[%s3 + $0x58] sm:$0xf]
        %v1231 = vld [vmem:[%s3 + $0x5c] sm:$0xf]
        %v1232 = vld [vmem:[%s3 + $0x60] sm:$0xf]
        %v1233 = vld [vmem:[%s3 + $0x64] sm:$0xf]
        %v1234 = vld [vmem:[%s3 + $0x68] sm:$0xf]
        %v1235 = vld [vmem:[%s3 + $0x6c] sm:$0xf]
        %v1236 = vld [vmem:[%s3 + $0x70] sm:$0xf]
        %v1237 = vld [vmem:[%s3 + $0x74] sm:$0xf]
        %v1238 = vld [vmem:[%s3 + $0x78] sm:$0xf]
        %v1239 = vld [vmem:[%s3 + $0x7c] sm:$0xf]
        %s1240 = scalar_lea.vmem %s3, 128
        %v1241 = vld [vmem:[%s1240] sm:$0xf]
        %v1242 = vld [vmem:[%s1240 + $0x4] sm:$0xf]
        %v1243 = vld [vmem:[%s1240 + $0x8] sm:$0xf]
        %v1244 = vld [vmem:[%s1240 + $0xc] sm:$0xf]
        %v1245 = vld [vmem:[%s1240 + $0x10] sm:$0xf]
        %v1246 = vld [vmem:[%s1240 + $0x14] sm:$0xf]
        %v1247 = vld [vmem:[%s1240 + $0x18] sm:$0xf]
        %v1248 = vld [vmem:[%s1240 + $0x1c] sm:$0xf]
        %v1249 = vld [vmem:[%s1240 + $0x20] sm:$0xf]
        %v1250 = vld [vmem:[%s1240 + $0x24] sm:$0xf]
        %v1251 = vld [vmem:[%s1240 + $0x28] sm:$0xf]
        %v1252 = vld [vmem:[%s1240 + $0x2c] sm:$0xf]
        %v1253 = vld [vmem:[%s1240 + $0x30] sm:$0xf]
        %v1254 = vld [vmem:[%s1240 + $0x34] sm:$0xf]
        %v1255 = vld [vmem:[%s1240 + $0x38] sm:$0xf]
        %v1256 = vld [vmem:[%s1240 + $0x3c] sm:$0xf]
        %v1257 = vld [vmem:[%s1240 + $0x40] sm:$0xf]
        %v1258 = vld [vmem:[%s1240 + $0x44] sm:$0xf]
        %v1259 = vld [vmem:[%s1240 + $0x48] sm:$0xf]
        %v1260 = vld [vmem:[%s1240 + $0x4c] sm:$0xf]
        %v1261 = vld [vmem:[%s1240 + $0x50] sm:$0xf]
        %v1262 = vld [vmem:[%s1240 + $0x54] sm:$0xf]
        %v1263 = vld [vmem:[%s1240 + $0x58] sm:$0xf]
        %v1264 = vld [vmem:[%s1240 + $0x5c] sm:$0xf]
        %v1265 = vld [vmem:[%s1240 + $0x60] sm:$0xf]
        %v1266 = vld [vmem:[%s1240 + $0x64] sm:$0xf]
        %v1267 = vld [vmem:[%s1240 + $0x68] sm:$0xf]
        %v1268 = vld [vmem:[%s1240 + $0x6c] sm:$0xf]
        %v1269 = vld [vmem:[%s1240 + $0x70] sm:$0xf]
        %v1270 = vld [vmem:[%s1240 + $0x74] sm:$0xf]
        %v1271 = vld [vmem:[%s1240 + $0x78] sm:$0xf]
        %v1272 = vld [vmem:[%s1240 + $0x7c] sm:$0xf]
        %v1276 = vunpack.c.l.b16 %v1205
        %v1277 = vunpack.c.h.b16 %v1205
        %v1278 = vunpack.c.l.b16 %v1206
        %v1279 = vunpack.c.h.b16 %v1206
        %v1280 = vunpack.c.l.b16 %v1207
        %v1281 = vunpack.c.h.b16 %v1207
        %v1282 = vpack.c.b16 %v1278, %v1276
        %v1283 = vpack.c.b16 %v1279, %v1277
        %v1284 = vpack.c.b16 %v1280, %v1280
        %v1285 = vpack.c.b16 %v1281, %v1281
        %vm1286 = vsmask.f32 7424
        %v1288 = vshrl.u32 %v1282, 16
        %v1290 = vshll.u32 %v1282, 16
        %v1292 = vrot.slane %v1290, 1
        %v1293 = vor.u32 %v1288, %v1292
        %v1295 = vshll.u32 %v1284, 16
        %v1297 = vrot.slane %v1295, 1
        %v1298 = vsel %vm1286, %v1293, %v1297
        %v1300 = vshrl.u32 %v1283, 16
        %v1302 = vshll.u32 %v1283, 16
        %v1304 = vrot.slane %v1302, 1
        %v1305 = vor.u32 %v1300, %v1304
        %v1307 = vshll.u32 %v1285, 16
        %v1309 = vrot.slane %v1307, 1
        %v1310 = vsel %vm1286, %v1305, %v1309
        %v1345 = vunpack.c.l.b16 %v1241
        %v1346 = vunpack.c.l.b16 %v1242
        %v1347 = vunpack.c.l.b16 %v1243
        %v1348 = vunpack.c.l.b16 %v1244
        %v1349 = vunpack.c.l.b16 %v1245
        %v1350 = vunpack.c.l.b16 %v1246
        %v1351 = vunpack.c.l.b16 %v1247
        %v1352 = vunpack.c.l.b16 %v1248
        %v1353 = vunpack.c.l.b16 %v1249
        %v1354 = vunpack.c.l.b16 %v1250
        %v1355 = vunpack.c.l.b16 %v1251
        %v1356 = vunpack.c.l.b16 %v1252
        %v1357 = vunpack.c.l.b16 %v1253
        %v1358 = vunpack.c.l.b16 %v1254
        %v1359 = vunpack.c.l.b16 %v1255
        %v1360 = vunpack.c.l.b16 %v1256
        %v1361 = vunpack.c.l.b16 %v1257
        %v1362 = vunpack.c.l.b16 %v1258
        %v1363 = vunpack.c.l.b16 %v1259
        %v1364 = vunpack.c.l.b16 %v1260
        %v1365 = vunpack.c.l.b16 %v1261
        %v1366 = vunpack.c.l.b16 %v1262
        %v1367 = vunpack.c.l.b16 %v1263
        %v1368 = vunpack.c.l.b16 %v1264
        %v1369 = vunpack.c.l.b16 %v1265
        %v1370 = vunpack.c.l.b16 %v1266
        %v1371 = vunpack.c.l.b16 %v1267
        %v1372 = vunpack.c.l.b16 %v1268
        %v1373 = vunpack.c.l.b16 %v1269
        %v1374 = vunpack.c.l.b16 %v1270
        %v1375 = vunpack.c.l.b16 %v1271
        %v1376 = vunpack.c.l.b16 %v1272
        %v1377 = vpack.c.b16 %v1346, %v1345
        %v1378 = vpack.c.b16 %v1348, %v1347
        %v1379 = vpack.c.b16 %v1350, %v1349
        %v1380 = vpack.c.b16 %v1352, %v1351
        %v1381 = vpack.c.b16 %v1354, %v1353
        %v1382 = vpack.c.b16 %v1356, %v1355
        %v1383 = vpack.c.b16 %v1358, %v1357
        %v1384 = vpack.c.b16 %v1360, %v1359
        %v1385 = vpack.c.b16 %v1362, %v1361
        %v1386 = vpack.c.b16 %v1364, %v1363
        %v1387 = vpack.c.b16 %v1366, %v1365
        %v1388 = vpack.c.b16 %v1368, %v1367
        %v1389 = vpack.c.b16 %v1370, %v1369
        %v1390 = vpack.c.b16 %v1372, %v1371
        %v1391 = vpack.c.b16 %v1374, %v1373
        %v1392 = vpack.c.b16 %v1376, %v1375
        %1409 = vmatprep.subr.bf16.mxu0 0
        %1410 = vmatpush1.bf16.msra.mxu0 %v1377
        %1411 = vmatprep.subr.bf16.mxu0 0
        %1412 = vmatpush1.bf16.msra.mxu0 %v1378
        %1413 = vmatprep.subr.bf16.mxu0 0
        %1414 = vmatpush1.bf16.msra.mxu0 %v1379
        %1415 = vmatprep.subr.bf16.mxu0 0
        %1416 = vmatpush1.bf16.msra.mxu0 %v1380
        %1417 = vmatprep.subr.bf16.mxu0 0
        %1418 = vmatpush1.bf16.msra.mxu0 %v1381
        %1419 = vmatprep.subr.bf16.mxu0 0
        %1420 = vmatpush1.bf16.msra.mxu0 %v1382
        %1421 = vmatprep.subr.bf16.mxu0 0
        %1422 = vmatpush1.bf16.msra.mxu0 %v1383
        %1423 = vmatprep.subr.bf16.mxu0 0
        %1424 = vmatpush1.bf16.msra.mxu0 %v1384
        %1425 = vmatprep.subr.bf16.mxu0 0
        %1426 = vmatpush1.bf16.msra.mxu0 %v1385
        %1427 = vmatprep.subr.bf16.mxu0 0
        %1428 = vmatpush1.bf16.msra.mxu0 %v1386
        %1429 = vmatprep.subr.bf16.mxu0 0
        %1430 = vmatpush1.bf16.msra.mxu0 %v1387
        %1431 = vmatprep.subr.bf16.mxu0 0
        %1432 = vmatpush1.bf16.msra.mxu0 %v1388
        %1433 = vmatprep.subr.bf16.mxu0 0
        %1434 = vmatpush1.bf16.msra.mxu0 %v1389
        %1435 = vmatprep.subr.bf16.mxu0 0
        %1436 = vmatpush1.bf16.msra.mxu0 %v1390
        %1437 = vmatprep.subr.bf16.mxu0 0
        %1438 = vmatpush1.bf16.msra.mxu0 %v1391
        %1439 = vmatprep.subr.bf16.mxu0 0
        %1440 = vmatpush1.bf16.msra.mxu0 %v1392
        %1441 = vmatprep.mubr.bf16.mxu0 %v1310
        %1442 = vmatmul.mubr.bf16.gmra.mrb[0].mxu0 %v1298
        %v1443 = vpop.f32.mrb[0].mxu0
        %v1444 = vadd.f32 0.0, %v1443
        %v1445 = vpop.f32.mrb[0].mxu0
        %v1446 = vpop.f32.mrb[0].mxu0
        %v1447 = vadd.f32 0.0, %v1446
        %v1448 = vpop.f32.mrb[0].mxu0
        %1449 = vdwg.mxu0
        %v1484 = vunpack.c.l.b16 %v1208
        %v1485 = vunpack.c.l.b16 %v1209
        %v1486 = vunpack.c.l.b16 %v1210
        %v1487 = vunpack.c.l.b16 %v1211
        %v1488 = vunpack.c.l.b16 %v1212
        %v1489 = vunpack.c.l.b16 %v1213
        %v1490 = vunpack.c.l.b16 %v1214
        %v1491 = vunpack.c.l.b16 %v1215
        %v1492 = vunpack.c.l.b16 %v1216
        %v1493 = vunpack.c.l.b16 %v1217
        %v1494 = vunpack.c.l.b16 %v1218
        %v1495 = vunpack.c.l.b16 %v1219
        %v1496 = vunpack.c.l.b16 %v1220
        %v1497 = vunpack.c.l.b16 %v1221
        %v1498 = vunpack.c.l.b16 %v1222
        %v1499 = vunpack.c.l.b16 %v1223
        %v1500 = vunpack.c.l.b16 %v1224
        %v1501 = vunpack.c.l.b16 %v1225
        %v1502 = vunpack.c.l.b16 %v1226
        %v1503 = vunpack.c.l.b16 %v1227
        %v1504 = vunpack.c.l.b16 %v1228
        %v1505 = vunpack.c.l.b16 %v1229
        %v1506 = vunpack.c.l.b16 %v1230
        %v1507 = vunpack.c.l.b16 %v1231
        %v1508 = vunpack.c.l.b16 %v1232
        %v1509 = vunpack.c.l.b16 %v1233
        %v1510 = vunpack.c.l.b16 %v1234
        %v1511 = vunpack.c.l.b16 %v1235
        %v1512 = vunpack.c.l.b16 %v1236
        %v1513 = vunpack.c.l.b16 %v1237
        %v1514 = vunpack.c.l.b16 %v1238
        %v1515 = vunpack.c.l.b16 %v1239
        %v1516 = vpack.c.b16 %v1485, %v1484
        %v1517 = vpack.c.b16 %v1487, %v1486
        %v1518 = vpack.c.b16 %v1489, %v1488
        %v1519 = vpack.c.b16 %v1491, %v1490
        %v1520 = vpack.c.b16 %v1493, %v1492
        %v1521 = vpack.c.b16 %v1495, %v1494
        %v1522 = vpack.c.b16 %v1497, %v1496
        %v1523 = vpack.c.b16 %v1499, %v1498
        %v1524 = vpack.c.b16 %v1501, %v1500
        %v1525 = vpack.c.b16 %v1503, %v1502
        %v1526 = vpack.c.b16 %v1505, %v1504
        %v1527 = vpack.c.b16 %v1507, %v1506
        %v1528 = vpack.c.b16 %v1509, %v1508
        %v1529 = vpack.c.b16 %v1511, %v1510
        %v1530 = vpack.c.b16 %v1513, %v1512
        %v1531 = vpack.c.b16 %v1515, %v1514
        %1548 = vmatprep.subr.bf16.mxu0 0
        %1549 = vmatpush1.bf16.msra.mxu0 %v1516
        %1550 = vmatprep.subr.bf16.mxu0 0
        %1551 = vmatpush1.bf16.msra.mxu0 %v1517
        %1552 = vmatprep.subr.bf16.mxu0 0
        %1553 = vmatpush1.bf16.msra.mxu0 %v1518
        %1554 = vmatprep.subr.bf16.mxu0 0
        %1555 = vmatpush1.bf16.msra.mxu0 %v1519
        %1556 = vmatprep.subr.bf16.mxu0 0
        %1557 = vmatpush1.bf16.msra.mxu0 %v1520
        %1558 = vmatprep.subr.bf16.mxu0 0
        %1559 = vmatpush1.bf16.msra.mxu0 %v1521
        %1560 = vmatprep.subr.bf16.mxu0 0
        %1561 = vmatpush1.bf16.msra.mxu0 %v1522
        %1562 = vmatprep.subr.bf16.mxu0 0
        %1563 = vmatpush1.bf16.msra.mxu0 %v1523
        %1564 = vmatprep.subr.bf16.mxu0 0
        %1565 = vmatpush1.bf16.msra.mxu0 %v1524
        %1566 = vmatprep.subr.bf16.mxu0 0
        %1567 = vmatpush1.bf16.msra.mxu0 %v1525
        %1568 = vmatprep.subr.bf16.mxu0 0
        %1569 = vmatpush1.bf16.msra.mxu0 %v1526
        %1570 = vmatprep.subr.bf16.mxu0 0
        %1571 = vmatpush1.bf16.msra.mxu0 %v1527
        %1572 = vmatprep.subr.bf16.mxu0 0
        %1573 = vmatpush1.bf16.msra.mxu0 %v1528
        %1574 = vmatprep.subr.bf16.mxu0 0
        %1575 = vmatpush1.bf16.msra.mxu0 %v1529
        %1576 = vmatprep.subr.bf16.mxu0 0
        %1577 = vmatpush1.bf16.msra.mxu0 %v1530
        %1578 = vmatprep.subr.bf16.mxu0 0
        %1579 = vmatpush1.bf16.msra.mxu0 %v1531
        %1580 = vmatprep.mubr.bf16.mxu0 %v1283
        %1581 = vmatmul.mubr.bf16.gmra.mrb[0].mxu0 %v1282
        %v1582 = vpop.f32.mrb[0].mxu0
        %v1583 = vadd.f32 %v1444, %v1582
        %v1584 = vpop.f32.mrb[0].mxu0
        %v1585 = vpop.f32.mrb[0].mxu0
        %v1586 = vadd.f32 %v1447, %v1585
        %v1587 = vpop.f32.mrb[0].mxu0
        %1588 = vdwg.mxu0
        %s1589 = scalar_lea.vmem %s3, 256
        %v1590 = vld [vmem:[%s1589] sm:$0xf]
        %v1591 = vld [vmem:[%s1589 + $0x4] sm:$0xf]
        %v1592 = vld [vmem:[%s1589 + $0x8] sm:$0xf]
        %v1593 = vld [vmem:[%s1589 + $0xc] sm:$0xf]
        %v1594 = vld [vmem:[%s1589 + $0x10] sm:$0xf]
        %v1595 = vld [vmem:[%s1589 + $0x14] sm:$0xf]
        %v1596 = vld [vmem:[%s1589 + $0x18] sm:$0xf]
        %v1597 = vld [vmem:[%s1589 + $0x1c] sm:$0xf]
        %v1598 = vld [vmem:[%s1589 + $0x20] sm:$0xf]
        %v1599 = vld [vmem:[%s1589 + $0x24] sm:$0xf]
        %v1600 = vld [vmem:[%s1589 + $0x28] sm:$0xf]
        %v1601 = vld [vmem:[%s1589 + $0x2c] sm:$0xf]
        %v1602 = vld [vmem:[%s1589 + $0x30] sm:$0xf]
        %v1603 = vld [vmem:[%s1589 + $0x34] sm:$0xf]
        %v1604 = vld [vmem:[%s1589 + $0x38] sm:$0xf]
        %v1605 = vld [vmem:[%s1589 + $0x3c] sm:$0xf]
        %v1606 = vld [vmem:[%s1589 + $0x40] sm:$0xf]
        %v1607 = vld [vmem:[%s1589 + $0x44] sm:$0xf]
        %v1608 = vld [vmem:[%s1589 + $0x48] sm:$0xf]
        %v1609 = vld [vmem:[%s1589 + $0x4c] sm:$0xf]
        %v1610 = vld [vmem:[%s1589 + $0x50] sm:$0xf]
        %v1611 = vld [vmem:[%s1589 + $0x54] sm:$0xf]
        %v1612 = vld [vmem:[%s1589 + $0x58] sm:$0xf]
        %v1613 = vld [vmem:[%s1589 + $0x5c] sm:$0xf]
        %v1614 = vld [vmem:[%s1589 + $0x60] sm:$0xf]
        %v1615 = vld [vmem:[%s1589 + $0x64] sm:$0xf]
        %v1616 = vld [vmem:[%s1589 + $0x68] sm:$0xf]
        %v1617 = vld [vmem:[%s1589 + $0x6c] sm:$0xf]
        %v1618 = vld [vmem:[%s1589 + $0x70] sm:$0xf]
        %v1619 = vld [vmem:[%s1589 + $0x74] sm:$0xf]
        %v1620 = vld [vmem:[%s1589 + $0x78] sm:$0xf]
        %v1621 = vld [vmem:[%s1589 + $0x7c] sm:$0xf]
        %vm1622 = vcmask 1046528
        %v1623 = vrot.slane %v1282, 1
        %v1624 = vrot.slane %v1284, 1
        %v1625 = vsel %vm1622, %v1623, %v1624
        %v1626 = vrot.slane %v1283, 1
        %v1627 = vrot.slane %v1285, 1
        %v1628 = vsel %vm1622, %v1626, %v1627
        %v1663 = vunpack.c.l.b16 %v1590
        %v1664 = vunpack.c.l.b16 %v1591
        %v1665 = vunpack.c.l.b16 %v1592
        %v1666 = vunpack.c.l.b16 %v1593
        %v1667 = vunpack.c.l.b16 %v1594
        %v1668 = vunpack.c.l.b16 %v1595
        %v1669 = vunpack.c.l.b16 %v1596
        %v1670 = vunpack.c.l.b16 %v1597
        %v1671 = vunpack.c.l.b16 %v1598
        %v1672 = vunpack.c.l.b16 %v1599
        %v1673 = vunpack.c.l.b16 %v1600
        %v1674 = vunpack.c.l.b16 %v1601
        %v1675 = vunpack.c.l.b16 %v1602
        %v1676 = vunpack.c.l.b16 %v1603
        %v1677 = vunpack.c.l.b16 %v1604
        %v1678 = vunpack.c.l.b16 %v1605
        %v1679 = vunpack.c.l.b16 %v1606
        %v1680 = vunpack.c.l.b16 %v1607
        %v1681 = vunpack.c.l.b16 %v1608
        %v1682 = vunpack.c.l.b16 %v1609
        %v1683 = vunpack.c.l.b16 %v1610
        %v1684 = vunpack.c.l.b16 %v1611
        %v1685 = vunpack.c.l.b16 %v1612
        %v1686 = vunpack.c.l.b16 %v1613
        %v1687 = vunpack.c.l.b16 %v1614
        %v1688 = vunpack.c.l.b16 %v1615
        %v1689 = vunpack.c.l.b16 %v1616
        %v1690 = vunpack.c.l.b16 %v1617
        %v1691 = vunpack.c.l.b16 %v1618
        %v1692 = vunpack.c.l.b16 %v1619
        %v1693 = vunpack.c.l.b16 %v1620
        %v1694 = vunpack.c.l.b16 %v1621
        %v1695 = vpack.c.b16 %v1664, %v1663
        %v1696 = vpack.c.b16 %v1666, %v1665
        %v1697 = vpack.c.b16 %v1668, %v1667
        %v1698 = vpack.c.b16 %v1670, %v1669
        %v1699 = vpack.c.b16 %v1672, %v1671
        %v1700 = vpack.c.b16 %v1674, %v1673
        %v1701 = vpack.c.b16 %v1676, %v1675
        %v1702 = vpack.c.b16 %v1678, %v1677
        %v1703 = vpack.c.b16 %v1680, %v1679
        %v1704 = vpack.c.b16 %v1682, %v1681
        %v1705 = vpack.c.b16 %v1684, %v1683
        %v1706 = vpack.c.b16 %v1686, %v1685
        %v1707 = vpack.c.b16 %v1688, %v1687
        %v1708 = vpack.c.b16 %v1690, %v1689
        %v1709 = vpack.c.b16 %v1692, %v1691
        %v1710 = vpack.c.b16 %v1694, %v1693
        %1727 = vmatprep.subr.bf16.mxu0 0
        %1728 = vmatpush1.bf16.msra.mxu0 %v1695
        %1729 = vmatprep.subr.bf16.mxu0 0
        %1730 = vmatpush1.bf16.msra.mxu0 %v1696
        %1731 = vmatprep.subr.bf16.mxu0 0
        %1732 = vmatpush1.bf16.msra.mxu0 %v1697
        %1733 = vmatprep.subr.bf16.mxu0 0
        %1734 = vmatpush1.bf16.msra.mxu0 %v1698
        %1735 = vmatprep.subr.bf16.mxu0 0
        %1736 = vmatpush1.bf16.msra.mxu0 %v1699
        %1737 = vmatprep.subr.bf16.mxu0 0
        %1738 = vmatpush1.bf16.msra.mxu0 %v1700
        %1739 = vmatprep.subr.bf16.mxu0 0
        %1740 = vmatpush1.bf16.msra.mxu0 %v1701
        %1741 = vmatprep.subr.bf16.mxu0 0
        %1742 = vmatpush1.bf16.msra.mxu0 %v1702
        %1743 = vmatprep.subr.bf16.mxu0 0
        %1744 = vmatpush1.bf16.msra.mxu0 %v1703
        %1745 = vmatprep.subr.bf16.mxu0 0
        %1746 = vmatpush1.bf16.msra.mxu0 %v1704
        %1747 = vmatprep.subr.bf16.mxu0 0
        %1748 = vmatpush1.bf16.msra.mxu0 %v1705
        %1749 = vmatprep.subr.bf16.mxu0 0
        %1750 = vmatpush1.bf16.msra.mxu0 %v1706
        %1751 = vmatprep.subr.bf16.mxu0 0
        %1752 = vmatpush1.bf16.msra.mxu0 %v1707
        %1753 = vmatprep.subr.bf16.mxu0 0
        %1754 = vmatpush1.bf16.msra.mxu0 %v1708
        %1755 = vmatprep.subr.bf16.mxu0 0
        %1756 = vmatpush1.bf16.msra.mxu0 %v1709
        %1757 = vmatprep.subr.bf16.mxu0 0
        %1758 = vmatpush1.bf16.msra.mxu0 %v1710
        %1759 = vmatprep.mubr.bf16.mxu0 %v1628
        %1760 = vmatmul.mubr.bf16.gmra.mrb[0].mxu0 %v1625
        %v1761 = vpop.f32.mrb[0].mxu0
        %v1762 = vadd.f32 0.0, %v1761
        %v1763 = vpop.f32.mrb[0].mxu0
        %v1764 = vpop.f32.mrb[0].mxu0
        %v1765 = vadd.f32 0.0, %v1764
        %v1766 = vpop.f32.mrb[0].mxu0
        %1767 = vdwg.mxu0
        %v1768 = vadd.f32 %v1583, %v1762
        %v1769 = vadd.f32 %v1586, %v1765
        %s1770 = sadd.s32 %s1195, 1
        %s1771 = smul.u32 %s1770, 6
        %s1772 = smul.addr %s1771, 4
        %s1773 = scalar_lea.vmem [#allocation2], %s1772
        %v1774 = vld [vmem:[%s1773] sm:$0xff]
        %v1775 = vld [vmem:[%s1773 + $0x8] sm:$0xff]
        %v1776 = vld [vmem:[%s1773 + $0x10] sm:$0x11]
        %s1777 = scalar_lea.vmem %s3, 384
        %v1778 = vld [vmem:[%s1777] sm:$0xf]
        %v1779 = vld [vmem:[%s1777 + $0x4] sm:$0xf]
        %v1780 = vld [vmem:[%s1777 + $0x8] sm:$0xf]
        %v1781 = vld [vmem:[%s1777 + $0xc] sm:$0xf]
        %v1782 = vld [vmem:[%s1777 + $0x10] sm:$0xf]
        %v1783 = vld [vmem:[%s1777 + $0x14] sm:$0xf]
        %v1784 = vld [vmem:[%s1777 + $0x18] sm:$0xf]
        %v1785 = vld [vmem:[%s1777 + $0x1c] sm:$0xf]
        %v1786 = vld [vmem:[%s1777 + $0x20] sm:$0xf]
        %v1787 = vld [vmem:[%s1777 + $0x24] sm:$0xf]
        %v1788 = vld [vmem:[%s1777 + $0x28] sm:$0xf]
        %v1789 = vld [vmem:[%s1777 + $0x2c] sm:$0xf]
        %v1790 = vld [vmem:[%s1777 + $0x30] sm:$0xf]
        %v1791 = vld [vmem:[%s1777 + $0x34] sm:$0xf]
        %v1792 = vld [vmem:[%s1777 + $0x38] sm:$0xf]
        %v1793 = vld [vmem:[%s1777 + $0x3c] sm:$0xf]
        %v1794 = vld [vmem:[%s1777 + $0x40] sm:$0xf]
        %v1795 = vld [vmem:[%s1777 + $0x44] sm:$0xf]
        %v1796 = vld [vmem:[%s1777 + $0x48] sm:$0xf]
        %v1797 = vld [vmem:[%s1777 + $0x4c] sm:$0xf]
        %v1798 = vld [vmem:[%s1777 + $0x50] sm:$0xf]
        %v1799 = vld [vmem:[%s1777 + $0x54] sm:$0xf]
        %v1800 = vld [vmem:[%s1777 + $0x58] sm:$0xf]
        %v1801 = vld [vmem:[%s1777 + $0x5c] sm:$0xf]
        %v1802 = vld [vmem:[%s1777 + $0x60] sm:$0xf]
        %v1803 = vld [vmem:[%s1777 + $0x64] sm:$0xf]
        %v1804 = vld [vmem:[%s1777 + $0x68] sm:$0xf]
        %v1805 = vld [vmem:[%s1777 + $0x6c] sm:$0xf]
        %v1806 = vld [vmem:[%s1777 + $0x70] sm:$0xf]
        %v1807 = vld [vmem:[%s1777 + $0x74] sm:$0xf]
        %v1808 = vld [vmem:[%s1777 + $0x78] sm:$0xf]
        %v1809 = vld [vmem:[%s1777 + $0x7c] sm:$0xf]
        %v1812 = vunpack.c.l.b16 %v1774
        %v1813 = vunpack.c.h.b16 %v1774
        %v1814 = vunpack.c.l.b16 %v1775
        %v1815 = vunpack.c.h.b16 %v1775
        %v1816 = vpack.c.b16 %v1814, %v1812
        %v1817 = vpack.c.b16 %v1815, %v1813
        %v1852 = vunpack.c.l.b16 %v1778
        %v1853 = vunpack.c.l.b16 %v1779
        %v1854 = vunpack.c.l.b16 %v1780
        %v1855 = vunpack.c.l.b16 %v1781
        %v1856 = vunpack.c.l.b16 %v1782
        %v1857 = vunpack.c.l.b16 %v1783
        %v1858 = vunpack.c.l.b16 %v1784
        %v1859 = vunpack.c.l.b16 %v1785
        %v1860 = vunpack.c.l.b16 %v1786
        %v1861 = vunpack.c.l.b16 %v1787
        %v1862 = vunpack.c.l.b16 %v1788
        %v1863 = vunpack.c.l.b16 %v1789
        %v1864 = vunpack.c.l.b16 %v1790
        %v1865 = vunpack.c.l.b16 %v1791
        %v1866 = vunpack.c.l.b16 %v1792
        %v1867 = vunpack.c.l.b16 %v1793
        %v1868 = vunpack.c.l.b16 %v1794
        %v1869 = vunpack.c.l.b16 %v1795
        %v1870 = vunpack.c.l.b16 %v1796
        %v1871 = vunpack.c.l.b16 %v1797
        %v1872 = vunpack.c.l.b16 %v1798
        %v1873 = vunpack.c.l.b16 %v1799
        %v1874 = vunpack.c.l.b16 %v1800
        %v1875 = vunpack.c.l.b16 %v1801
        %v1876 = vunpack.c.l.b16 %v1802
        %v1877 = vunpack.c.l.b16 %v1803
        %v1878 = vunpack.c.l.b16 %v1804
        %v1879 = vunpack.c.l.b16 %v1805
        %v1880 = vunpack.c.l.b16 %v1806
        %v1881 = vunpack.c.l.b16 %v1807
        %v1882 = vunpack.c.l.b16 %v1808
        %v1883 = vunpack.c.l.b16 %v1809
        %v1884 = vpack.c.b16 %v1853, %v1852
        %v1885 = vpack.c.b16 %v1855, %v1854
        %v1886 = vpack.c.b16 %v1857, %v1856
        %v1887 = vpack.c.b16 %v1859, %v1858
        %v1888 = vpack.c.b16 %v1861, %v1860
        %v1889 = vpack.c.b16 %v1863, %v1862
        %v1890 = vpack.c.b16 %v1865, %v1864
        %v1891 = vpack.c.b16 %v1867, %v1866
        %v1892 = vpack.c.b16 %v1869, %v1868
        %v1893 = vpack.c.b16 %v1871, %v1870
        %v1894 = vpack.c.b16 %v1873, %v1872
        %v1895 = vpack.c.b16 %v1875, %v1874
        %v1896 = vpack.c.b16 %v1877, %v1876
        %v1897 = vpack.c.b16 %v1879, %v1878
        %v1898 = vpack.c.b16 %v1881, %v1880
        %v1899 = vpack.c.b16 %v1883, %v1882
        %1916 = vmatprep.subr.bf16.mxu0 0
        %1917 = vmatpush1.bf16.msra.mxu0 %v1884
        %1918 = vmatprep.subr.bf16.mxu0 0
        %1919 = vmatpush1.bf16.msra.mxu0 %v1885
        %1920 = vmatprep.subr.bf16.mxu0 0
        %1921 = vmatpush1.bf16.msra.mxu0 %v1886
        %1922 = vmatprep.subr.bf16.mxu0 0
        %1923 = vmatpush1.bf16.msra.mxu0 %v1887
        %1924 = vmatprep.subr.bf16.mxu0 0
        %1925 = vmatpush1.bf16.msra.mxu0 %v1888
        %1926 = vmatprep.subr.bf16.mxu0 0
        %1927 = vmatpush1.bf16.msra.mxu0 %v1889
        %1928 = vmatprep.subr.bf16.mxu0 0
        %1929 = vmatpush1.bf16.msra.mxu0 %v1890
        %1930 = vmatprep.subr.bf16.mxu0 0
        %1931 = vmatpush1.bf16.msra.mxu0 %v1891
        %1932 = vmatprep.subr.bf16.mxu0 0
        %1933 = vmatpush1.bf16.msra.mxu0 %v1892
        %1934 = vmatprep.subr.bf16.mxu0 0
        %1935 = vmatpush1.bf16.msra.mxu0 %v1893
        %1936 = vmatprep.subr.bf16.mxu0 0
        %1937 = vmatpush1.bf16.msra.mxu0 %v1894
        %1938 = vmatprep.subr.bf16.mxu0 0
        %1939 = vmatpush1.bf16.msra.mxu0 %v1895
        %1940 = vmatprep.subr.bf16.mxu0 0
        %1941 = vmatpush1.bf16.msra.mxu0 %v1896
        %1942 = vmatprep.subr.bf16.mxu0 0
        %1943 = vmatpush1.bf16.msra.mxu0 %v1897
        %1944 = vmatprep.subr.bf16.mxu0 0
        %1945 = vmatpush1.bf16.msra.mxu0 %v1898
        %1946 = vmatprep.subr.bf16.mxu0 0
        %1947 = vmatpush1.bf16.msra.mxu0 %v1899
        %1948 = vmatprep.mubr.bf16.mxu0 %v1817
        %1949 = vmatmul.mubr.bf16.gmra.mrb[0].mxu0 %v1816
        %v1950 = vpop.f32.mrb[0].mxu0
        %v1951 = vadd.f32 0.0, %v1950
        %v1952 = vpop.f32.mrb[0].mxu0
        %v1953 = vpop.f32.mrb[0].mxu0
        %v1954 = vadd.f32 0.0, %v1953
        %v1955 = vpop.f32.mrb[0].mxu0
        %1956 = vdwg.mxu0
        %v1957 = vadd.f32 %v1768, %v1951
        %v1958 = vadd.f32 %v1769, %v1954
        %s1959 = scalar_lea.vmem %s3, 512
        %v1960 = vld [vmem:[%s1959] sm:$0xf]
        %v1961 = vld [vmem:[%s1959 + $0x4] sm:$0xf]
        %v1962 = vld [vmem:[%s1959 + $0x8] sm:$0xf]
        %v1963 = vld [vmem:[%s1959 + $0xc] sm:$0xf]
        %v1964 = vld [vmem:[%s1959 + $0x10] sm:$0xf]
        %v1965 = vld [vmem:[%s1959 + $0x14] sm:$0xf]
        %v1966 = vld [vmem:[%s1959 + $0x18] sm:$0xf]
        %v1967 = vld [vmem:[%s1959 + $0x1c] sm:$0xf]
        %v1968 = vld [vmem:[%s1959 + $0x20] sm:$0xf]
        %v1969 = vld [vmem:[%s1959 + $0x24] sm:$0xf]
        %v1970 = vld [vmem:[%s1959 + $0x28] sm:$0xf]
        %v1971 = vld [vmem:[%s1959 + $0x2c] sm:$0xf]
        %v1972 = vld [vmem:[%s1959 + $0x30] sm:$0xf]
        %v1973 = vld [vmem:[%s1959 + $0x34] sm:$0xf]
        %v1974 = vld [vmem:[%s1959 + $0x38] sm:$0xf]
        %v1975 = vld [vmem:[%s1959 + $0x3c] sm:$0xf]
        %v1976 = vld [vmem:[%s1959 + $0x40] sm:$0xf]
        %v1977 = vld [vmem:[%s1959 + $0x44] sm:$0xf]
        %v1978 = vld [vmem:[%s1959 + $0x48] sm:$0xf]
        %v1979 = vld [vmem:[%s1959 + $0x4c] sm:$0xf]
        %v1980 = vld [vmem:[%s1959 + $0x50] sm:$0xf]
        %v1981 = vld [vmem:[%s1959 + $0x54] sm:$0xf]
        %v1982 = vld [vmem:[%s1959 + $0x58] sm:$0xf]
        %v1983 = vld [vmem:[%s1959 + $0x5c] sm:$0xf]
        %v1984 = vld [vmem:[%s1959 + $0x60] sm:$0xf]
        %v1985 = vld [vmem:[%s1959 + $0x64] sm:$0xf]
        %v1986 = vld [vmem:[%s1959 + $0x68] sm:$0xf]
        %v1987 = vld [vmem:[%s1959 + $0x6c] sm:$0xf]
        %v1988 = vld [vmem:[%s1959 + $0x70] sm:$0xf]
        %v1989 = vld [vmem:[%s1959 + $0x74] sm:$0xf]
        %v1990 = vld [vmem:[%s1959 + $0x78] sm:$0xf]
        %v1991 = vld [vmem:[%s1959 + $0x7c] sm:$0xf]
        %v1993 = vunpack.c.l.b16 %v1776
        %v1994 = vunpack.c.h.b16 %v1776
        %v1995 = vpack.c.b16 %v1993, %v1993
        %v1996 = vpack.c.b16 %v1994, %v1994
        %v1998 = vshrl.u32 %v1816, 16
        %v2000 = vshll.u32 %v1816, 16
        %v2002 = vrot.slane %v2000, 1
        %v2003 = vor.u32 %v1998, %v2002
        %v2005 = vshll.u32 %v1995, 16
        %v2007 = vrot.slane %v2005, 1
        %v2008 = vsel %vm1286, %v2003, %v2007
        %v2010 = vshrl.u32 %v1817, 16
        %v2012 = vshll.u32 %v1817, 16
        %v2014 = vrot.slane %v2012, 1
        %v2015 = vor.u32 %v2010, %v2014
        %v2017 = vshll.u32 %v1996, 16
        %v2019 = vrot.slane %v2017, 1
        %v2020 = vsel %vm1286, %v2015, %v2019
        %v2055 = vunpack.c.l.b16 %v1960
        %v2056 = vunpack.c.l.b16 %v1961
        %v2057 = vunpack.c.l.b16 %v1962
        %v2058 = vunpack.c.l.b16 %v1963
        %v2059 = vunpack.c.l.b16 %v1964
        %v2060 = vunpack.c.l.b16 %v1965
        %v2061 = vunpack.c.l.b16 %v1966
        %v2062 = vunpack.c.l.b16 %v1967
        %v2063 = vunpack.c.l.b16 %v1968
        %v2064 = vunpack.c.l.b16 %v1969
        %v2065 = vunpack.c.l.b16 %v1970
        %v2066 = vunpack.c.l.b16 %v1971
        %v2067 = vunpack.c.l.b16 %v1972
        %v2068 = vunpack.c.l.b16 %v1973
        %v2069 = vunpack.c.l.b16 %v1974
        %v2070 = vunpack.c.l.b16 %v1975
        %v2071 = vunpack.c.l.b16 %v1976
        %v2072 = vunpack.c.l.b16 %v1977
        %v2073 = vunpack.c.l.b16 %v1978
        %v2074 = vunpack.c.l.b16 %v1979
        %v2075 = vunpack.c.l.b16 %v1980
        %v2076 = vunpack.c.l.b16 %v1981
        %v2077 = vunpack.c.l.b16 %v1982
        %v2078 = vunpack.c.l.b16 %v1983
        %v2079 = vunpack.c.l.b16 %v1984
        %v2080 = vunpack.c.l.b16 %v1985
        %v2081 = vunpack.c.l.b16 %v1986
        %v2082 = vunpack.c.l.b16 %v1987
        %v2083 = vunpack.c.l.b16 %v1988
        %v2084 = vunpack.c.l.b16 %v1989
        %v2085 = vunpack.c.l.b16 %v1990
        %v2086 = vunpack.c.l.b16 %v1991
        %v2087 = vpack.c.b16 %v2056, %v2055
        %v2088 = vpack.c.b16 %v2058, %v2057
        %v2089 = vpack.c.b16 %v2060, %v2059
        %v2090 = vpack.c.b16 %v2062, %v2061
        %v2091 = vpack.c.b16 %v2064, %v2063
        %v2092 = vpack.c.b16 %v2066, %v2065
        %v2093 = vpack.c.b16 %v2068, %v2067
        %v2094 = vpack.c.b16 %v2070, %v2069
        %v2095 = vpack.c.b16 %v2072, %v2071
        %v2096 = vpack.c.b16 %v2074, %v2073
        %v2097 = vpack.c.b16 %v2076, %v2075
        %v2098 = vpack.c.b16 %v2078, %v2077
        %v2099 = vpack.c.b16 %v2080, %v2079
        %v2100 = vpack.c.b16 %v2082, %v2081
        %v2101 = vpack.c.b16 %v2084, %v2083
        %v2102 = vpack.c.b16 %v2086, %v2085
        %2119 = vmatprep.subr.bf16.mxu0 0
        %2120 = vmatpush1.bf16.msra.mxu0 %v2087
        %2121 = vmatprep.subr.bf16.mxu0 0
        %2122 = vmatpush1.bf16.msra.mxu0 %v2088
        %2123 = vmatprep.subr.bf16.mxu0 0
        %2124 = vmatpush1.bf16.msra.mxu0 %v2089
        %2125 = vmatprep.subr.bf16.mxu0 0
        %2126 = vmatpush1.bf16.msra.mxu0 %v2090
        %2127 = vmatprep.subr.bf16.mxu0 0
        %2128 = vmatpush1.bf16.msra.mxu0 %v2091
        %2129 = vmatprep.subr.bf16.mxu0 0
        %2130 = vmatpush1.bf16.msra.mxu0 %v2092
        %2131 = vmatprep.subr.bf16.mxu0 0
        %2132 = vmatpush1.bf16.msra.mxu0 %v2093
        %2133 = vmatprep.subr.bf16.mxu0 0
        %2134 = vmatpush1.bf16.msra.mxu0 %v2094
        %2135 = vmatprep.subr.bf16.mxu0 0
        %2136 = vmatpush1.bf16.msra.mxu0 %v2095
        %2137 = vmatprep.subr.bf16.mxu0 0
        %2138 = vmatpush1.bf16.msra.mxu0 %v2096
        %2139 = vmatprep.subr.bf16.mxu0 0
        %2140 = vmatpush1.bf16.msra.mxu0 %v2097
        %2141 = vmatprep.subr.bf16.mxu0 0
        %2142 = vmatpush1.bf16.msra.mxu0 %v2098
        %2143 = vmatprep.subr.bf16.mxu0 0
        %2144 = vmatpush1.bf16.msra.mxu0 %v2099
        %2145 = vmatprep.subr.bf16.mxu0 0
        %2146 = vmatpush1.bf16.msra.mxu0 %v2100
        %2147 = vmatprep.subr.bf16.mxu0 0
        %2148 = vmatpush1.bf16.msra.mxu0 %v2101
        %2149 = vmatprep.subr.bf16.mxu0 0
        %2150 = vmatpush1.bf16.msra.mxu0 %v2102
        %2151 = vmatprep.mubr.bf16.mxu0 %v2020
        %2152 = vmatmul.mubr.bf16.gmra.mrb[0].mxu0 %v2008
        %v2153 = vpop.f32.mrb[0].mxu0
        %v2154 = vadd.f32 0.0, %v2153
        %v2155 = vpop.f32.mrb[0].mxu0
        %v2156 = vpop.f32.mrb[0].mxu0
        %v2157 = vadd.f32 0.0, %v2156
        %v2158 = vpop.f32.mrb[0].mxu0
        %2159 = vdwg.mxu0
        %v2160 = vadd.f32 %v1957, %v2154
        %v2161 = vadd.f32 %v1958, %v2157
        %s2162 = scalar_lea.vmem %s3, 640
        %v2163 = vld [vmem:[%s2162] sm:$0xf]
        %v2164 = vld [vmem:[%s2162 + $0x4] sm:$0xf]
        %v2165 = vld [vmem:[%s2162 + $0x8] sm:$0xf]
        %v2166 = vld [vmem:[%s2162 + $0xc] sm:$0xf]
        %v2167 = vld [vmem:[%s2162 + $0x10] sm:$0xf]
        %v2168 = vld [vmem:[%s2162 + $0x14] sm:$0xf]
        %v2169 = vld [vmem:[%s2162 + $0x18] sm:$0xf]
        %v2170 = vld [vmem:[%s2162 + $0x1c] sm:$0xf]
        %v2171 = vld [vmem:[%s2162 + $0x20] sm:$0xf]
        %v2172 = vld [vmem:[%s2162 + $0x24] sm:$0xf]
        %v2173 = vld [vmem:[%s2162 + $0x28] sm:$0xf]
        %v2174 = vld [vmem:[%s2162 + $0x2c] sm:$0xf]
        %v2175 = vld [vmem:[%s2162 + $0x30] sm:$0xf]
        %v2176 = vld [vmem:[%s2162 + $0x34] sm:$0xf]
        %v2177 = vld [vmem:[%s2162 + $0x38] sm:$0xf]
        %v2178 = vld [vmem:[%s2162 + $0x3c] sm:$0xf]
        %v2179 = vld [vmem:[%s2162 + $0x40] sm:$0xf]
        %v2180 = vld [vmem:[%s2162 + $0x44] sm:$0xf]
        %v2181 = vld [vmem:[%s2162 + $0x48] sm:$0xf]
        %v2182 = vld [vmem:[%s2162 + $0x4c] sm:$0xf]
        %v2183 = vld [vmem:[%s2162 + $0x50] sm:$0xf]
        %v2184 = vld [vmem:[%s2162 + $0x54] sm:$0xf]
        %v2185 = vld [vmem:[%s2162 + $0x58] sm:$0xf]
        %v2186 = vld [vmem:[%s2162 + $0x5c] sm:$0xf]
        %v2187 = vld [vmem:[%s2162 + $0x60] sm:$0xf]
        %v2188 = vld [vmem:[%s2162 + $0x64] sm:$0xf]
        %v2189 = vld [vmem:[%s2162 + $0x68] sm:$0xf]
        %v2190 = vld [vmem:[%s2162 + $0x6c] sm:$0xf]
        %v2191 = vld [vmem:[%s2162 + $0x70] sm:$0xf]
        %v2192 = vld [vmem:[%s2162 + $0x74] sm:$0xf]
        %v2193 = vld [vmem:[%s2162 + $0x78] sm:$0xf]
        %v2194 = vld [vmem:[%s2162 + $0x7c] sm:$0xf]
        %v2195 = vrot.slane %v1816, 1
        %v2196 = vrot.slane %v1995, 1
        %v2197 = vsel %vm1622, %v2195, %v2196
        %v2198 = vrot.slane %v1817, 1
        %v2199 = vrot.slane %v1996, 1
        %v2200 = vsel %vm1622, %v2198, %v2199
        %v2235 = vunpack.c.l.b16 %v2163
        %v2236 = vunpack.c.l.b16 %v2164
        %v2237 = vunpack.c.l.b16 %v2165
        %v2238 = vunpack.c.l.b16 %v2166
        %v2239 = vunpack.c.l.b16 %v2167
        %v2240 = vunpack.c.l.b16 %v2168
        %v2241 = vunpack.c.l.b16 %v2169
        %v2242 = vunpack.c.l.b16 %v2170
        %v2243 = vunpack.c.l.b16 %v2171
        %v2244 = vunpack.c.l.b16 %v2172
        %v2245 = vunpack.c.l.b16 %v2173
        %v2246 = vunpack.c.l.b16 %v2174
        %v2247 = vunpack.c.l.b16 %v2175
        %v2248 = vunpack.c.l.b16 %v2176
        %v2249 = vunpack.c.l.b16 %v2177
        %v2250 = vunpack.c.l.b16 %v2178
        %v2251 = vunpack.c.l.b16 %v2179
        %v2252 = vunpack.c.l.b16 %v2180
        %v2253 = vunpack.c.l.b16 %v2181
        %v2254 = vunpack.c.l.b16 %v2182
        %v2255 = vunpack.c.l.b16 %v2183
        %v2256 = vunpack.c.l.b16 %v2184
        %v2257 = vunpack.c.l.b16 %v2185
        %v2258 = vunpack.c.l.b16 %v2186
        %v2259 = vunpack.c.l.b16 %v2187
        %v2260 = vunpack.c.l.b16 %v2188
        %v2261 = vunpack.c.l.b16 %v2189
        %v2262 = vunpack.c.l.b16 %v2190
        %v2263 = vunpack.c.l.b16 %v2191
        %v2264 = vunpack.c.l.b16 %v2192
        %v2265 = vunpack.c.l.b16 %v2193
        %v2266 = vunpack.c.l.b16 %v2194
        %v2267 = vpack.c.b16 %v2236, %v2235
        %v2268 = vpack.c.b16 %v2238, %v2237
        %v2269 = vpack.c.b16 %v2240, %v2239
        %v2270 = vpack.c.b16 %v2242, %v2241
        %v2271 = vpack.c.b16 %v2244, %v2243
        %v2272 = vpack.c.b16 %v2246, %v2245
        %v2273 = vpack.c.b16 %v2248, %v2247
        %v2274 = vpack.c.b16 %v2250, %v2249
        %v2275 = vpack.c.b16 %v2252, %v2251
        %v2276 = vpack.c.b16 %v2254, %v2253
        %v2277 = vpack.c.b16 %v2256, %v2255
        %v2278 = vpack.c.b16 %v2258, %v2257
        %v2279 = vpack.c.b16 %v2260, %v2259
        %v2280 = vpack.c.b16 %v2262, %v2261
        %v2281 = vpack.c.b16 %v2264, %v2263
        %v2282 = vpack.c.b16 %v2266, %v2265
        %2299 = vmatprep.subr.bf16.mxu0 0
        %2300 = vmatpush1.bf16.msra.mxu0 %v2267
        %2301 = vmatprep.subr.bf16.mxu0 0
        %2302 = vmatpush1.bf16.msra.mxu0 %v2268
        %2303 = vmatprep.subr.bf16.mxu0 0
        %2304 = vmatpush1.bf16.msra.mxu0 %v2269
        %2305 = vmatprep.subr.bf16.mxu0 0
        %2306 = vmatpush1.bf16.msra.mxu0 %v2270
        %2307 = vmatprep.subr.bf16.mxu0 0
        %2308 = vmatpush1.bf16.msra.mxu0 %v2271
        %2309 = vmatprep.subr.bf16.mxu0 0
        %2310 = vmatpush1.bf16.msra.mxu0 %v2272
        %2311 = vmatprep.subr.bf16.mxu0 0
        %2312 = vmatpush1.bf16.msra.mxu0 %v2273
        %2313 = vmatprep.subr.bf16.mxu0 0
        %2314 = vmatpush1.bf16.msra.mxu0 %v2274
        %2315 = vmatprep.subr.bf16.mxu0 0
        %2316 = vmatpush1.bf16.msra.mxu0 %v2275
        %2317 = vmatprep.subr.bf16.mxu0 0
        %2318 = vmatpush1.bf16.msra.mxu0 %v2276
        %2319 = vmatprep.subr.bf16.mxu0 0
        %2320 = vmatpush1.bf16.msra.mxu0 %v2277
        %2321 = vmatprep.subr.bf16.mxu0 0
        %2322 = vmatpush1.bf16.msra.mxu0 %v2278
        %2323 = vmatprep.subr.bf16.mxu0 0
        %2324 = vmatpush1.bf16.msra.mxu0 %v2279
        %2325 = vmatprep.subr.bf16.mxu0 0
        %2326 = vmatpush1.bf16.msra.mxu0 %v2280
        %2327 = vmatprep.subr.bf16.mxu0 0
        %2328 = vmatpush1.bf16.msra.mxu0 %v2281
        %2329 = vmatprep.subr.bf16.mxu0 0
        %2330 = vmatpush1.bf16.msra.mxu0 %v2282
        %2331 = vmatprep.mubr.bf16.mxu0 %v2200
        %2332 = vmatmul.mubr.bf16.gmra.mrb[0].mxu0 %v2197
        %v2333 = vpop.f32.mrb[0].mxu0
        %v2334 = vadd.f32 0.0, %v2333
        %v2335 = vpop.f32.mrb[0].mxu0
        %v2336 = vpop.f32.mrb[0].mxu0
        %v2337 = vadd.f32 0.0, %v2336
        %v2338 = vpop.f32.mrb[0].mxu0
        %2339 = vdwg.mxu0
        %v2340 = vadd.f32 %v2160, %v2334
        %v2341 = vadd.f32 %v2161, %v2337
        %s2342 = sadd.s32 %s1195, 2
        %s2343 = smul.u32 %s2342, 6
        %s2344 = smul.addr %s2343, 4
        %s2345 = scalar_lea.vmem [#allocation2], %s2344
        %v2346 = vld [vmem:[%s2345] sm:$0xff]
        %v2347 = vld [vmem:[%s2345 + $0x8] sm:$0xff]
        %v2348 = vld [vmem:[%s2345 + $0x10] sm:$0x11]
        %s2349 = scalar_lea.vmem %s3, 768
        %v2350 = vld [vmem:[%s2349] sm:$0xf]
        %v2351 = vld [vmem:[%s2349 + $0x4] sm:$0xf]
        %v2352 = vld [vmem:[%s2349 + $0x8] sm:$0xf]
        %v2353 = vld [vmem:[%s2349 + $0xc] sm:$0xf]
        %v2354 = vld [vmem:[%s2349 + $0x10] sm:$0xf]
        %v2355 = vld [vmem:[%s2349 + $0x14] sm:$0xf]
        %v2356 = vld [vmem:[%s2349 + $0x18] sm:$0xf]
        %v2357 = vld [vmem:[%s2349 + $0x1c] sm:$0xf]
        %v2358 = vld [vmem:[%s2349 + $0x20] sm:$0xf]
        %v2359 = vld [vmem:[%s2349 + $0x24] sm:$0xf]
        %v2360 = vld [vmem:[%s2349 + $0x28] sm:$0xf]
        %v2361 = vld [vmem:[%s2349 + $0x2c] sm:$0xf]
        %v2362 = vld [vmem:[%s2349 + $0x30] sm:$0xf]
        %v2363 = vld [vmem:[%s2349 + $0x34] sm:$0xf]
        %v2364 = vld [vmem:[%s2349 + $0x38] sm:$0xf]
        %v2365 = vld [vmem:[%s2349 + $0x3c] sm:$0xf]
        %v2366 = vld [vmem:[%s2349 + $0x40] sm:$0xf]
        %v2367 = vld [vmem:[%s2349 + $0x44] sm:$0xf]
        %v2368 = vld [vmem:[%s2349 + $0x48] sm:$0xf]
        %v2369 = vld [vmem:[%s2349 + $0x4c] sm:$0xf]
        %v2370 = vld [vmem:[%s2349 + $0x50] sm:$0xf]
        %v2371 = vld [vmem:[%s2349 + $0x54] sm:$0xf]
        %v2372 = vld [vmem:[%s2349 + $0x58] sm:$0xf]
        %v2373 = vld [vmem:[%s2349 + $0x5c] sm:$0xf]
        %v2374 = vld [vmem:[%s2349 + $0x60] sm:$0xf]
        %v2375 = vld [vmem:[%s2349 + $0x64] sm:$0xf]
        %v2376 = vld [vmem:[%s2349 + $0x68] sm:$0xf]
        %v2377 = vld [vmem:[%s2349 + $0x6c] sm:$0xf]
        %v2378 = vld [vmem:[%s2349 + $0x70] sm:$0xf]
        %v2379 = vld [vmem:[%s2349 + $0x74] sm:$0xf]
        %v2380 = vld [vmem:[%s2349 + $0x78] sm:$0xf]
        %v2381 = vld [vmem:[%s2349 + $0x7c] sm:$0xf]
        %v2384 = vunpack.c.l.b16 %v2346
        %v2385 = vunpack.c.h.b16 %v2346
        %v2386 = vunpack.c.l.b16 %v2347
        %v2387 = vunpack.c.h.b16 %v2347
        %v2388 = vpack.c.b16 %v2386, %v2384
        %v2389 = vpack.c.b16 %v2387, %v2385
        %v2424 = vunpack.c.l.b16 %v2350
        %v2425 = vunpack.c.l.b16 %v2351
        %v2426 = vunpack.c.l.b16 %v2352
        %v2427 = vunpack.c.l.b16 %v2353
        %v2428 = vunpack.c.l.b16 %v2354
        %v2429 = vunpack.c.l.b16 %v2355
        %v2430 = vunpack.c.l.b16 %v2356
        %v2431 = vunpack.c.l.b16 %v2357
        %v2432 = vunpack.c.l.b16 %v2358
        %v2433 = vunpack.c.l.b16 %v2359
        %v2434 = vunpack.c.l.b16 %v2360
        %v2435 = vunpack.c.l.b16 %v2361
        %v2436 = vunpack.c.l.b16 %v2362
        %v2437 = vunpack.c.l.b16 %v2363
        %v2438 = vunpack.c.l.b16 %v2364
        %v2439 = vunpack.c.l.b16 %v2365
        %v2440 = vunpack.c.l.b16 %v2366
        %v2441 = vunpack.c.l.b16 %v2367
        %v2442 = vunpack.c.l.b16 %v2368
        %v2443 = vunpack.c.l.b16 %v2369
        %v2444 = vunpack.c.l.b16 %v2370
        %v2445 = vunpack.c.l.b16 %v2371
        %v2446 = vunpack.c.l.b16 %v2372
        %v2447 = vunpack.c.l.b16 %v2373
        %v2448 = vunpack.c.l.b16 %v2374
        %v2449 = vunpack.c.l.b16 %v2375
        %v2450 = vunpack.c.l.b16 %v2376
        %v2451 = vunpack.c.l.b16 %v2377
        %v2452 = vunpack.c.l.b16 %v2378
        %v2453 = vunpack.c.l.b16 %v2379
        %v2454 = vunpack.c.l.b16 %v2380
        %v2455 = vunpack.c.l.b16 %v2381
        %v2456 = vpack.c.b16 %v2425, %v2424
        %v2457 = vpack.c.b16 %v2427, %v2426
        %v2458 = vpack.c.b16 %v2429, %v2428
        %v2459 = vpack.c.b16 %v2431, %v2430
        %v2460 = vpack.c.b16 %v2433, %v2432
        %v2461 = vpack.c.b16 %v2435, %v2434
        %v2462 = vpack.c.b16 %v2437, %v2436
        %v2463 = vpack.c.b16 %v2439, %v2438
        %v2464 = vpack.c.b16 %v2441, %v2440
        %v2465 = vpack.c.b16 %v2443, %v2442
        %v2466 = vpack.c.b16 %v2445, %v2444
        %v2467 = vpack.c.b16 %v2447, %v2446
        %v2468 = vpack.c.b16 %v2449, %v2448
        %v2469 = vpack.c.b16 %v2451, %v2450
        %v2470 = vpack.c.b16 %v2453, %v2452
        %v2471 = vpack.c.b16 %v2455, %v2454
        %2488 = vmatprep.subr.bf16.mxu0 0
        %2489 = vmatpush1.bf16.msra.mxu0 %v2456
        %2490 = vmatprep.subr.bf16.mxu0 0
        %2491 = vmatpush1.bf16.msra.mxu0 %v2457
        %2492 = vmatprep.subr.bf16.mxu0 0
        %2493 = vmatpush1.bf16.msra.mxu0 %v2458
        %2494 = vmatprep.subr.bf16.mxu0 0
        %2495 = vmatpush1.bf16.msra.mxu0 %v2459
        %2496 = vmatprep.subr.bf16.mxu0 0
        %2497 = vmatpush1.bf16.msra.mxu0 %v2460
        %2498 = vmatprep.subr.bf16.mxu0 0
        %2499 = vmatpush1.bf16.msra.mxu0 %v2461
        %2500 = vmatprep.subr.bf16.mxu0 0
        %2501 = vmatpush1.bf16.msra.mxu0 %v2462
        %2502 = vmatprep.subr.bf16.mxu0 0
        %2503 = vmatpush1.bf16.msra.mxu0 %v2463
        %2504 = vmatprep.subr.bf16.mxu0 0
        %2505 = vmatpush1.bf16.msra.mxu0 %v2464
        %2506 = vmatprep.subr.bf16.mxu0 0
        %2507 = vmatpush1.bf16.msra.mxu0 %v2465
        %2508 = vmatprep.subr.bf16.mxu0 0
        %2509 = vmatpush1.bf16.msra.mxu0 %v2466
        %2510 = vmatprep.subr.bf16.mxu0 0
        %2511 = vmatpush1.bf16.msra.mxu0 %v2467
        %2512 = vmatprep.subr.bf16.mxu0 0
        %2513 = vmatpush1.bf16.msra.mxu0 %v2468
        %2514 = vmatprep.subr.bf16.mxu0 0
        %2515 = vmatpush1.bf16.msra.mxu0 %v2469
        %2516 = vmatprep.subr.bf16.mxu0 0
        %2517 = vmatpush1.bf16.msra.mxu0 %v2470
        %2518 = vmatprep.subr.bf16.mxu0 0
        %2519 = vmatpush1.bf16.msra.mxu0 %v2471
        %2520 = vmatprep.mubr.bf16.mxu0 %v2389
        %2521 = vmatmul.mubr.bf16.gmra.mrb[0].mxu0 %v2388
        %v2522 = vpop.f32.mrb[0].mxu0
        %v2523 = vadd.f32 0.0, %v2522
        %v2524 = vpop.f32.mrb[0].mxu0
        %v2525 = vpop.f32.mrb[0].mxu0
        %v2526 = vadd.f32 0.0, %v2525
        %v2527 = vpop.f32.mrb[0].mxu0
        %2528 = vdwg.mxu0
        %v2529 = vadd.f32 %v2340, %v2523
        %v2530 = vadd.f32 %v2341, %v2526
        %s2531 = scalar_lea.vmem %s3, 896
        %v2532 = vld [vmem:[%s2531] sm:$0xf]
        %v2533 = vld [vmem:[%s2531 + $0x4] sm:$0xf]
        %v2534 = vld [vmem:[%s2531 + $0x8] sm:$0xf]
        %v2535 = vld [vmem:[%s2531 + $0xc] sm:$0xf]
        %v2536 = vld [vmem:[%s2531 + $0x10] sm:$0xf]
        %v2537 = vld [vmem:[%s2531 + $0x14] sm:$0xf]
        %v2538 = vld [vmem:[%s2531 + $0x18] sm:$0xf]
        %v2539 = vld [vmem:[%s2531 + $0x1c] sm:$0xf]
        %v2540 = vld [vmem:[%s2531 + $0x20] sm:$0xf]
        %v2541 = vld [vmem:[%s2531 + $0x24] sm:$0xf]
        %v2542 = vld [vmem:[%s2531 + $0x28] sm:$0xf]
        %v2543 = vld [vmem:[%s2531 + $0x2c] sm:$0xf]
        %v2544 = vld [vmem:[%s2531 + $0x30] sm:$0xf]
        %v2545 = vld [vmem:[%s2531 + $0x34] sm:$0xf]
        %v2546 = vld [vmem:[%s2531 + $0x38] sm:$0xf]
        %v2547 = vld [vmem:[%s2531 + $0x3c] sm:$0xf]
        %v2548 = vld [vmem:[%s2531 + $0x40] sm:$0xf]
        %v2549 = vld [vmem:[%s2531 + $0x44] sm:$0xf]
        %v2550 = vld [vmem:[%s2531 + $0x48] sm:$0xf]
        %v2551 = vld [vmem:[%s2531 + $0x4c] sm:$0xf]
        %v2552 = vld [vmem:[%s2531 + $0x50] sm:$0xf]
        %v2553 = vld [vmem:[%s2531 + $0x54] sm:$0xf]
        %v2554 = vld [vmem:[%s2531 + $0x58] sm:$0xf]
        %v2555 = vld [vmem:[%s2531 + $0x5c] sm:$0xf]
        %v2556 = vld [vmem:[%s2531 + $0x60] sm:$0xf]
        %v2557 = vld [vmem:[%s2531 + $0x64] sm:$0xf]
        %v2558 = vld [vmem:[%s2531 + $0x68] sm:$0xf]
        %v2559 = vld [vmem:[%s2531 + $0x6c] sm:$0xf]
        %v2560 = vld [vmem:[%s2531 + $0x70] sm:$0xf]
        %v2561 = vld [vmem:[%s2531 + $0x74] sm:$0xf]
        %v2562 = vld [vmem:[%s2531 + $0x78] sm:$0xf]
        %v2563 = vld [vmem:[%s2531 + $0x7c] sm:$0xf]
        %v2565 = vunpack.c.l.b16 %v2348
        %v2566 = vunpack.c.h.b16 %v2348
        %v2567 = vpack.c.b16 %v2565, %v2565
        %v2568 = vpack.c.b16 %v2566, %v2566
        %v2570 = vshrl.u32 %v2388, 16
        %v2572 = vshll.u32 %v2388, 16
        %v2574 = vrot.slane %v2572, 1
        %v2575 = vor.u32 %v2570, %v2574
        %v2577 = vshll.u32 %v2567, 16
        %v2579 = vrot.slane %v2577, 1
        %v2580 = vsel %vm1286, %v2575, %v2579
        %v2582 = vshrl.u32 %v2389, 16
        %v2584 = vshll.u32 %v2389, 16
        %v2586 = vrot.slane %v2584, 1
        %v2587 = vor.u32 %v2582, %v2586
        %v2589 = vshll.u32 %v2568, 16
        %v2591 = vrot.slane %v2589, 1
        %v2592 = vsel %vm1286, %v2587, %v2591
        %v2627 = vunpack.c.l.b16 %v2532
        %v2628 = vunpack.c.l.b16 %v2533
        %v2629 = vunpack.c.l.b16 %v2534
        %v2630 = vunpack.c.l.b16 %v2535
        %v2631 = vunpack.c.l.b16 %v2536
        %v2632 = vunpack.c.l.b16 %v2537
        %v2633 = vunpack.c.l.b16 %v2538
        %v2634 = vunpack.c.l.b16 %v2539
        %v2635 = vunpack.c.l.b16 %v2540
        %v2636 = vunpack.c.l.b16 %v2541
        %v2637 = vunpack.c.l.b16 %v2542
        %v2638 = vunpack.c.l.b16 %v2543
        %v2639 = vunpack.c.l.b16 %v2544
        %v2640 = vunpack.c.l.b16 %v2545
        %v2641 = vunpack.c.l.b16 %v2546
        %v2642 = vunpack.c.l.b16 %v2547
        %v2643 = vunpack.c.l.b16 %v2548
        %v2644 = vunpack.c.l.b16 %v2549
        %v2645 = vunpack.c.l.b16 %v2550
        %v2646 = vunpack.c.l.b16 %v2551
        %v2647 = vunpack.c.l.b16 %v2552
        %v2648 = vunpack.c.l.b16 %v2553
        %v2649 = vunpack.c.l.b16 %v2554
        %v2650 = vunpack.c.l.b16 %v2555
        %v2651 = vunpack.c.l.b16 %v2556
        %v2652 = vunpack.c.l.b16 %v2557
        %v2653 = vunpack.c.l.b16 %v2558
        %v2654 = vunpack.c.l.b16 %v2559
        %v2655 = vunpack.c.l.b16 %v2560
        %v2656 = vunpack.c.l.b16 %v2561
        %v2657 = vunpack.c.l.b16 %v2562
        %v2658 = vunpack.c.l.b16 %v2563
        %v2659 = vpack.c.b16 %v2628, %v2627
        %v2660 = vpack.c.b16 %v2630, %v2629
        %v2661 = vpack.c.b16 %v2632, %v2631
        %v2662 = vpack.c.b16 %v2634, %v2633
        %v2663 = vpack.c.b16 %v2636, %v2635
        %v2664 = vpack.c.b16 %v2638, %v2637
        %v2665 = vpack.c.b16 %v2640, %v2639
        %v2666 = vpack.c.b16 %v2642, %v2641
        %v2667 = vpack.c.b16 %v2644, %v2643
        %v2668 = vpack.c.b16 %v2646, %v2645
        %v2669 = vpack.c.b16 %v2648, %v2647
        %v2670 = vpack.c.b16 %v2650, %v2649
        %v2671 = vpack.c.b16 %v2652, %v2651
        %v2672 = vpack.c.b16 %v2654, %v2653
        %v2673 = vpack.c.b16 %v2656, %v2655
        %v2674 = vpack.c.b16 %v2658, %v2657
        %2691 = vmatprep.subr.bf16.mxu0 0
        %2692 = vmatpush1.bf16.msra.mxu0 %v2659
        %2693 = vmatprep.subr.bf16.mxu0 0
        %2694 = vmatpush1.bf16.msra.mxu0 %v2660
        %2695 = vmatprep.subr.bf16.mxu0 0
        %2696 = vmatpush1.bf16.msra.mxu0 %v2661
        %2697 = vmatprep.subr.bf16.mxu0 0
        %2698 = vmatpush1.bf16.msra.mxu0 %v2662
        %2699 = vmatprep.subr.bf16.mxu0 0
        %2700 = vmatpush1.bf16.msra.mxu0 %v2663
        %2701 = vmatprep.subr.bf16.mxu0 0
        %2702 = vmatpush1.bf16.msra.mxu0 %v2664
        %2703 = vmatprep.subr.bf16.mxu0 0
        %2704 = vmatpush1.bf16.msra.mxu0 %v2665
        %2705 = vmatprep.subr.bf16.mxu0 0
        %2706 = vmatpush1.bf16.msra.mxu0 %v2666
        %2707 = vmatprep.subr.bf16.mxu0 0
        %2708 = vmatpush1.bf16.msra.mxu0 %v2667
        %2709 = vmatprep.subr.bf16.mxu0 0
        %2710 = vmatpush1.bf16.msra.mxu0 %v2668
        %2711 = vmatprep.subr.bf16.mxu0 0
        %2712 = vmatpush1.bf16.msra.mxu0 %v2669
        %2713 = vmatprep.subr.bf16.mxu0 0
        %2714 = vmatpush1.bf16.msra.mxu0 %v2670
        %2715 = vmatprep.subr.bf16.mxu0 0
        %2716 = vmatpush1.bf16.msra.mxu0 %v2671
        %2717 = vmatprep.subr.bf16.mxu0 0
        %2718 = vmatpush1.bf16.msra.mxu0 %v2672
        %2719 = vmatprep.subr.bf16.mxu0 0
        %2720 = vmatpush1.bf16.msra.mxu0 %v2673
        %2721 = vmatprep.subr.bf16.mxu0 0
        %2722 = vmatpush1.bf16.msra.mxu0 %v2674
        %2723 = vmatprep.mubr.bf16.mxu0 %v2592
        %2724 = vmatmul.mubr.bf16.gmra.mrb[0].mxu0 %v2580
        %v2725 = vpop.f32.mrb[0].mxu0
        %v2726 = vadd.f32 0.0, %v2725
        %v2727 = vpop.f32.mrb[0].mxu0
        %v2728 = vpop.f32.mrb[0].mxu0
        %v2729 = vadd.f32 0.0, %v2728
        %v2730 = vpop.f32.mrb[0].mxu0
        %2731 = vdwg.mxu0
        %v2732 = vadd.f32 %v2529, %v2726
        %v2733 = vadd.f32 %v2530, %v2729
        %s2734 = scalar_lea.vmem %s3, 1024
        %v2735 = vld [vmem:[%s2734] sm:$0xf]
        %v2736 = vld [vmem:[%s2734 + $0x4] sm:$0xf]
        %v2737 = vld [vmem:[%s2734 + $0x8] sm:$0xf]
        %v2738 = vld [vmem:[%s2734 + $0xc] sm:$0xf]
        %v2739 = vld [vmem:[%s2734 + $0x10] sm:$0xf]
        %v2740 = vld [vmem:[%s2734 + $0x14] sm:$0xf]
        %v2741 = vld [vmem:[%s2734 + $0x18] sm:$0xf]
        %v2742 = vld [vmem:[%s2734 + $0x1c] sm:$0xf]
        %v2743 = vld [vmem:[%s2734 + $0x20] sm:$0xf]
        %v2744 = vld [vmem:[%s2734 + $0x24] sm:$0xf]
        %v2745 = vld [vmem:[%s2734 + $0x28] sm:$0xf]
        %v2746 = vld [vmem:[%s2734 + $0x2c] sm:$0xf]
        %v2747 = vld [vmem:[%s2734 + $0x30] sm:$0xf]
        %v2748 = vld [vmem:[%s2734 + $0x34] sm:$0xf]
        %v2749 = vld [vmem:[%s2734 + $0x38] sm:$0xf]
        %v2750 = vld [vmem:[%s2734 + $0x3c] sm:$0xf]
        %v2751 = vld [vmem:[%s2734 + $0x40] sm:$0xf]
        %v2752 = vld [vmem:[%s2734 + $0x44] sm:$0xf]
        %v2753 = vld [vmem:[%s2734 + $0x48] sm:$0xf]
        %v2754 = vld [vmem:[%s2734 + $0x4c] sm:$0xf]
        %v2755 = vld [vmem:[%s2734 + $0x50] sm:$0xf]
        %v2756 = vld [vmem:[%s2734 + $0x54] sm:$0xf]
        %v2757 = vld [vmem:[%s2734 + $0x58] sm:$0xf]
        %v2758 = vld [vmem:[%s2734 + $0x5c] sm:$0xf]
        %v2759 = vld [vmem:[%s2734 + $0x60] sm:$0xf]
        %v2760 = vld [vmem:[%s2734 + $0x64] sm:$0xf]
        %v2761 = vld [vmem:[%s2734 + $0x68] sm:$0xf]
        %v2762 = vld [vmem:[%s2734 + $0x6c] sm:$0xf]
        %v2763 = vld [vmem:[%s2734 + $0x70] sm:$0xf]
        %v2764 = vld [vmem:[%s2734 + $0x74] sm:$0xf]
        %v2765 = vld [vmem:[%s2734 + $0x78] sm:$0xf]
        %v2766 = vld [vmem:[%s2734 + $0x7c] sm:$0xf]
        %v2767 = vrot.slane %v2388, 1
        %v2768 = vrot.slane %v2567, 1
        %v2769 = vsel %vm1622, %v2767, %v2768
        %v2770 = vrot.slane %v2389, 1
        %v2771 = vrot.slane %v2568, 1
        %v2772 = vsel %vm1622, %v2770, %v2771
        %v2807 = vunpack.c.l.b16 %v2735
        %v2808 = vunpack.c.l.b16 %v2736
        %v2809 = vunpack.c.l.b16 %v2737
        %v2810 = vunpack.c.l.b16 %v2738
        %v2811 = vunpack.c.l.b16 %v2739
        %v2812 = vunpack.c.l.b16 %v2740
        %v2813 = vunpack.c.l.b16 %v2741
        %v2814 = vunpack.c.l.b16 %v2742
        %v2815 = vunpack.c.l.b16 %v2743
        %v2816 = vunpack.c.l.b16 %v2744
        %v2817 = vunpack.c.l.b16 %v2745
        %v2818 = vunpack.c.l.b16 %v2746
        %v2819 = vunpack.c.l.b16 %v2747
        %v2820 = vunpack.c.l.b16 %v2748
        %v2821 = vunpack.c.l.b16 %v2749
        %v2822 = vunpack.c.l.b16 %v2750
        %v2823 = vunpack.c.l.b16 %v2751
        %v2824 = vunpack.c.l.b16 %v2752
        %v2825 = vunpack.c.l.b16 %v2753
        %v2826 = vunpack.c.l.b16 %v2754
        %v2827 = vunpack.c.l.b16 %v2755
        %v2828 = vunpack.c.l.b16 %v2756
        %v2829 = vunpack.c.l.b16 %v2757
        %v2830 = vunpack.c.l.b16 %v2758
        %v2831 = vunpack.c.l.b16 %v2759
        %v2832 = vunpack.c.l.b16 %v2760
        %v2833 = vunpack.c.l.b16 %v2761
        %v2834 = vunpack.c.l.b16 %v2762
        %v2835 = vunpack.c.l.b16 %v2763
        %v2836 = vunpack.c.l.b16 %v2764
        %v2837 = vunpack.c.l.b16 %v2765
        %v2838 = vunpack.c.l.b16 %v2766
        %v2839 = vpack.c.b16 %v2808, %v2807
        %v2840 = vpack.c.b16 %v2810, %v2809
        %v2841 = vpack.c.b16 %v2812, %v2811
        %v2842 = vpack.c.b16 %v2814, %v2813
        %v2843 = vpack.c.b16 %v2816, %v2815
        %v2844 = vpack.c.b16 %v2818, %v2817
        %v2845 = vpack.c.b16 %v2820, %v2819
        %v2846 = vpack.c.b16 %v2822, %v2821
        %v2847 = vpack.c.b16 %v2824, %v2823
        %v2848 = vpack.c.b16 %v2826, %v2825
        %v2849 = vpack.c.b16 %v2828, %v2827
        %v2850 = vpack.c.b16 %v2830, %v2829
        %v2851 = vpack.c.b16 %v2832, %v2831
        %v2852 = vpack.c.b16 %v2834, %v2833
        %v2853 = vpack.c.b16 %v2836, %v2835
        %v2854 = vpack.c.b16 %v2838, %v2837
        %2871 = vmatprep.subr.bf16.mxu0 0
        %2872 = vmatpush1.bf16.msra.mxu0 %v2839
        %2873 = vmatprep.subr.bf16.mxu0 0
        %2874 = vmatpush1.bf16.msra.mxu0 %v2840
        %2875 = vmatprep.subr.bf16.mxu0 0
        %2876 = vmatpush1.bf16.msra.mxu0 %v2841
        %2877 = vmatprep.subr.bf16.mxu0 0
        %2878 = vmatpush1.bf16.msra.mxu0 %v2842
        %2879 = vmatprep.subr.bf16.mxu0 0
        %2880 = vmatpush1.bf16.msra.mxu0 %v2843
        %2881 = vmatprep.subr.bf16.mxu0 0
        %2882 = vmatpush1.bf16.msra.mxu0 %v2844
        %2883 = vmatprep.subr.bf16.mxu0 0
        %2884 = vmatpush1.bf16.msra.mxu0 %v2845
        %2885 = vmatprep.subr.bf16.mxu0 0
        %2886 = vmatpush1.bf16.msra.mxu0 %v2846
        %2887 = vmatprep.subr.bf16.mxu0 0
        %2888 = vmatpush1.bf16.msra.mxu0 %v2847
        %2889 = vmatprep.subr.bf16.mxu0 0
        %2890 = vmatpush1.bf16.msra.mxu0 %v2848
        %2891 = vmatprep.subr.bf16.mxu0 0
        %2892 = vmatpush1.bf16.msra.mxu0 %v2849
        %2893 = vmatprep.subr.bf16.mxu0 0
        %2894 = vmatpush1.bf16.msra.mxu0 %v2850
        %2895 = vmatprep.subr.bf16.mxu0 0
        %2896 = vmatpush1.bf16.msra.mxu0 %v2851
        %2897 = vmatprep.subr.bf16.mxu0 0
        %2898 = vmatpush1.bf16.msra.mxu0 %v2852
        %2899 = vmatprep.subr.bf16.mxu0 0
        %2900 = vmatpush1.bf16.msra.mxu0 %v2853
        %2901 = vmatprep.subr.bf16.mxu0 0
        %2902 = vmatpush1.bf16.msra.mxu0 %v2854
        %2903 = vmatprep.mubr.bf16.mxu0 %v2772
        %2904 = vmatmul.mubr.bf16.gmra.mrb[0].mxu0 %v2769
        %v2905 = vpop.f32.mrb[0].mxu0
        %v2906 = vadd.f32 0.0, %v2905
        %v2907 = vpop.f32.mrb[0].mxu0
        %v2908 = vpop.f32.mrb[0].mxu0
        %v2909 = vadd.f32 0.0, %v2908
        %v2910 = vpop.f32.mrb[0].mxu0
        %2911 = vdwg.mxu0
        %v2912 = vadd.f32 %v2732, %v2906
        %v2913 = vadd.f32 %v2733, %v2909
        %v2915 = vlaneseq
        %v2916 = vshrl.u32 %v2915, 7
        %v2917 = vsub.s32 0, %v2916
        %v2918 = vrot.slane %v1193, %v2917
        %v2920 = vadd.f32 %v2912, %v2918
        %v2921 = vadd.f32 %v2913, %v2918
        %v2922 = vpack.c.bf16 %v2921, %v2920
        %v2924 = vunpack.c.l.b16 %v2922
        %v2925 = vunpack.c.h.b16 %v2922
        %v2926 = vpack.c.b16 %v2924, %v2924
        %v2927 = vpack.c.b16 %v2925, %v2925
        %s2930 = smul.u32 %s1195, 2
        %s2931 = smul.addr %s2930, 4
        %s2932 = scalar_lea.vmem %s458, %s2931
        %2933 = vst [vmem:[%s2932] sm:$0xf] %v2926
        %2934 = vst [vmem:[%s2932 + $0x4] sm:$0xf] %v2927
        %v2935 = vadd.f32 %v2920, %v2921
        %v2936 = vrot.slane %v2935, 4
        %v2937 = vadd.f32 %v2935, %v2936
        %v2938 = vrot.slane %v2937, 2
        %v2939 = vadd.f32 %v2937, %v2938
        %v2940 = vrot.slane %v2939, 1
        %v2941 = vadd.f32 %v2939, %v2940
        %v2942 = vadd.f32 %v1200, %v2941
        %v2943 = vmul.f32 %v2920, %v2920
        %v2944 = vmul.f32 %v2921, %v2921
        %v2945 = vadd.f32 %v2943, %v2944
        %v2946 = vrot.slane %v2945, 4
        %v2947 = vadd.f32 %v2945, %v2946
        %v2948 = vrot.slane %v2947, 2
        %v2949 = vadd.f32 %v2947, %v2948
        %v2950 = vrot.slane %v2949, 1
        %v2951 = vadd.f32 %v2949, %v2950
        %v2952 = vadd.f32 %v1201, %v2951
      $region57: #{upconv_block_forward.4} parent=43 // loop_footer
        %s1199 = sadd.s32 1, %s1195
      $region58: #{upconv_block_forward.4} parent=43 // loop_footer_branch
        %1194 = sbr.rel target = $region54
      $region59: #{upconv_block_forward.4} parent=43 // loop_exit
        _
      %2953 = vst [vmem:[%s467] sm:$0x1] %v1200
      %2954 = vst [vmem:[%s467 + $0x1] sm:$0x1] %v1201
      %s2955 = smul.u32 8, %s24
      %p2956 = scmp.lt.s32.totalorder %s23, 1
      %s2957 = scalar_select %p2956, %s23, 1
      %p2958 = scmp.lt.s32.totalorder %s2955, 15
      %s2959 = scalar_select %p2958, %s2955, 15
      %s2960 = smul.addr %s2959, 2
      %s2961 = smul.addr %s2957, 32
      %s2962 = sadd.s32 %s2960, %s2961
      %s2963 = smul.addr %s2962, 4
      %s2964 = scalar_lea.vmem %s6, %s2963
      %p2965 = scmp.lt.s32.totalorder %s23, 1
      %s2966 = scalar_select %p2965, %s23, 1
      %p2967 = scmp.lt.s32.totalorder %s24, 1
      %s2968 = scalar_select %p2967, %s24, 1
      %s2969 = smul.addr %s2966, 2
      %s2970 = sadd.s32 %s2968, %s2969
      %s2971 = smul.addr %s2970, 2
      %s2972 = scalar_lea.vmem %s7, %s2971
      // Predicated region
      $region60: #{upconv_block_forward.4} parent=43 // pred_check
        %p2973 = pneg %p214
      $region61: #{upconv_block_forward.4} parent=43 // pred_check_branch
        %2975 = sbr.rel (%p2973) target = $region63
      $region62: #{upconv_block_forward.4} parent=43 // pred_region
        %s2976 = smul.u32 8, %s24
      $region63: #{upconv_block_forward.4} parent=43 // pred_fallthru
        _
      // Predicated region
      $region64: #{upconv_block_forward.4} parent=43 // pred_check
        %p2977 = pneg %p242
      $region65: #{upconv_block_forward.4} parent=43 // pred_check_branch
        %2979 = sbr.rel (%p2977) target = $region67
      $region66: #{upconv_block_forward.4} parent=43 // pred_region
        _
      $region67: #{upconv_block_forward.4} parent=43 // pred_fallthru
        _
    $region44: #{upconv_block_forward.4} parent=5 // pred_fallthru
      _
    %p2980 = scmp.le.s32.totalorder 2, %s14
    // Predicated region
    $region68: #{upconv_block_forward.4} parent=5 // pred_check
      %p2981 = pneg %p2980
    $region69: #{upconv_block_forward.4} parent=5 // pred_check_branch
      %2983 = sbr.rel (%p2981) target = $region71
    $region70: #{upconv_block_forward.4} parent=5 // pred_region
      %s2984 = ssub.s32 %s14, 2
      // Predicated region
      $region72: #{upconv_block_forward.4} parent=70 // pred_check
        %p2985 = pneg %p220
      $region73: #{upconv_block_forward.4} parent=70 // pred_check_branch
        %2987 = sbr.rel (%p2985) target = $region75
      $region74: #{upconv_block_forward.4} parent=70 // pred_region
        %s2988 = smul.u32 8, %s26
        %p2989 = scmp.lt.s32.totalorder %s25, 1
        %s2990 = scalar_select %p2989, %s25, 1
        %p2991 = scmp.lt.s32.totalorder %s2988, 15
        %s2992 = scalar_select %p2991, %s2988, 15
        %s2993 = smul.addr %s2992, 2
        %s2994 = smul.addr %s2990, 32
        %s2995 = sadd.s32 %s2993, %s2994
        %s2996 = smul.addr %s2995, 4
        %s2997 = scalar_lea.vmem %s6, %s2996
      $region75: #{upconv_block_forward.4} parent=70 // pred_fallthru
        _
      // Predicated region
      $region76: #{upconv_block_forward.4} parent=70 // pred_check
        %p2998 = pneg %p248
      $region77: #{upconv_block_forward.4} parent=70 // pred_check_branch
        %3000 = sbr.rel (%p2998) target = $region79
      $region78: #{upconv_block_forward.4} parent=70 // pred_region
        %p3001 = scmp.lt.s32.totalorder %s25, 1
        %s3002 = scalar_select %p3001, %s25, 1
        %p3003 = scmp.lt.s32.totalorder %s26, 1
        %s3004 = scalar_select %p3003, %s26, 1
        %s3005 = smul.addr %s3002, 2
        %s3006 = sadd.s32 %s3004, %s3005
        %s3007 = smul.addr %s3006, 2
        %s3008 = scalar_lea.vmem %s7, %s3007
      $region79: #{upconv_block_forward.4} parent=70 // pred_fallthru
        _
    $region71: #{upconv_block_forward.4} parent=5 // pred_fallthru
      _
  $region6: #{upconv_block_forward.4} parent=0 // loop_footer
    %s18 = sadd.s32 1, %s14
  $region7: #{upconv_block_forward.4} parent=0 // loop_footer_branch
    %13 = sbr.rel target = $region3
  $region8: #{upconv_block_forward.4} parent=0 // loop_exit
    _

// kernel: tile.71
$region0: #{tile.71}
  #allocation0 [shape = 's32[1]{0}', space=sflag, size = 0x4, scoped, tag = 'scoped memory for tile.71']
  %s0 = inlined_call_operand.vmem [shape: f32[16], index: 0, kind: input, shape index: {}]
  %s1 = inlined_call_operand.vmem [shape: f32[16,16], index: 1, kind: output, shape index: {}]
  // Predicated region
  $region2: #{tile.71} parent=0 // pred_check
    _
  $region3: #{tile.71} parent=0 // pred_check_branch
    %3 = sbr.rel (0) target = $region5
  $region4: #{tile.71} parent=0 // pred_region
    _
  $region5: #{tile.71} parent=0 // pred_fallthru
    _
  %v4 = vld [vmem:[%s0] ss:$0 sm:$0xff]
  %5 = vst [vmem:[%s1] sm:$0xff] %v4
  %s6 = scalar_lea.vmem %s1, 8
  %7 = vst [vmem:[%s6] sm:$0xff] %v4

// kernel: tile.74
$region0: #{tile.74}
  %s0 = inlined_call_operand.vmem [shape: f32[16,16], index: 0, kind: input, shape index: {}]
  %s1 = inlined_call_operand.vmem [shape: f32[1,256], index: 1, kind: output, shape index: {}]
  $region1: #{tile.74} parent=0
    #allocation0 [shape = 'u8[8192]{0}', space=vmem, size = 0x2000, scoped, tag = 'scoped mem for output reshape']
    %s2 = smov 3
    %v3 = vld [vmem:[%s0] ss:$8 sm:%s2]
    %vm4 = vcmask 130048
    %5 = vst.msk [vmem:[#allocation0] ss:$8 sm:$0x3] %vm4, %v3
    %s6 = scalar_lea.vmem %s0, 7
    %s7 = smov 3
    %v8 = vld [vmem:[%s6] ss:$8 sm:%s7]
    %9 = vrot.lane.b32.xlu0 %v8, 112
    %v10 = vpop.permute.xlu0 %9
    %vm11 = vcmask 1048448
    %12 = vst.msk [vmem:[#allocation0] ss:$8 sm:$0x3] %vm11, %v10
    %s13 = scalar_lea.vmem %s0, 6
    %s14 = smov 3
    %v15 = vld [vmem:[%s13] ss:$8 sm:%s14]
    %16 = vrot.lane.b32.xlu0 %v15, 96
    %v17 = vpop.permute.xlu0 %16
    %vm18 = vcmask 917248
    %19 = vst.msk [vmem:[#allocation0] ss:$8 sm:$0x3] %vm18, %v17
    %s20 = scalar_lea.vmem %s0, 5
    %s21 = smov 3
    %v22 = vld [vmem:[%s20] ss:$8 sm:%s21]
    %23 = vrot.lane.b32.xlu0 %v22, 80
    %v24 = vpop.permute.xlu0 %23
    %vm25 = vcmask 786048
    %26 = vst.msk [vmem:[#allocation0] ss:$8 sm:$0x3] %vm25, %v24
    %s27 = scalar_lea.vmem %s0, 4
    %s28 = smov 3
    %v29 = vld [vmem:[%s27] ss:$8 sm:%s28]
    %30 = vrot.lane.b32.xlu0 %v29, 64
    %v31 = vpop.permute.xlu0 %30
    %vm32 = vcmask 654848
    %33 = vst.msk [vmem:[#allocation0] ss:$8 sm:$0x3] %vm32, %v31
    %s34 = scalar_lea.vmem %s0, 3
    %s35 = smov 3
    %v36 = vld [vmem:[%s34] ss:$8 sm:%s35]
    %37 = vrot.lane.b32.xlu0 %v36, 48
    %v38 = vpop.permute.xlu0 %37
    %vm39 = vcmask 523648
    %40 = vst.msk [vmem:[#allocation0] ss:$8 sm:$0x3] %vm39, %v38
    %s41 = scalar_lea.vmem %s0, 2
    %s42 = smov 3
    %v43 = vld [vmem:[%s41] ss:$8 sm:%s42]
    %44 = vrot.lane.b32.xlu0 %v43, 32
    %v45 = vpop.permute.xlu0 %44
    %vm46 = vcmask 392448
    %47 = vst.msk [vmem:[#allocation0] ss:$8 sm:$0x3] %vm46, %v45
    %s48 = scalar_lea.vmem %s0, 1
    %s49 = smov 3
    %v50 = vld [vmem:[%s48] ss:$8 sm:%s49]
    %51 = vrot.lane.b32.xlu0 %v50, 16
    %v52 = vpop.permute.xlu0 %51
    %vm53 = vcmask 261248
    %54 = vst.msk [vmem:[#allocation0] ss:$8 sm:$0x3] %vm53, %v52
    %s56 = sshllo.u32 0, 1
    %v58 = vld [vmem:[#allocation0] sm:%s56]
    %s59 = sshllo.u32 0, 1
    %60 = vst [vmem:[%s1] sm:%s59] %v58
    %s61 = scalar_lea.vmem [#allocation0], 8
    %v62 = vld [vmem:[%s61] sm:%s56]
    %s63 = sshllo.u32 0, 1
    %s64 = scalar_lea.vmem %s1, 1
    %65 = vst [vmem:[%s64] sm:%s63] %v62

// kernel: upconv_block_forward.7
$region0: #{upconv_block_forward.7}
  #allocation0 [shape = 'u32[]', space=smem, size = 0x4, offset = 0x4, fixed_abs, tag = 'smem constant byte address 0x4 - core index']
  #allocation1 [shape = 'u32[144,128]{1,0:T(1,128)}', space=vmem, size = 0x12000, scoped, tag = 'internal scratch']
  %s0 = inlined_call_operand.vmem [shape: bf16[512,128], index: 0, kind: input, shape index: {}]
  %s1 = inlined_call_operand.vmem [shape: f32[1,128], index: 1, kind: input, shape index: {}]
  %s2 = inlined_call_operand.vmem [shape: f32[1,128], index: 2, kind: input, shape index: {}]
  %s3 = inlined_call_operand.vmem [shape: f32[512,128], index: 3, kind: output, shape index: {}]
  %s4 = sld [smem:[#allocation0]]
  $region22: #{upconv_block_forward.7} parent=0
    _
  %s6 = ssub.s32 1, %s4
  %s7 = scalar_select 0, %s6, %s4
  // Predicated region
  $region2: #{upconv_block_forward.7} parent=0 // pred_check
    _
  $region3: #{upconv_block_forward.7} parent=0 // pred_check_branch
    %9 = sbr.rel (0) target = $region5
  $region4: #{upconv_block_forward.7} parent=0 // pred_region
    _
  $region5: #{upconv_block_forward.7} parent=0 // pred_fallthru
    _
  // Predicated region
  $region6: #{upconv_block_forward.7} parent=0 // pred_check
    _
  $region7: #{upconv_block_forward.7} parent=0 // pred_check_branch
    %11 = sbr.rel (0) target = $region9
  $region8: #{upconv_block_forward.7} parent=0 // pred_region
    _
  $region9: #{upconv_block_forward.7} parent=0 // pred_fallthru
    _
  // Predicated region
  $region10: #{upconv_block_forward.7} parent=0 // pred_check
    _
  $region11: #{upconv_block_forward.7} parent=0 // pred_check_branch
    %13 = sbr.rel (0) target = $region13
  $region12: #{upconv_block_forward.7} parent=0 // pred_region
    _
  $region13: #{upconv_block_forward.7} parent=0 // pred_fallthru
    _
  %v14 = vld [vmem:[%s0] sm:$0xf]
  %v15 = vld [vmem:[%s0 + $0x4] sm:$0xf]
  %v16 = vld [vmem:[%s0 + $0x8] sm:$0xf]
  %v17 = vld [vmem:[%s0 + $0xc] sm:$0xf]
  %v18 = vld [vmem:[%s0 + $0x10] sm:$0xf]
  %v19 = vld [vmem:[%s0 + $0x14] sm:$0xf]
  %v20 = vld [vmem:[%s0 + $0x18] sm:$0xf]
  %v21 = vld [vmem:[%s0 + $0x1c] sm:$0xf]
  %v22 = vld [vmem:[%s0 + $0x20] sm:$0xf]
  %v23 = vld [vmem:[%s0 + $0x24] sm:$0xf]
  %v24 = vld [vmem:[%s0 + $0x28] sm:$0xf]
  %v25 = vld [vmem:[%s0 + $0x2c] sm:$0xf]
  %v26 = vld [vmem:[%s0 + $0x30] sm:$0xf]
  %v27 = vld [vmem:[%s0 + $0x34] sm:$0xf]
  %v28 = vld [vmem:[%s0 + $0x38] sm:$0xf]
  %v29 = vld [vmem:[%s0 + $0x3c] sm:$0xf]
  %v30 = vld [vmem:[%s0 + $0x40] sm:$0xf]
  %v31 = vld [vmem:[%s0 + $0x44] sm:$0xf]
  %v32 = vld [vmem:[%s0 + $0x48] sm:$0xf]
  %v33 = vld [vmem:[%s0 + $0x4c] sm:$0xf]
  %v34 = vld [vmem:[%s0 + $0x50] sm:$0xf]
  %v35 = vld [vmem:[%s0 + $0x54] sm:$0xf]
  %v36 = vld [vmem:[%s0 + $0x58] sm:$0xf]
  %v37 = vld [vmem:[%s0 + $0x5c] sm:$0xf]
  %v38 = vld [vmem:[%s0 + $0x60] sm:$0xf]
  %v39 = vld [vmem:[%s0 + $0x64] sm:$0xf]
  %v40 = vld [vmem:[%s0 + $0x68] sm:$0xf]
  %v41 = vld [vmem:[%s0 + $0x6c] sm:$0xf]
  %v42 = vld [vmem:[%s0 + $0x70] sm:$0xf]
  %v43 = vld [vmem:[%s0 + $0x74] sm:$0xf]
  %v44 = vld [vmem:[%s0 + $0x78] sm:$0xf]
  %v45 = vld [vmem:[%s0 + $0x7c] sm:$0xf]
  %v46 = vld [vmem:[%s0 + $0x80] sm:$0xf]
  %v47 = vld [vmem:[%s0 + $0x84] sm:$0xf]
  %v48 = vld [vmem:[%s0 + $0x88] sm:$0xf]
  %v49 = vld [vmem:[%s0 + $0x8c] sm:$0xf]
  %v50 = vld [vmem:[%s0 + $0x90] sm:$0xf]
  %v51 = vld [vmem:[%s0 + $0x94] sm:$0xf]
  %v52 = vld [vmem:[%s0 + $0x98] sm:$0xf]
  %v53 = vld [vmem:[%s0 + $0x9c] sm:$0xf]
  %v54 = vld [vmem:[%s0 + $0xa0] sm:$0xf]
  %v55 = vld [vmem:[%s0 + $0xa4] sm:$0xf]
  %v56 = vld [vmem:[%s0 + $0xa8] sm:$0xf]
  %v57 = vld [vmem:[%s0 + $0xac] sm:$0xf]
  %v58 = vld [vmem:[%s0 + $0xb0] sm:$0xf]
  %v59 = vld [vmem:[%s0 + $0xb4] sm:$0xf]
  %v60 = vld [vmem:[%s0 + $0xb8] sm:$0xf]
  %v61 = vld [vmem:[%s0 + $0xbc] sm:$0xf]
  %v62 = vld [vmem:[%s0 + $0xc0] sm:$0xf]
  %v63 = vld [vmem:[%s0 + $0xc4] sm:$0xf]
  %v64 = vld [vmem:[%s0 + $0xc8] sm:$0xf]
  %v65 = vld [vmem:[%s0 + $0xcc] sm:$0xf]
  %v66 = vld [vmem:[%s0 + $0xd0] sm:$0xf]
  %v67 = vld [vmem:[%s0 + $0xd4] sm:$0xf]
  %v68 = vld [vmem:[%s0 + $0xd8] sm:$0xf]
  %v69 = vld [vmem:[%s0 + $0xdc] sm:$0xf]
  %v70 = vld [vmem:[%s0 + $0xe0] sm:$0xf]
  %v71 = vld [vmem:[%s0 + $0xe4] sm:$0xf]
  %v72 = vld [vmem:[%s0 + $0xe8] sm:$0xf]
  %v73 = vld [vmem:[%s0 + $0xec] sm:$0xf]
  %v74 = vld [vmem:[%s0 + $0xf0] sm:$0xf]
  %v75 = vld [vmem:[%s0 + $0xf4] sm:$0xf]
  %v76 = vld [vmem:[%s0 + $0xf8] sm:$0xf]
  %v77 = vld [vmem:[%s0 + $0xfc] sm:$0xf]
  %v78 = vunpack.c.l.bf16 %v14
  %v79 = vunpack.c.l.bf16 %v15
  %v80 = vunpack.c.l.bf16 %v16
  %v81 = vunpack.c.l.bf16 %v17
  %v82 = vunpack.c.l.bf16 %v18
  %v83 = vunpack.c.l.bf16 %v19
  %v84 = vunpack.c.l.bf16 %v20
  %v85 = vunpack.c.l.bf16 %v21
  %v86 = vunpack.c.l.bf16 %v22
  %v87 = vunpack.c.l.bf16 %v23
  %v88 = vunpack.c.l.bf16 %v24
  %v89 = vunpack.c.l.bf16 %v25
  %v90 = vunpack.c.l.bf16 %v26
  %v91 = vunpack.c.l.bf16 %v27
  %v92 = vunpack.c.l.bf16 %v28
  %v93 = vunpack.c.l.bf16 %v29
  %v94 = vunpack.c.l.bf16 %v30
  %v95 = vunpack.c.l.bf16 %v31
  %v96 = vunpack.c.l.bf16 %v32
  %v97 = vunpack.c.l.bf16 %v33
  %v98 = vunpack.c.l.bf16 %v34
  %v99 = vunpack.c.l.bf16 %v35
  %v100 = vunpack.c.l.bf16 %v36
  %v101 = vunpack.c.l.bf16 %v37
  %v102 = vunpack.c.l.bf16 %v38
  %v103 = vunpack.c.l.bf16 %v39
  %v104 = vunpack.c.l.bf16 %v40
  %v105 = vunpack.c.l.bf16 %v41
  %v106 = vunpack.c.l.bf16 %v42
  %v107 = vunpack.c.l.bf16 %v43
  %v108 = vunpack.c.l.bf16 %v44
  %v109 = vunpack.c.l.bf16 %v45
  %v110 = vunpack.c.l.bf16 %v46
  %v111 = vunpack.c.l.bf16 %v47
  %v112 = vunpack.c.l.bf16 %v48
  %v113 = vunpack.c.l.bf16 %v49
  %v114 = vunpack.c.l.bf16 %v50
  %v115 = vunpack.c.l.bf16 %v51
  %v116 = vunpack.c.l.bf16 %v52
  %v117 = vunpack.c.l.bf16 %v53
  %v118 = vunpack.c.l.bf16 %v54
  %v119 = vunpack.c.l.bf16 %v55
  %v120 = vunpack.c.l.bf16 %v56
  %v121 = vunpack.c.l.bf16 %v57
  %v122 = vunpack.c.l.bf16 %v58
  %v123 = vunpack.c.l.bf16 %v59
  %v124 = vunpack.c.l.bf16 %v60
  %v125 = vunpack.c.l.bf16 %v61
  %v126 = vunpack.c.l.bf16 %v62
  %v127 = vunpack.c.l.bf16 %v63
  %v128 = vunpack.c.l.bf16 %v64
  %v129 = vunpack.c.l.bf16 %v65
  %v130 = vunpack.c.l.bf16 %v66
  %v131 = vunpack.c.l.bf16 %v67
  %v132 = vunpack.c.l.bf16 %v68
  %v133 = vunpack.c.l.bf16 %v69
  %v134 = vunpack.c.l.bf16 %v70
  %v135 = vunpack.c.l.bf16 %v71
  %v136 = vunpack.c.l.bf16 %v72
  %v137 = vunpack.c.l.bf16 %v73
  %v138 = vunpack.c.l.bf16 %v74
  %v139 = vunpack.c.l.bf16 %v75
  %v140 = vunpack.c.l.bf16 %v76
  %v141 = vunpack.c.l.bf16 %v77
  %v142 = vld [vmem:[%s1] sm:$0x1]
  %v144 = vlaneseq
  %v145 = vshrl.u32 %v144, 7
  %v146 = vsub.s32 0, %v145
  %v147 = vrot.slane %v142, %v146
  %v149 = vmul.f32 %v78, %v147
  %v150 = vmul.f32 %v79, %v147
  %v151 = vmul.f32 %v80, %v147
  %v152 = vmul.f32 %v81, %v147
  %v153 = vmul.f32 %v82, %v147
  %v154 = vmul.f32 %v83, %v147
  %v155 = vmul.f32 %v84, %v147
  %v156 = vmul.f32 %v85, %v147
  %v157 = vmul.f32 %v86, %v147
  %v158 = vmul.f32 %v87, %v147
  %v159 = vmul.f32 %v88, %v147
  %v160 = vmul.f32 %v89, %v147
  %v161 = vmul.f32 %v90, %v147
  %v162 = vmul.f32 %v91, %v147
  %v163 = vmul.f32 %v92, %v147
  %v164 = vmul.f32 %v93, %v147
  %v165 = vmul.f32 %v94, %v147
  %v166 = vmul.f32 %v95, %v147
  %v167 = vmul.f32 %v96, %v147
  %v168 = vmul.f32 %v97, %v147
  %v169 = vmul.f32 %v98, %v147
  %v170 = vmul.f32 %v99, %v147
  %v171 = vmul.f32 %v100, %v147
  %v172 = vmul.f32 %v101, %v147
  %v173 = vmul.f32 %v102, %v147
  %v174 = vmul.f32 %v103, %v147
  %v175 = vmul.f32 %v104, %v147
  %v176 = vmul.f32 %v105, %v147
  %v177 = vmul.f32 %v106, %v147
  %v178 = vmul.f32 %v107, %v147
  %v179 = vmul.f32 %v108, %v147
  %v180 = vmul.f32 %v109, %v147
  %v181 = vmul.f32 %v110, %v147
  %v182 = vmul.f32 %v111, %v147
  %v183 = vmul.f32 %v112, %v147
  %v184 = vmul.f32 %v113, %v147
  %v185 = vmul.f32 %v114, %v147
  %v186 = vmul.f32 %v115, %v147
  %v187 = vmul.f32 %v116, %v147
  %v188 = vmul.f32 %v117, %v147
  %v189 = vmul.f32 %v118, %v147
  %v190 = vmul.f32 %v119, %v147
  %v191 = vmul.f32 %v120, %v147
  %v192 = vmul.f32 %v121, %v147
  %v193 = vmul.f32 %v122, %v147
  %v194 = vmul.f32 %v123, %v147
  %v195 = vmul.f32 %v124, %v147
  %v196 = vmul.f32 %v125, %v147
  %v197 = vmul.f32 %v126, %v147
  %v198 = vmul.f32 %v127, %v147
  %v199 = vmul.f32 %v128, %v147
  %v200 = vmul.f32 %v129, %v147
  %v201 = vmul.f32 %v130, %v147
  %v202 = vmul.f32 %v131, %v147
  %v203 = vmul.f32 %v132, %v147
  %v204 = vmul.f32 %v133, %v147
  %v205 = vmul.f32 %v134, %v147
  %v206 = vmul.f32 %v135, %v147
  %v207 = vmul.f32 %v136, %v147
  %v208 = vmul.f32 %v137, %v147
  %v209 = vmul.f32 %v138, %v147
  %v210 = vmul.f32 %v139, %v147
  %v211 = vmul.f32 %v140, %v147
  %v212 = vmul.f32 %v141, %v147
  %v213 = vld [vmem:[%s2] sm:$0x1]
  %v215 = vlaneseq
  %v216 = vshrl.u32 %v215, 7
  %v217 = vsub.s32 0, %v216
  %v218 = vrot.slane %v213, %v217
  %v220 = vadd.f32 %v149, %v218
  %v221 = vadd.f32 %v150, %v218
  %v222 = vadd.f32 %v151, %v218
  %v223 = vadd.f32 %v152, %v218
  %v224 = vadd.f32 %v153, %v218
  %v225 = vadd.f32 %v154, %v218
  %v226 = vadd.f32 %v155, %v218
  %v227 = vadd.f32 %v156, %v218
  %v228 = vadd.f32 %v157, %v218
  %v229 = vadd.f32 %v158, %v218
  %v230 = vadd.f32 %v159, %v218
  %v231 = vadd.f32 %v160, %v218
  %v232 = vadd.f32 %v161, %v218
  %v233 = vadd.f32 %v162, %v218
  %v234 = vadd.f32 %v163, %v218
  %v235 = vadd.f32 %v164, %v218
  %v236 = vadd.f32 %v165, %v218
  %v237 = vadd.f32 %v166, %v218
  %v238 = vadd.f32 %v167, %v218
  %v239 = vadd.f32 %v168, %v218
  %v240 = vadd.f32 %v169, %v218
  %v241 = vadd.f32 %v170, %v218
  %v242 = vadd.f32 %v171, %v218
  %v243 = vadd.f32 %v172, %v218
  %v244 = vadd.f32 %v173, %v218
  %v245 = vadd.f32 %v174, %v218
  %v246 = vadd.f32 %v175, %v218
  %v247 = vadd.f32 %v176, %v218
  %v248 = vadd.f32 %v177, %v218
  %v249 = vadd.f32 %v178, %v218
  %v250 = vadd.f32 %v179, %v218
  %v251 = vadd.f32 %v180, %v218
  %v252 = vadd.f32 %v181, %v218
  %v253 = vadd.f32 %v182, %v218
  %v254 = vadd.f32 %v183, %v218
  %v255 = vadd.f32 %v184, %v218
  %v256 = vadd.f32 %v185, %v218
  %v257 = vadd.f32 %v186, %v218
  %v258 = vadd.f32 %v187, %v218
  %v259 = vadd.f32 %v188, %v218
  %v260 = vadd.f32 %v189, %v218
  %v261 = vadd.f32 %v190, %v218
  %v262 = vadd.f32 %v191, %v218
  %v263 = vadd.f32 %v192, %v218
  %v264 = vadd.f32 %v193, %v218
  %v265 = vadd.f32 %v194, %v218
  %v266 = vadd.f32 %v195, %v218
  %v267 = vadd.f32 %v196, %v218
  %v268 = vadd.f32 %v197, %v218
  %v269 = vadd.f32 %v198, %v218
  %v270 = vadd.f32 %v199, %v218
  %v271 = vadd.f32 %v200, %v218
  %v272 = vadd.f32 %v201, %v218
  %v273 = vadd.f32 %v202, %v218
  %v274 = vadd.f32 %v203, %v218
  %v275 = vadd.f32 %v204, %v218
  %v276 = vadd.f32 %v205, %v218
  %v277 = vadd.f32 %v206, %v218
  %v278 = vadd.f32 %v207, %v218
  %v279 = vadd.f32 %v208, %v218
  %v280 = vadd.f32 %v209, %v218
  %v281 = vadd.f32 %v210, %v218
  %v282 = vadd.f32 %v211, %v218
  %v283 = vadd.f32 %v212, %v218
  %vm284 = vcmp.ge.f32.partialorder %v220, 0.0
  %vm285 = vcmp.ge.f32.partialorder %v221, 0.0
  %vm286 = vcmp.ge.f32.partialorder %v222, 0.0
  %vm287 = vcmp.ge.f32.partialorder %v223, 0.0
  %vm288 = vcmp.ge.f32.partialorder %v224, 0.0
  %vm289 = vcmp.ge.f32.partialorder %v225, 0.0
  %vm290 = vcmp.ge.f32.partialorder %v226, 0.0
  %vm291 = vcmp.ge.f32.partialorder %v227, 0.0
  %vm292 = vcmp.ge.f32.partialorder %v228, 0.0
  %vm293 = vcmp.ge.f32.partialorder %v229, 0.0
  %vm294 = vcmp.ge.f32.partialorder %v230, 0.0
  %vm295 = vcmp.ge.f32.partialorder %v231, 0.0
  %vm296 = vcmp.ge.f32.partialorder %v232, 0.0
  %vm297 = vcmp.ge.f32.partialorder %v233, 0.0
  %vm298 = vcmp.ge.f32.partialorder %v234, 0.0
  %vm299 = vcmp.ge.f32.partialorder %v235, 0.0
  %vm300 = vcmp.ge.f32.partialorder %v236, 0.0
  %vm301 = vcmp.ge.f32.partialorder %v237, 0.0
  %vm302 = vcmp.ge.f32.partialorder %v238, 0.0
  %vm303 = vcmp.ge.f32.partialorder %v239, 0.0
  %vm304 = vcmp.ge.f32.partialorder %v240, 0.0
  %vm305 = vcmp.ge.f32.partialorder %v241, 0.0
  %vm306 = vcmp.ge.f32.partialorder %v242, 0.0
  %vm307 = vcmp.ge.f32.partialorder %v243, 0.0
  %vm308 = vcmp.ge.f32.partialorder %v244, 0.0
  %vm309 = vcmp.ge.f32.partialorder %v245, 0.0
  %vm310 = vcmp.ge.f32.partialorder %v246, 0.0
  %vm311 = vcmp.ge.f32.partialorder %v247, 0.0
  %vm312 = vcmp.ge.f32.partialorder %v248, 0.0
  %vm313 = vcmp.ge.f32.partialorder %v249, 0.0
  %vm314 = vcmp.ge.f32.partialorder %v250, 0.0
  %vm315 = vcmp.ge.f32.partialorder %v251, 0.0
  %vm316 = vcmp.ge.f32.partialorder %v252, 0.0
  %vm317 = vcmp.ge.f32.partialorder %v253, 0.0
  %vm318 = vcmp.ge.f32.partialorder %v254, 0.0
  %vm319 = vcmp.ge.f32.partialorder %v255, 0.0
  %vm320 = vcmp.ge.f32.partialorder %v256, 0.0
  %vm321 = vcmp.ge.f32.partialorder %v257, 0.0
  %vm322 = vcmp.ge.f32.partialorder %v258, 0.0
  %vm323 = vcmp.ge.f32.partialorder %v259, 0.0
  %vm324 = vcmp.ge.f32.partialorder %v260, 0.0
  %vm325 = vcmp.ge.f32.partialorder %v261, 0.0
  %vm326 = vcmp.ge.f32.partialorder %v262, 0.0
  %vm327 = vcmp.ge.f32.partialorder %v263, 0.0
  %vm328 = vcmp.ge.f32.partialorder %v264, 0.0
  %vm329 = vcmp.ge.f32.partialorder %v265, 0.0
  %vm330 = vcmp.ge.f32.partialorder %v266, 0.0
  %vm331 = vcmp.ge.f32.partialorder %v267, 0.0
  %vm332 = vcmp.ge.f32.partialorder %v268, 0.0
  %vm333 = vcmp.ge.f32.partialorder %v269, 0.0
  %vm334 = vcmp.ge.f32.partialorder %v270, 0.0
  %vm335 = vcmp.ge.f32.partialorder %v271, 0.0
  %vm336 = vcmp.ge.f32.partialorder %v272, 0.0
  %vm337 = vcmp.ge.f32.partialorder %v273, 0.0
  %vm338 = vcmp.ge.f32.partialorder %v274, 0.0
  %vm339 = vcmp.ge.f32.partialorder %v275, 0.0
  %vm340 = vcmp.ge.f32.partialorder %v276, 0.0
  %vm341 = vcmp.ge.f32.partialorder %v277, 0.0
  %vm342 = vcmp.ge.f32.partialorder %v278, 0.0
  %vm343 = vcmp.ge.f32.partialorder %v279, 0.0
  %vm344 = vcmp.ge.f32.partialorder %v280, 0.0
  %vm345 = vcmp.ge.f32.partialorder %v281, 0.0
  %vm346 = vcmp.ge.f32.partialorder %v282, 0.0
  %vm347 = vcmp.ge.f32.partialorder %v283, 0.0
  %v348 = vmul.f32 %v220, 0.01
  %v349 = vmul.f32 %v221, 0.01
  %v350 = vmul.f32 %v222, 0.01
  %v351 = vmul.f32 %v223, 0.01
  %v352 = vmul.f32 %v224, 0.01
  %v353 = vmul.f32 %v225, 0.01
  %v354 = vmul.f32 %v226, 0.01
  %v355 = vmul.f32 %v227, 0.01
  %v356 = vmul.f32 %v228, 0.01
  %v357 = vmul.f32 %v229, 0.01
  %v358 = vmul.f32 %v230, 0.01
  %v359 = vmul.f32 %v231, 0.01
  %v360 = vmul.f32 %v232, 0.01
  %v361 = vmul.f32 %v233, 0.01
  %v362 = vmul.f32 %v234, 0.01
  %v363 = vmul.f32 %v235, 0.01
  %v364 = vmul.f32 %v236, 0.01
  %v365 = vmul.f32 %v237, 0.01
  %v366 = vmul.f32 %v238, 0.01
  %v367 = vmul.f32 %v239, 0.01
  %v368 = vmul.f32 %v240, 0.01
  %v369 = vmul.f32 %v241, 0.01
  %v370 = vmul.f32 %v242, 0.01
  %v371 = vmul.f32 %v243, 0.01
  %v372 = vmul.f32 %v244, 0.01
  %v373 = vmul.f32 %v245, 0.01
  %v374 = vmul.f32 %v246, 0.01
  %v375 = vmul.f32 %v247, 0.01
  %v376 = vmul.f32 %v248, 0.01
  %v377 = vmul.f32 %v249, 0.01
  %v378 = vmul.f32 %v250, 0.01
  %v379 = vmul.f32 %v251, 0.01
  %v380 = vmul.f32 %v252, 0.01
  %v381 = vmul.f32 %v253, 0.01
  %v382 = vmul.f32 %v254, 0.01
  %v383 = vmul.f32 %v255, 0.01
  %v384 = vmul.f32 %v256, 0.01
  %v385 = vmul.f32 %v257, 0.01
  %v386 = vmul.f32 %v258, 0.01
  %v387 = vmul.f32 %v259, 0.01
  %v388 = vmul.f32 %v260, 0.01
  %v389 = vmul.f32 %v261, 0.01
  %v390 = vmul.f32 %v262, 0.01
  %v391 = vmul.f32 %v263, 0.01
  %v392 = vmul.f32 %v264, 0.01
  %v393 = vmul.f32 %v265, 0.01
  %v394 = vmul.f32 %v266, 0.01
  %v395 = vmul.f32 %v267, 0.01
  %v396 = vmul.f32 %v268, 0.01
  %v397 = vmul.f32 %v269, 0.01
  %v398 = vmul.f32 %v270, 0.01
  %v399 = vmul.f32 %v271, 0.01
  %v400 = vmul.f32 %v272, 0.01
  %v401 = vmul.f32 %v273, 0.01
  %v402 = vmul.f32 %v274, 0.01
  %v403 = vmul.f32 %v275, 0.01
  %v404 = vmul.f32 %v276, 0.01
  %v405 = vmul.f32 %v277, 0.01
  %v406 = vmul.f32 %v278, 0.01
  %v407 = vmul.f32 %v279, 0.01
  %v408 = vmul.f32 %v280, 0.01
  %v409 = vmul.f32 %v281, 0.01
  %v410 = vmul.f32 %v282, 0.01
  %v411 = vmul.f32 %v283, 0.01
  %v412 = vsel %vm284, %v220, %v348
  %v413 = vsel %vm285, %v221, %v349
  %v414 = vsel %vm286, %v222, %v350
  %v415 = vsel %vm287, %v223, %v351
  %v416 = vsel %vm288, %v224, %v352
  %v417 = vsel %vm289, %v225, %v353
  %v418 = vsel %vm290, %v226, %v354
  %v419 = vsel %vm291, %v227, %v355
  %v420 = vsel %vm292, %v228, %v356
  %v421 = vsel %vm293, %v229, %v357
  %v422 = vsel %vm294, %v230, %v358
  %v423 = vsel %vm295, %v231, %v359
  %v424 = vsel %vm296, %v232, %v360
  %v425 = vsel %vm297, %v233, %v361
  %v426 = vsel %vm298, %v234, %v362
  %v427 = vsel %vm299, %v235, %v363
  %v428 = vsel %vm300, %v236, %v364
  %v429 = vsel %vm301, %v237, %v365
  %v430 = vsel %vm302, %v238, %v366
  %v431 = vsel %vm303, %v239, %v367
  %v432 = vsel %vm304, %v240, %v368
  %v433 = vsel %vm305, %v241, %v369
  %v434 = vsel %vm306, %v242, %v370
  %v435 = vsel %vm307, %v243, %v371
  %v436 = vsel %vm308, %v244, %v372
  %v437 = vsel %vm309, %v245, %v373
  %v438 = vsel %vm310, %v246, %v374
  %v439 = vsel %vm311, %v247, %v375
  %v440 = vsel %vm312, %v248, %v376
  %v441 = vsel %vm313, %v249, %v377
  %v442 = vsel %vm314, %v250, %v378
  %v443 = vsel %vm315, %v251, %v379
  %v444 = vsel %vm316, %v252, %v380
  %v445 = vsel %vm317, %v253, %v381
  %v446 = vsel %vm318, %v254, %v382
  %v447 = vsel %vm319, %v255, %v383
  %v448 = vsel %vm320, %v256, %v384
  %v449 = vsel %vm321, %v257, %v385
  %v450 = vsel %vm322, %v258, %v386
  %v451 = vsel %vm323, %v259, %v387
  %v452 = vsel %vm324, %v260, %v388
  %v453 = vsel %vm325, %v261, %v389
  %v454 = vsel %vm326, %v262, %v390
  %v455 = vsel %vm327, %v263, %v391
  %v456 = vsel %vm328, %v264, %v392
  %v457 = vsel %vm329, %v265, %v393
  %v458 = vsel %vm330, %v266, %v394
  %v459 = vsel %vm331, %v267, %v395
  %v460 = vsel %vm332, %v268, %v396
  %v461 = vsel %vm333, %v269, %v397
  %v462 = vsel %vm334, %v270, %v398
  %v463 = vsel %vm335, %v271, %v399
  %v464 = vsel %vm336, %v272, %v400
  %v465 = vsel %vm337, %v273, %v401
  %v466 = vsel %vm338, %v274, %v402
  %v467 = vsel %vm339, %v275, %v403
  %v468 = vsel %vm340, %v276, %v404
  %v469 = vsel %vm341, %v277, %v405
  %v470 = vsel %vm342, %v278, %v406
  %v471 = vsel %vm343, %v279, %v407
  %v472 = vsel %vm344, %v280, %v408
  %v473 = vsel %vm345, %v281, %v409
  %v474 = vsel %vm346, %v282, %v410
  %v475 = vsel %vm347, %v283, %v411
  %476 = vst [vmem:[%s3] sm:$0xff] %v412
  %477 = vst [vmem:[%s3 + $0x8] sm:$0xff] %v413
  %478 = vst [vmem:[%s3 + $0x10] sm:$0xff] %v414
  %479 = vst [vmem:[%s3 + $0x18] sm:$0xff] %v415
  %480 = vst [vmem:[%s3 + $0x20] sm:$0xff] %v416
  %481 = vst [vmem:[%s3 + $0x28] sm:$0xff] %v417
  %482 = vst [vmem:[%s3 + $0x30] sm:$0xff] %v418
  %483 = vst [vmem:[%s3 + $0x38] sm:$0xff] %v419
  %484 = vst [vmem:[%s3 + $0x40] sm:$0xff] %v420
  %485 = vst [vmem:[%s3 + $0x48] sm:$0xff] %v421
  %486 = vst [vmem:[%s3 + $0x50] sm:$0xff] %v422
  %487 = vst [vmem:[%s3 + $0x58] sm:$0xff] %v423
  %488 = vst [vmem:[%s3 + $0x60] sm:$0xff] %v424
  %489 = vst [vmem:[%s3 + $0x68] sm:$0xff] %v425
  %490 = vst [vmem:[%s3 + $0x70] sm:$0xff] %v426
  %491 = vst [vmem:[%s3 + $0x78] sm:$0xff] %v427
  %492 = vst [vmem:[%s3 + $0x80] sm:$0xff] %v428
  %493 = vst [vmem:[%s3 + $0x88] sm:$0xff] %v429
  %494 = vst [vmem:[%s3 + $0x90] sm:$0xff] %v430
  %495 = vst [vmem:[%s3 + $0x98] sm:$0xff] %v431
  %496 = vst [vmem:[%s3 + $0xa0] sm:$0xff] %v432
  %497 = vst [vmem:[%s3 + $0xa8] sm:$0xff] %v433
  %498 = vst [vmem:[%s3 + $0xb0] sm:$0xff] %v434
  %499 = vst [vmem:[%s3 + $0xb8] sm:$0xff] %v435
  %500 = vst [vmem:[%s3 + $0xc0] sm:$0xff] %v436
  %501 = vst [vmem:[%s3 + $0xc8] sm:$0xff] %v437
  %502 = vst [vmem:[%s3 + $0xd0] sm:$0xff] %v438
  %503 = vst [vmem:[%s3 + $0xd8] sm:$0xff] %v439
  %504 = vst [vmem:[%s3 + $0xe0] sm:$0xff] %v440
  %505 = vst [vmem:[%s3 + $0xe8] sm:$0xff] %v441
  %506 = vst [vmem:[%s3 + $0xf0] sm:$0xff] %v442
  %507 = vst [vmem:[%s3 + $0xf8] sm:$0xff] %v443
  %508 = vst [vmem:[%s3 + $0x100] sm:$0xff] %v444
  %509 = vst [vmem:[%s3 + $0x108] sm:$0xff] %v445
  %510 = vst [vmem:[%s3 + $0x110] sm:$0xff] %v446
  %511 = vst [vmem:[%s3 + $0x118] sm:$0xff] %v447
  %512 = vst [vmem:[%s3 + $0x120] sm:$0xff] %v448
  %513 = vst [vmem:[%s3 + $0x128] sm:$0xff] %v449
  %514 = vst [vmem:[%s3 + $0x130] sm:$0xff] %v450
  %515 = vst [vmem:[%s3 + $0x138] sm:$0xff] %v451
  %516 = vst [vmem:[%s3 + $0x140] sm:$0xff] %v452
  %517 = vst [vmem:[%s3 + $0x148] sm:$0xff] %v453
  %518 = vst [vmem:[%s3 + $0x150] sm:$0xff] %v454
  %519 = vst [vmem:[%s3 + $0x158] sm:$0xff] %v455
  %520 = vst [vmem:[%s3 + $0x160] sm:$0xff] %v456
  %521 = vst [vmem:[%s3 + $0x168] sm:$0xff] %v457
  %522 = vst [vmem:[%s3 + $0x170] sm:$0xff] %v458
  %523 = vst [vmem:[%s3 + $0x178] sm:$0xff] %v459
  %524 = vst [vmem:[%s3 + $0x180] sm:$0xff] %v460
  %525 = vst [vmem:[%s3 + $0x188] sm:$0xff] %v461
  %526 = vst [vmem:[%s3 + $0x190] sm:$0xff] %v462
  %527 = vst [vmem:[%s3 + $0x198] sm:$0xff] %v463
  %528 = vst [vmem:[%s3 + $0x1a0] sm:$0xff] %v464
  %529 = vst [vmem:[%s3 + $0x1a8] sm:$0xff] %v465
  %530 = vst [vmem:[%s3 + $0x1b0] sm:$0xff] %v466
  %531 = vst [vmem:[%s3 + $0x1b8] sm:$0xff] %v467
  %532 = vst [vmem:[%s3 + $0x1c0] sm:$0xff] %v468
  %533 = vst [vmem:[%s3 + $0x1c8] sm:$0xff] %v469
  %534 = vst [vmem:[%s3 + $0x1d0] sm:$0xff] %v470
  %535 = vst [vmem:[%s3 + $0x1d8] sm:$0xff] %v471
  %536 = vst [vmem:[%s3 + $0x1e0] sm:$0xff] %v472
  %537 = vst [vmem:[%s3 + $0x1e8] sm:$0xff] %v473
  %538 = vst [vmem:[%s3 + $0x1f0] sm:$0xff] %v474
  %539 = vst [vmem:[%s3 + $0x1f8] sm:$0xff] %v475
  // Predicated region
  $region14: #{upconv_block_forward.7} parent=0 // pred_check
    _
  $region15: #{upconv_block_forward.7} parent=0 // pred_check_branch
    %541 = sbr.rel (0) target = $region17
  $region16: #{upconv_block_forward.7} parent=0 // pred_region
    _
  $region17: #{upconv_block_forward.7} parent=0 // pred_fallthru
    _
  // Predicated region
  $region18: #{upconv_block_forward.7} parent=0 // pred_check
    _
  $region19: #{upconv_block_forward.7} parent=0 // pred_check_branch
    %543 = sbr.rel (0) target = $region21
  $region20: #{upconv_block_forward.7} parent=0 // pred_region
    _
  $region21: #{upconv_block_forward.7} parent=0 // pred_fallthru
    _

// kernel: upconv_block_forward.6
$region0: #{upconv_block_forward.6}
  #allocation0 [shape = 'u32[]', space=smem, size = 0x4, offset = 0x4, fixed_abs, tag = 'smem constant byte address 0x4 - core index']
  #allocation1 [shape = 'u32[144,128]{1,0:T(1,128)}', space=vmem, size = 0x12000, scoped, tag = 'internal scratch']
  #allocation2 [shape = 'bf16[10,18,128]{2,1,0:T(8,128)(2,1)}', space=vmem, size = 0xf000, scoped, tag = 'scratch operand']
  %s0 = inlined_call_operand.vmem [shape: bf16[2,16,16,128], index: 0, kind: input, shape index: {}, may-alias: {0,1,2}]
  %s1 = inlined_call_operand.vmem [shape: bf16[2,16,16,128], index: 1, kind: input, shape index: {}, may-alias: {0,1,2}]
  %s2 = inlined_call_operand.vmem [shape: bf16[2,16,16,128], index: 2, kind: input, shape index: {}, may-alias: {0,1,2}]
  %s3 = inlined_call_operand.vmem [shape: bf16[3,3,128,128], index: 3, kind: input, shape index: {}]
  %s4 = inlined_call_operand.vmem [shape: f32[1,128], index: 4, kind: input, shape index: {}]
  %s5 = inlined_call_operand.vmem [shape: f32[3,128], index: 5, kind: input, shape index: {}]
  %s6 = inlined_call_operand.vmem [shape: bf16[2,16,16,128], index: 6, kind: output, shape index: {0}]
  %s7 = inlined_call_operand.vmem [shape: f32[2,2,2,128], index: 7, kind: output, shape index: {1}]
  %8 = xla_tuple %s6, %s7
  %s9 = sld [smem:[#allocation0]]
  $region80: #{upconv_block_forward.6} parent=0
    _
  %s11 = ssub.s32 1, %s9
  %s12 = scalar_select 0, %s11, %s9
  loop: start=0, step=1, limit=6
  $region2: #{upconv_block_forward.6} parent=0 // loop_pre_header
    _
  $region3: #{upconv_block_forward.6} parent=0 // loop_header
    %s14 = sphi 0, %s18
    %p15 = scmp.ge.s32.totalorder %s14, 6
    %s21 = sphi 0, %s33
    %s22 = sphi 0, %s29
    %s23 = sphi 0, %s21
    %s24 = sphi 0, %s22
    %s25 = sphi 0, %s23
    %s26 = sphi 0, %s24
    %s38 = sphi 0, %s40
    %s41 = sphi 0, %s38
    %s42 = sphi 0, %s41
    %s58 = sphi 0, %s42
    %s74 = sphi 0, %s76
    %s77 = sphi 0, %s74
    %s78 = sphi 0, %s77
    %s94 = sphi 0, %s78
    %s110 = sphi 0, %s112
    %s113 = sphi 0, %s110
    %s114 = sphi 0, %s113
    %s130 = sphi 0, %s114
    %s134 = sphi 0, %s134
    %s136 = sphi 0, %s134
    %s137 = sphi 0, %s136
    %s151 = sphi 0, %s137
    %s155 = sphi 0, %s155
    %s157 = sphi 0, %s155
    %s158 = sphi 0, %s157
    %s172 = sphi 0, %s158
    %s176 = sphi 0, %s176
    %s178 = sphi 0, %s176
    %s179 = sphi 0, %s178
    %s193 = sphi 0, %s179
    %s201 = sphi 0, %s203
    %s204 = sphi 0, %s201
    %s205 = sphi 0, %s204
    %s221 = sphi 0, %s205
    %s229 = sphi 0, %s231
    %s232 = sphi 0, %s229
    %s233 = sphi 0, %s232
    %s249 = sphi 0, %s233
  $region4: #{upconv_block_forward.6} parent=0 // loop_header_branch
    %17 = sbr.rel (%p15) target = $region8
  $region5: #{upconv_block_forward.6} parent=0 // loop_body
    %s19 = ssub.s32 %s14, 1
    %s20 = ssub.s32 %s14, 2
    %s27 = sadd.s32 1, %s22
    %p28 = scmp.ge.s32.totalorder %s27, 2
    %s29 = scalar_select %p28, 0, %s27
    %s30 = sadd.s32 1, %s21
    %s31 = scalar_select %p28, %s30, %s21
    %p32 = scmp.ge.s32.totalorder %s31, 2
    %s33 = scalar_select %p32, 0, %s31
    %s34 = ssub.s32 %s21, %s33
    %s35 = ssub.s32 %s22, %s29
    %s36 = sor.u32 %s34, %s35
    %p37 = scmp.eq.s32.totalorder %s36, 0
    %s39 = sadd.s32 %s38, 1
    %s40 = scalar_select %p37, %s38, %s39
    %p43 = pneg %p37
    %p44 = scmp.eq.s32.totalorder %s14, 3
    %p45 = por %p43, %p44
    %p46 = scmp.ne.s32.totalorder %s38, %s41
    %p47 = scmp.eq.s32.totalorder %s14, 0
    %p48 = por %p46, %p47
    %p49 = scmp.ne.s32.totalorder %s38, %s41
    %p50 = scmp.eq.s32.totalorder %s19, 3
    %p51 = por %p49, %p50
    %p52 = scmp.ne.s32.totalorder %s41, %s42
    %p53 = scmp.eq.s32.totalorder %s19, 0
    %p54 = por %p52, %p53
    %p55 = scmp.ne.s32.totalorder %s41, %s42
    %p56 = scmp.eq.s32.totalorder %s20, 3
    %p57 = por %p55, %p56
    %p59 = scmp.ne.s32.totalorder %s42, %s58
    %p60 = scmp.eq.s32.totalorder %s20, 0
    %p61 = por %p59, %p60
    %s62 = smul.u32 %s22, 8
    %s63 = ssub.s32 %s62, 1
    %p64 = scmp.gt.s32.totalorder %s63, 0
    %s65 = scalar_select %p64, %s63, 0
    %s66 = smul.u32 %s29, 8
    %s67 = ssub.s32 %s66, 1
    %p68 = scmp.gt.s32.totalorder %s67, 0
    %s69 = scalar_select %p68, %s67, 0
    %s70 = ssub.s32 %s21, %s33
    %s71 = ssub.s32 %s65, %s69
    %s72 = sor.u32 %s70, %s71
    %p73 = scmp.eq.s32.totalorder %s72, 0
    %s75 = sadd.s32 %s74, 1
    %s76 = scalar_select %p73, %s74, %s75
    %p79 = pneg %p73
    %p80 = scmp.eq.s32.totalorder %s14, 3
    %p81 = por %p79, %p80
    %p82 = scmp.ne.s32.totalorder %s74, %s77
    %p83 = scmp.eq.s32.totalorder %s14, 0
    %p84 = por %p82, %p83
    %p85 = scmp.ne.s32.totalorder %s74, %s77
    %p86 = scmp.eq.s32.totalorder %s19, 3
    %p87 = por %p85, %p86
    %p88 = scmp.ne.s32.totalorder %s77, %s78
    %p89 = scmp.eq.s32.totalorder %s19, 0
    %p90 = por %p88, %p89
    %p91 = scmp.ne.s32.totalorder %s77, %s78
    %p92 = scmp.eq.s32.totalorder %s20, 3
    %p93 = por %p91, %p92
    %p95 = scmp.ne.s32.totalorder %s78, %s94
    %p96 = scmp.eq.s32.totalorder %s20, 0
    %p97 = por %p95, %p96
    %s98 = sadd.s32 %s22, 1
    %s99 = smul.u32 %s98, 8
    %p100 = scmp.lt.s32.totalorder %s99, 15
    %s101 = scalar_select %p100, %s99, 15
    %s102 = sadd.s32 %s29, 1
    %s103 = smul.u32 %s102, 8
    %p104 = scmp.lt.s32.totalorder %s103, 15
    %s105 = scalar_select %p104, %s103, 15
    %s106 = ssub.s32 %s21, %s33
    %s107 = ssub.s32 %s101, %s105
    %s108 = sor.u32 %s106, %s107
    %p109 = scmp.eq.s32.totalorder %s108, 0
    %s111 = sadd.s32 %s110, 1
    %s112 = scalar_select %p109, %s110, %s111
    %p115 = pneg %p109
    %p116 = scmp.eq.s32.totalorder %s14, 3
    %p117 = por %p115, %p116
    %p118 = scmp.ne.s32.totalorder %s110, %s113
    %p119 = scmp.eq.s32.totalorder %s14, 0
    %p120 = por %p118, %p119
    %p121 = scmp.ne.s32.totalorder %s110, %s113
    %p122 = scmp.eq.s32.totalorder %s19, 3
    %p123 = por %p121, %p122
    %p124 = scmp.ne.s32.totalorder %s113, %s114
    %p125 = scmp.eq.s32.totalorder %s19, 0
    %p126 = por %p124, %p125
    %p127 = scmp.ne.s32.totalorder %s113, %s114
    %p128 = scmp.eq.s32.totalorder %s20, 3
    %p129 = por %p127, %p128
    %p131 = scmp.ne.s32.totalorder %s114, %s130
    %p132 = scmp.eq.s32.totalorder %s20, 0
    %p133 = por %p131, %p132
    %s135 = sadd.s32 %s134, 1
    %p138 = scmp.eq.s32.totalorder %s14, 3
    %p139 = scmp.ne.s32.totalorder %s134, %s136
    %p140 = scmp.eq.s32.totalorder %s14, 0
    %p141 = por %p139, %p140
    %p142 = scmp.ne.s32.totalorder %s134, %s136
    %p143 = scmp.eq.s32.totalorder %s19, 3
    %p144 = por %p142, %p143
    %p145 = scmp.ne.s32.totalorder %s136, %s137
    %p146 = scmp.eq.s32.totalorder %s19, 0
    %p147 = por %p145, %p146
    %p148 = scmp.ne.s32.totalorder %s136, %s137
    %p149 = scmp.eq.s32.totalorder %s20, 3
    %p150 = por %p148, %p149
    %p152 = scmp.ne.s32.totalorder %s137, %s151
    %p153 = scmp.eq.s32.totalorder %s20, 0
    %p154 = por %p152, %p153
    %s156 = sadd.s32 %s155, 1
    %p159 = scmp.eq.s32.totalorder %s14, 3
    %p160 = scmp.ne.s32.totalorder %s155, %s157
    %p161 = scmp.eq.s32.totalorder %s14, 0
    %p162 = por %p160, %p161
    %p163 = scmp.ne.s32.totalorder %s155, %s157
    %p164 = scmp.eq.s32.totalorder %s19, 3
    %p165 = por %p163, %p164
    %p166 = scmp.ne.s32.totalorder %s157, %s158
    %p167 = scmp.eq.s32.totalorder %s19, 0
    %p168 = por %p166, %p167
    %p169 = scmp.ne.s32.totalorder %s157, %s158
    %p170 = scmp.eq.s32.totalorder %s20, 3
    %p171 = por %p169, %p170
    %p173 = scmp.ne.s32.totalorder %s158, %s172
    %p174 = scmp.eq.s32.totalorder %s20, 0
    %p175 = por %p173, %p174
    %s177 = sadd.s32 %s176, 1
    %p180 = scmp.eq.s32.totalorder %s14, 3
    %p181 = scmp.ne.s32.totalorder %s176, %s178
    %p182 = scmp.eq.s32.totalorder %s14, 0
    %p183 = por %p181, %p182
    %p184 = scmp.ne.s32.totalorder %s176, %s178
    %p185 = scmp.eq.s32.totalorder %s19, 3
    %p186 = por %p184, %p185
    %p187 = scmp.ne.s32.totalorder %s178, %s179
    %p188 = scmp.eq.s32.totalorder %s19, 0
    %p189 = por %p187, %p188
    %p190 = scmp.ne.s32.totalorder %s178, %s179
    %p191 = scmp.eq.s32.totalorder %s20, 3
    %p192 = por %p190, %p191
    %p194 = scmp.ne.s32.totalorder %s179, %s193
    %p195 = scmp.eq.s32.totalorder %s20, 0
    %p196 = por %p194, %p195
    %s197 = ssub.s32 %s21, %s33
    %s198 = ssub.s32 %s22, %s29
    %s199 = sor.u32 %s197, %s198
    %p200 = scmp.eq.s32.totalorder %s199, 0
    %s202 = sadd.s32 %s201, 1
    %s203 = scalar_select %p200, %s201, %s202
    %p206 = pneg %p200
    %p207 = scmp.eq.s32.totalorder %s14, 3
    %p208 = por %p206, %p207
    %p209 = scmp.ne.s32.totalorder %s201, %s204
    %p210 = scmp.eq.s32.totalorder %s14, 0
    %p211 = por %p209, %p210
    %p212 = scmp.ne.s32.totalorder %s201, %s204
    %p213 = scmp.eq.s32.totalorder %s19, 3
    %p214 = por %p212, %p213
    %p215 = scmp.ne.s32.totalorder %s204, %s205
    %p216 = scmp.eq.s32.totalorder %s19, 0
    %p217 = por %p215, %p216
    %p218 = scmp.ne.s32.totalorder %s204, %s205
    %p219 = scmp.eq.s32.totalorder %s20, 3
    %p220 = por %p218, %p219
    %p222 = scmp.ne.s32.totalorder %s205, %s221
    %p223 = scmp.eq.s32.totalorder %s20, 0
    %p224 = por %p222, %p223
    %s225 = ssub.s32 %s21, %s33
    %s226 = ssub.s32 %s22, %s29
    %s227 = sor.u32 %s225, %s226
    %p228 = scmp.eq.s32.totalorder %s227, 0
    %s230 = sadd.s32 %s229, 1
    %s231 = scalar_select %p228, %s229, %s230
    %p234 = pneg %p228
    %p235 = scmp.eq.s32.totalorder %s14, 3
    %p236 = por %p234, %p235
    %p237 = scmp.ne.s32.totalorder %s229, %s232
    %p238 = scmp.eq.s32.totalorder %s14, 0
    %p239 = por %p237, %p238
    %p240 = scmp.ne.s32.totalorder %s229, %s232
    %p241 = scmp.eq.s32.totalorder %s19, 3
    %p242 = por %p240, %p241
    %p243 = scmp.ne.s32.totalorder %s232, %s233
    %p244 = scmp.eq.s32.totalorder %s19, 0
    %p245 = por %p243, %p244
    %p246 = scmp.ne.s32.totalorder %s232, %s233
    %p247 = scmp.eq.s32.totalorder %s20, 3
    %p248 = por %p246, %p247
    %p250 = scmp.ne.s32.totalorder %s233, %s249
    %p251 = scmp.eq.s32.totalorder %s20, 0
    %p252 = por %p250, %p251
    %p253 = scmp.le.s32.totalorder 1, %s14
    %p254 = scmp.lt.s32.totalorder %s14, 5
    %p255 = pnand %p253, %p254
    %p256 = pneg %p255
    // Predicated region
    $region9: #{upconv_block_forward.6} parent=5 // pred_check
      _
    $region10: #{upconv_block_forward.6} parent=5 // pred_check_branch
      %258 = sbr.rel (%p255) target = $region12
    $region11: #{upconv_block_forward.6} parent=5 // pred_region
      %s259 = ssub.s32 %s14, 1
      // Predicated region
      $region13: #{upconv_block_forward.6} parent=11 // pred_check
        %p260 = pneg %p147
      $region14: #{upconv_block_forward.6} parent=11 // pred_check_branch
        %262 = sbr.rel (%p260) target = $region16
      $region15: #{upconv_block_forward.6} parent=11 // pred_region
        _
      $region16: #{upconv_block_forward.6} parent=11 // pred_fallthru
        _
      // Predicated region
      $region17: #{upconv_block_forward.6} parent=11 // pred_check
        %p263 = pneg %p168
      $region18: #{upconv_block_forward.6} parent=11 // pred_check_branch
        %265 = sbr.rel (%p263) target = $region20
      $region19: #{upconv_block_forward.6} parent=11 // pred_region
        _
      $region20: #{upconv_block_forward.6} parent=11 // pred_fallthru
        _
      // Predicated region
      $region21: #{upconv_block_forward.6} parent=11 // pred_check
        %p266 = pneg %p189
      $region22: #{upconv_block_forward.6} parent=11 // pred_check_branch
        %268 = sbr.rel (%p266) target = $region24
      $region23: #{upconv_block_forward.6} parent=11 // pred_region
        _
      $region24: #{upconv_block_forward.6} parent=11 // pred_fallthru
        _
    $region12: #{upconv_block_forward.6} parent=5 // pred_fallthru
      _
    %p269 = scmp.lt.s32.totalorder %s14, 4
    // Predicated region
    $region25: #{upconv_block_forward.6} parent=5 // pred_check
      %p270 = pneg %p269
    $region26: #{upconv_block_forward.6} parent=5 // pred_check_branch
      %272 = sbr.rel (%p270) target = $region28
    $region27: #{upconv_block_forward.6} parent=5 // pred_region
      // Predicated region
      $region29: #{upconv_block_forward.6} parent=27 // pred_check
        %p273 = pneg %p48
      $region30: #{upconv_block_forward.6} parent=27 // pred_check_branch
        %275 = sbr.rel (%p273) target = $region32
      $region31: #{upconv_block_forward.6} parent=27 // pred_region
        %s276 = smul.u32 8, %s22
        %p277 = scmp.lt.s32.totalorder %s21, 1
        %s278 = scalar_select %p277, %s21, 1
        %p279 = scmp.lt.s32.totalorder %s276, 15
        %s280 = scalar_select %p279, %s276, 15
        %s281 = smul.addr %s280, 2
        %s282 = smul.addr %s278, 32
        %s283 = sadd.s32 %s281, %s282
        %s284 = smul.addr %s283, 4
        %s285 = scalar_lea.vmem %s0, %s284
        %s286 = smul.u32 8, %s22
      $region32: #{upconv_block_forward.6} parent=27 // pred_fallthru
        _
      // Predicated region
      $region33: #{upconv_block_forward.6} parent=27 // pred_check
        %p287 = pneg %p84
      $region34: #{upconv_block_forward.6} parent=27 // pred_check_branch
        %289 = sbr.rel (%p287) target = $region36
      $region35: #{upconv_block_forward.6} parent=27 // pred_region
        %s290 = smul.u32 %s22, 8
        %s291 = ssub.s32 %s290, 1
        %p292 = scmp.gt.s32.totalorder %s291, 0
        %s293 = scalar_select %p292, %s291, 0
        %p294 = scmp.lt.s32.totalorder %s21, 1
        %s295 = scalar_select %p294, %s21, 1
        %p296 = scmp.lt.s32.totalorder %s293, 15
        %s297 = scalar_select %p296, %s293, 15
        %s298 = smul.addr %s297, 2
        %s299 = smul.addr %s295, 32
        %s300 = sadd.s32 %s298, %s299
        %s301 = smul.addr %s300, 4
        %s302 = scalar_lea.vmem %s1, %s301
        %s303 = smul.u32 %s22, 8
        %s304 = ssub.s32 %s303, 1
        %p305 = scmp.gt.s32.totalorder %s304, 0
        %s306 = scalar_select %p305, %s304, 0
      $region36: #{upconv_block_forward.6} parent=27 // pred_fallthru
        _
      // Predicated region
      $region37: #{upconv_block_forward.6} parent=27 // pred_check
        %p307 = pneg %p120
      $region38: #{upconv_block_forward.6} parent=27 // pred_check_branch
        %309 = sbr.rel (%p307) target = $region40
      $region39: #{upconv_block_forward.6} parent=27 // pred_region
        %s310 = sadd.s32 %s22, 1
        %s311 = smul.u32 %s310, 8
        %p312 = scmp.lt.s32.totalorder %s311, 15
        %s313 = scalar_select %p312, %s311, 15
        %p314 = scmp.lt.s32.totalorder %s21, 1
        %s315 = scalar_select %p314, %s21, 1
        %p316 = scmp.lt.s32.totalorder %s313, 15
        %s317 = scalar_select %p316, %s313, 15
        %s318 = smul.addr %s317, 2
        %s319 = smul.addr %s315, 32
        %s320 = sadd.s32 %s318, %s319
        %s321 = smul.addr %s320, 4
        %s322 = scalar_lea.vmem %s2, %s321
        %s323 = sadd.s32 %s22, 1
        %s324 = smul.u32 %s323, 8
        %p325 = scmp.lt.s32.totalorder %s324, 15
        %s326 = scalar_select %p325, %s324, 15
      $region40: #{upconv_block_forward.6} parent=27 // pred_fallthru
        _
    $region28: #{upconv_block_forward.6} parent=5 // pred_fallthru
      _
    %p327 = scmp.le.s32.totalorder 1, %s14
    %p328 = scmp.lt.s32.totalorder %s14, 5
    %p329 = pnand %p327, %p328
    %p330 = pneg %p329
    // Predicated region
    $region41: #{upconv_block_forward.6} parent=5 // pred_check
      _
    $region42: #{upconv_block_forward.6} parent=5 // pred_check_branch
      %332 = sbr.rel (%p329) target = $region44
    $region43: #{upconv_block_forward.6} parent=5 // pred_region
      %s333 = ssub.s32 %s14, 1
      %s334 = smul.u32 8, %s24
      %p335 = scmp.lt.s32.totalorder %s23, 1
      %s336 = scalar_select %p335, %s23, 1
      %p337 = scmp.lt.s32.totalorder %s334, 15
      %s338 = scalar_select %p337, %s334, 15
      %s339 = smul.addr %s338, 2
      %s340 = smul.addr %s336, 32
      %s341 = sadd.s32 %s339, %s340
      %s342 = smul.addr %s341, 4
      %s343 = scalar_lea.vmem %s0, %s342
      %p344 = pneg %p54
      %p345 = pneg %p51
      %s346 = smul.u32 %s24, 8
      %s347 = ssub.s32 %s346, 1
      %p348 = scmp.gt.s32.totalorder %s347, 0
      %s349 = scalar_select %p348, %s347, 0
      %p350 = scmp.lt.s32.totalorder %s23, 1
      %s351 = scalar_select %p350, %s23, 1
      %p352 = scmp.lt.s32.totalorder %s349, 15
      %s353 = scalar_select %p352, %s349, 15
      %s354 = smul.addr %s353, 2
      %s355 = smul.addr %s351, 32
      %s356 = sadd.s32 %s354, %s355
      %s357 = smul.addr %s356, 4
      %s358 = scalar_lea.vmem %s1, %s357
      %p359 = pneg %p90
      %p360 = pneg %p87
      %s361 = sadd.s32 %s24, 1
      %s362 = smul.u32 %s361, 8
      %p363 = scmp.lt.s32.totalorder %s362, 15
      %s364 = scalar_select %p363, %s362, 15
      %p365 = scmp.lt.s32.totalorder %s23, 1
      %s366 = scalar_select %p365, %s23, 1
      %p367 = scmp.lt.s32.totalorder %s364, 15
      %s368 = scalar_select %p367, %s364, 15
      %s369 = smul.addr %s368, 2
      %s370 = smul.addr %s366, 32
      %s371 = sadd.s32 %s369, %s370
      %s372 = smul.addr %s371, 4
      %s373 = scalar_lea.vmem %s2, %s372
      %p374 = pneg %p126
      %p375 = pneg %p123
      %p376 = pneg %p147
      %p377 = pneg %p144
      %p378 = pneg %p168
      %p379 = pneg %p165
      %p380 = pneg %p189
      %p381 = pneg %p186
      %p382 = pneg %p217
      %p383 = pneg %p214
      %s384 = smul.u32 8, %s24
      %p385 = scmp.lt.s32.totalorder %s23, 1
      %s386 = scalar_select %p385, %s23, 1
      %p387 = scmp.lt.s32.totalorder %s384, 15
      %s388 = scalar_select %p387, %s384, 15
      %s389 = smul.addr %s388, 2
      %s390 = smul.addr %s386, 32
      %s391 = sadd.s32 %s389, %s390
      %s392 = smul.addr %s391, 4
      %s393 = scalar_lea.vmem %s6, %s392
      %p394 = pneg %p245
      %p395 = pneg %p242
      %p396 = scmp.lt.s32.totalorder %s23, 1
      %s397 = scalar_select %p396, %s23, 1
      %p398 = scmp.lt.s32.totalorder %s24, 1
      %s399 = scalar_select %p398, %s24, 1
      %s400 = smul.addr %s397, 2
      %s401 = sadd.s32 %s399, %s400
      %s402 = smul.addr %s401, 2
      %s403 = scalar_lea.vmem %s7, %s402
      %s404 = smul.u32 8, %s24
      %p405 = scmp.lt.s32.totalorder %s23, 1
      %s406 = scalar_select %p405, %s23, 1
      %p407 = scmp.lt.s32.totalorder %s404, 15
      %s408 = scalar_select %p407, %s404, 15
      %s409 = smul.addr %s408, 2
      %s410 = smul.addr %s406, 32
      %s411 = sadd.s32 %s409, %s410
      %s412 = smul.addr %s411, 4
      %s413 = scalar_lea.vmem %s0, %s412
      %s414 = smul.u32 8, %s24
      %s415 = smul.u32 %s24, 8
      %s416 = ssub.s32 %s415, 1
      %p417 = scmp.gt.s32.totalorder %s416, 0
      %s418 = scalar_select %p417, %s416, 0
      %p419 = scmp.lt.s32.totalorder %s23, 1
      %s420 = scalar_select %p419, %s23, 1
      %p421 = scmp.lt.s32.totalorder %s418, 15
      %s422 = scalar_select %p421, %s418, 15
      %s423 = smul.addr %s422, 2
      %s424 = smul.addr %s420, 32
      %s425 = sadd.s32 %s423, %s424
      %s426 = smul.addr %s425, 4
      %s427 = scalar_lea.vmem %s1, %s426
      %s428 = smul.u32 %s24, 8
      %s429 = ssub.s32 %s428, 1
      %p430 = scmp.gt.s32.totalorder %s429, 0
      %s431 = scalar_select %p430, %s429, 0
      %s432 = sadd.s32 %s24, 1
      %s433 = smul.u32 %s432, 8
      %p434 = scmp.lt.s32.totalorder %s433, 15
      %s435 = scalar_select %p434, %s433, 15
      %p436 = scmp.lt.s32.totalorder %s23, 1
      %s437 = scalar_select %p436, %s23, 1
      %p438 = scmp.lt.s32.totalorder %s435, 15
      %s439 = scalar_select %p438, %s435, 15
      %s440 = smul.addr %s439, 2
      %s441 = smul.addr %s437, 32
      %s442 = sadd.s32 %s440, %s441
      %s443 = smul.addr %s442, 4
      %s444 = scalar_lea.vmem %s2, %s443
      %s445 = sadd.s32 %s24, 1
      %s446 = smul.u32 %s445, 8
      %p447 = scmp.lt.s32.totalorder %s446, 15
      %s448 = scalar_select %p447, %s446, 15
      %s449 = smul.u32 8, %s24
      %p450 = scmp.lt.s32.totalorder %s23, 1
      %s451 = scalar_select %p450, %s23, 1
      %p452 = scmp.lt.s32.totalorder %s449, 15
      %s453 = scalar_select %p452, %s449, 15
      %s454 = smul.addr %s453, 2
      %s455 = smul.addr %s451, 32
      %s456 = sadd.s32 %s454, %s455
      %s457 = smul.addr %s456, 4
      %s458 = scalar_lea.vmem %s6, %s457
      %s459 = smul.u32 8, %s24
      %p460 = scmp.lt.s32.totalorder %s23, 1
      %s461 = scalar_select %p460, %s23, 1
      %p462 = scmp.lt.s32.totalorder %s24, 1
      %s463 = scalar_select %p462, %s24, 1
      %s464 = smul.addr %s461, 2
      %s465 = sadd.s32 %s463, %s464
      %s466 = smul.addr %s465, 2
      %s467 = scalar_lea.vmem %s7, %s466
      %v469 = vld [vmem:[%s5] sm:$0x1]
      %v470 = vld [vmem:[%s5 + $0x1] sm:$0x1]
      %v471 = vld [vmem:[%s5 + $0x2] sm:$0x1]
      %472 = vst [vmem:[#allocation2] sm:$0xf] 0
      %473 = vst [vmem:[#allocation2 + $0x4] sm:$0xf] 0
      %474 = vst [vmem:[#allocation2 + $0x8] sm:$0x1] 0
      %475 = vst [vmem:[#allocation2 + $0xc] sm:$0xf] 0
      %476 = vst [vmem:[#allocation2 + $0x10] sm:$0xf] 0
      %477 = vst [vmem:[#allocation2 + $0x14] sm:$0x1] 0
      %478 = vst [vmem:[#allocation2 + $0x18] sm:$0xf] 0
      %479 = vst [vmem:[#allocation2 + $0x1c] sm:$0xf] 0
      %480 = vst [vmem:[#allocation2 + $0x20] sm:$0x1] 0
      %481 = vst [vmem:[#allocation2 + $0x24] sm:$0xf] 0
      %482 = vst [vmem:[#allocation2 + $0x28] sm:$0xf] 0
      %483 = vst [vmem:[#allocation2 + $0x2c] sm:$0x1] 0
      %484 = vst [vmem:[#allocation2 + $0x30] sm:$0xf] 0
      %485 = vst [vmem:[#allocation2 + $0x34] sm:$0xf] 0
      %486 = vst [vmem:[#allocation2 + $0x38] sm:$0x1] 0
      %487 = vst [vmem:[#allocation2 + $0x3c] sm:$0xf] 0
      %488 = vst [vmem:[#allocation2 + $0x40] sm:$0xf] 0
      %489 = vst [vmem:[#allocation2 + $0x44] sm:$0x1] 0
      %490 = vst [vmem:[#allocation2 + $0x48] sm:$0xf] 0
      %491 = vst [vmem:[#allocation2 + $0x4c] sm:$0xf] 0
      %492 = vst [vmem:[#allocation2 + $0x50] sm:$0x1] 0
      %493 = vst [vmem:[#allocation2 + $0x54] sm:$0xf] 0
      %494 = vst [vmem:[#allocation2 + $0x58] sm:$0xf] 0
      %495 = vst [vmem:[#allocation2 + $0x5c] sm:$0x1] 0
      %496 = vst [vmem:[#allocation2 + $0x60] sm:$0xf] 0
      %497 = vst [vmem:[#allocation2 + $0x64] sm:$0xf] 0
      %498 = vst [vmem:[#allocation2 + $0x68] sm:$0x1] 0
      %499 = vst [vmem:[#allocation2 + $0x6c] sm:$0xf] 0
      %500 = vst [vmem:[#allocation2 + $0x70] sm:$0xf] 0
      %501 = vst [vmem:[#allocation2 + $0x74] sm:$0x1] 0
      %v502 = vld [vmem:[%s413] sm:$0xf]
      %v503 = vld [vmem:[%s413 + $0x4] sm:$0xf]
      %v504 = vld [vmem:[%s413 + $0x8] sm:$0xf]
      %v505 = vld [vmem:[%s413 + $0xc] sm:$0xf]
      %v506 = vld [vmem:[%s413 + $0x10] sm:$0xf]
      %v507 = vld [vmem:[%s413 + $0x14] sm:$0xf]
      %v508 = vld [vmem:[%s413 + $0x18] sm:$0xf]
      %v509 = vld [vmem:[%s413 + $0x1c] sm:$0xf]
      %v510 = vld [vmem:[%s413 + $0x20] sm:$0xf]
      %v511 = vld [vmem:[%s413 + $0x24] sm:$0xf]
      %v512 = vld [vmem:[%s413 + $0x28] sm:$0xf]
      %v513 = vld [vmem:[%s413 + $0x2c] sm:$0xf]
      %v514 = vld [vmem:[%s413 + $0x30] sm:$0xf]
      %v515 = vld [vmem:[%s413 + $0x34] sm:$0xf]
      %v516 = vld [vmem:[%s413 + $0x38] sm:$0xf]
      %v517 = vld [vmem:[%s413 + $0x3c] sm:$0xf]
      %v518 = vunpack.c.l.bf16 %v502
      %v519 = vunpack.c.l.bf16 %v503
      %v520 = vunpack.c.l.bf16 %v504
      %v521 = vunpack.c.l.bf16 %v505
      %v522 = vunpack.c.l.bf16 %v506
      %v523 = vunpack.c.l.bf16 %v507
      %v524 = vunpack.c.l.bf16 %v508
      %v525 = vunpack.c.l.bf16 %v509
      %v526 = vunpack.c.l.bf16 %v510
      %v527 = vunpack.c.l.bf16 %v511
      %v528 = vunpack.c.l.bf16 %v512
      %v529 = vunpack.c.l.bf16 %v513
      %v530 = vunpack.c.l.bf16 %v514
      %v531 = vunpack.c.l.bf16 %v515
      %v532 = vunpack.c.l.bf16 %v516
      %v533 = vunpack.c.l.bf16 %v517
      %v534 = vlaneseq
      %v535 = vshrl.u32 %v534, 7
      %v536 = vsub.s32 0, %v535
      %v537 = vrot.slane %v469, %v536
      %v538 = vmul.f32 %v518, %v537
      %v539 = vmul.f32 %v519, %v537
      %v540 = vmul.f32 %v520, %v537
      %v541 = vmul.f32 %v521, %v537
      %v542 = vmul.f32 %v522, %v537
      %v543 = vmul.f32 %v523, %v537
      %v544 = vmul.f32 %v524, %v537
      %v545 = vmul.f32 %v525, %v537
      %v546 = vmul.f32 %v526, %v537
      %v547 = vmul.f32 %v527, %v537
      %v548 = vmul.f32 %v528, %v537
      %v549 = vmul.f32 %v529, %v537
      %v550 = vmul.f32 %v530, %v537
      %v551 = vmul.f32 %v531, %v537
      %v552 = vmul.f32 %v532, %v537
      %v553 = vmul.f32 %v533, %v537
      %v554 = vlaneseq
      %v555 = vshrl.u32 %v554, 7
      %v556 = vsub.s32 0, %v555
      %v557 = vrot.slane %v470, %v556
      %v558 = vadd.f32 %v538, %v557
      %v559 = vadd.f32 %v539, %v557
      %v560 = vadd.f32 %v540, %v557
      %v561 = vadd.f32 %v541, %v557
      %v562 = vadd.f32 %v542, %v557
      %v563 = vadd.f32 %v543, %v557
      %v564 = vadd.f32 %v544, %v557
      %v565 = vadd.f32 %v545, %v557
      %v566 = vadd.f32 %v546, %v557
      %v567 = vadd.f32 %v547, %v557
      %v568 = vadd.f32 %v548, %v557
      %v569 = vadd.f32 %v549, %v557
      %v570 = vadd.f32 %v550, %v557
      %v571 = vadd.f32 %v551, %v557
      %v572 = vadd.f32 %v552, %v557
      %v573 = vadd.f32 %v553, %v557
      %vm574 = vcmp.ge.f32.partialorder %v558, 0.0
      %vm575 = vcmp.ge.f32.partialorder %v559, 0.0
      %vm576 = vcmp.ge.f32.partialorder %v560, 0.0
      %vm577 = vcmp.ge.f32.partialorder %v561, 0.0
      %vm578 = vcmp.ge.f32.partialorder %v562, 0.0
      %vm579 = vcmp.ge.f32.partialorder %v563, 0.0
      %vm580 = vcmp.ge.f32.partialorder %v564, 0.0
      %vm581 = vcmp.ge.f32.partialorder %v565, 0.0
      %vm582 = vcmp.ge.f32.partialorder %v566, 0.0
      %vm583 = vcmp.ge.f32.partialorder %v567, 0.0
      %vm584 = vcmp.ge.f32.partialorder %v568, 0.0
      %vm585 = vcmp.ge.f32.partialorder %v569, 0.0
      %vm586 = vcmp.ge.f32.partialorder %v570, 0.0
      %vm587 = vcmp.ge.f32.partialorder %v571, 0.0
      %vm588 = vcmp.ge.f32.partialorder %v572, 0.0
      %vm589 = vcmp.ge.f32.partialorder %v573, 0.0
      %v590 = vlaneseq
      %v591 = vshrl.u32 %v590, 7
      %v592 = vsub.s32 0, %v591
      %v593 = vrot.slane %v471, %v592
      %v594 = vmul.f32 %v558, %v593
      %v595 = vmul.f32 %v559, %v593
      %v596 = vmul.f32 %v560, %v593
      %v597 = vmul.f32 %v561, %v593
      %v598 = vmul.f32 %v562, %v593
      %v599 = vmul.f32 %v563, %v593
      %v600 = vmul.f32 %v564, %v593
      %v601 = vmul.f32 %v565, %v593
      %v602 = vmul.f32 %v566, %v593
      %v603 = vmul.f32 %v567, %v593
      %v604 = vmul.f32 %v568, %v593
      %v605 = vmul.f32 %v569, %v593
      %v606 = vmul.f32 %v570, %v593
      %v607 = vmul.f32 %v571, %v593
      %v608 = vmul.f32 %v572, %v593
      %v609 = vmul.f32 %v573, %v593
      %v610 = vsel %vm574, %v558, %v594
      %v611 = vsel %vm575, %v559, %v595
      %v612 = vsel %vm576, %v560, %v596
      %v613 = vsel %vm577, %v561, %v597
      %v614 = vsel %vm578, %v562, %v598
      %v615 = vsel %vm579, %v563, %v599
      %v616 = vsel %vm580, %v564, %v600
      %v617 = vsel %vm581, %v565, %v601
      %v618 = vsel %vm582, %v566, %v602
      %v619 = vsel %vm583, %v567, %v603
      %v620 = vsel %vm584, %v568, %v604
      %v621 = vsel %vm585, %v569, %v605
      %v622 = vsel %vm586, %v570, %v606
      %v623 = vsel %vm587, %v571, %v607
      %v624 = vsel %vm588, %v572, %v608
      %v625 = vsel %vm589, %v573, %v609
      %v626 = vpack.c.bf16 %v611, %v610
      %v627 = vpack.c.bf16 %v613, %v612
      %v628 = vpack.c.bf16 %v615, %v614
      %v629 = vpack.c.bf16 %v617, %v616
      %v630 = vpack.c.bf16 %v619, %v618
      %v631 = vpack.c.bf16 %v621, %v620
      %v632 = vpack.c.bf16 %v623, %v622
      %v633 = vpack.c.bf16 %v625, %v624
      %v642 = vunpack.c.l.b16 %v626
      %v643 = vunpack.c.h.b16 %v626
      %v644 = vunpack.c.l.b16 %v627
      %v645 = vunpack.c.h.b16 %v627
      %v646 = vunpack.c.l.b16 %v628
      %v647 = vunpack.c.h.b16 %v628
      %v648 = vunpack.c.l.b16 %v629
      %v649 = vunpack.c.h.b16 %v629
      %v650 = vunpack.c.l.b16 %v630
      %v651 = vunpack.c.h.b16 %v630
      %v652 = vunpack.c.l.b16 %v631
      %v653 = vunpack.c.h.b16 %v631
      %v654 = vunpack.c.l.b16 %v632
      %v655 = vunpack.c.h.b16 %v632
      %v656 = vunpack.c.l.b16 %v633
      %v657 = vunpack.c.h.b16 %v633
      %v658 = vpack.c.b16 %v642, %v642
      %v659 = vpack.c.b16 %v643, %v643
      %v660 = vpack.c.b16 %v644, %v644
      %v661 = vpack.c.b16 %v645, %v645
      %v662 = vpack.c.b16 %v646, %v646
      %v663 = vpack.c.b16 %v647, %v647
      %v664 = vpack.c.b16 %v648, %v648
      %v665 = vpack.c.b16 %v649, %v649
      %v666 = vpack.c.b16 %v650, %v650
      %v667 = vpack.c.b16 %v651, %v651
      %v668 = vpack.c.b16 %v652, %v652
      %v669 = vpack.c.b16 %v653, %v653
      %v670 = vpack.c.b16 %v654, %v654
      %v671 = vpack.c.b16 %v655, %v655
      %v672 = vpack.c.b16 %v656, %v656
      %v673 = vpack.c.b16 %v657, %v657
      %vm674 = vsmask.f32 256
      %vm675 = vsmask.f32 4368
      %vm676 = vmor %vm674, %vm675
      %v678 = vshrl.u32 %v658, 16
      %v680 = vrot.slane %v678, 7
      %v681 = vshll.u32 %v658, 16
      %v683 = vor.u32 %v680, %v681
      %v684 = vrot.slane %v680, 4
      %v686 = vshrl.u32 %v659, 16
      %v688 = vrot.slane %v686, 7
      %v689 = vshll.u32 %v659, 16
      %v691 = vor.u32 %v688, %v689
      %v692 = vsel %vm676, %v684, %v691
      %v693 = vrot.slane %v688, 4
      %v695 = vshrl.u32 %v660, 16
      %v697 = vrot.slane %v695, 7
      %v698 = vshll.u32 %v660, 16
      %v700 = vor.u32 %v697, %v698
      %v701 = vrot.slane %v697, 4
      %v703 = vshrl.u32 %v661, 16
      %v705 = vrot.slane %v703, 7
      %v706 = vshll.u32 %v661, 16
      %v708 = vor.u32 %v705, %v706
      %v709 = vsel %vm676, %v701, %v708
      %v710 = vrot.slane %v705, 4
      %v712 = vshrl.u32 %v662, 16
      %v714 = vrot.slane %v712, 7
      %v715 = vshll.u32 %v662, 16
      %v717 = vor.u32 %v714, %v715
      %v718 = vrot.slane %v714, 4
      %v720 = vshrl.u32 %v663, 16
      %v722 = vrot.slane %v720, 7
      %v723 = vshll.u32 %v663, 16
      %v725 = vor.u32 %v722, %v723
      %v726 = vsel %vm676, %v718, %v725
      %v727 = vrot.slane %v722, 4
      %v729 = vshrl.u32 %v664, 16
      %v731 = vrot.slane %v729, 7
      %v732 = vshll.u32 %v664, 16
      %v734 = vor.u32 %v731, %v732
      %v735 = vrot.slane %v731, 4
      %v737 = vshrl.u32 %v665, 16
      %v739 = vrot.slane %v737, 7
      %v740 = vshll.u32 %v665, 16
      %v742 = vor.u32 %v739, %v740
      %v743 = vsel %vm676, %v735, %v742
      %v744 = vrot.slane %v739, 4
      %v746 = vshrl.u32 %v666, 16
      %v748 = vrot.slane %v746, 7
      %v749 = vshll.u32 %v666, 16
      %v751 = vor.u32 %v748, %v749
      %v752 = vrot.slane %v748, 4
      %v754 = vshrl.u32 %v667, 16
      %v756 = vrot.slane %v754, 7
      %v757 = vshll.u32 %v667, 16
      %v759 = vor.u32 %v756, %v757
      %v760 = vsel %vm676, %v752, %v759
      %v761 = vrot.slane %v756, 4
      %v763 = vshrl.u32 %v668, 16
      %v765 = vrot.slane %v763, 7
      %v766 = vshll.u32 %v668, 16
      %v768 = vor.u32 %v765, %v766
      %v769 = vrot.slane %v765, 4
      %v771 = vshrl.u32 %v669, 16
      %v773 = vrot.slane %v771, 7
      %v774 = vshll.u32 %v669, 16
      %v776 = vor.u32 %v773, %v774
      %v777 = vsel %vm676, %v769, %v776
      %v778 = vrot.slane %v773, 4
      %v780 = vshrl.u32 %v670, 16
      %v782 = vrot.slane %v780, 7
      %v783 = vshll.u32 %v670, 16
      %v785 = vor.u32 %v782, %v783
      %v786 = vrot.slane %v782, 4
      %v788 = vshrl.u32 %v671, 16
      %v790 = vrot.slane %v788, 7
      %v791 = vshll.u32 %v671, 16
      %v793 = vor.u32 %v790, %v791
      %v794 = vsel %vm676, %v786, %v793
      %v795 = vrot.slane %v790, 4
      %v797 = vshrl.u32 %v672, 16
      %v799 = vrot.slane %v797, 7
      %v800 = vshll.u32 %v672, 16
      %v802 = vor.u32 %v799, %v800
      %v803 = vrot.slane %v799, 4
      %v805 = vshrl.u32 %v673, 16
      %v807 = vrot.slane %v805, 7
      %v808 = vshll.u32 %v673, 16
      %v810 = vor.u32 %v807, %v808
      %v811 = vsel %vm676, %v803, %v810
      %v812 = vrot.slane %v807, 4
      %s837 = scalar_lea.vmem [#allocation2], 12
      %vm838 = vcmask 1043456
      %vm839 = vsmask.f32 7938
      %vm840 = vmand %vm838, %vm839
      %v841 = vld [vmem:[%s837] sm:$0xf]
      %v842 = vsel %vm840, %v683, %v841
      %843 = vst [vmem:[%s837] sm:$0xf] %v842
      %844 = vst [vmem:[%s837 + $0x4] sm:$0xf] %v692
      %vm845 = vcmask 1040384
      %vm846 = vmand %vm845, %vm674
      %v847 = vld [vmem:[%s837 + $0x8] sm:$0x1]
      %v848 = vsel %vm846, %v693, %v847
      %849 = vst [vmem:[%s837 + $0x8] sm:$0x1] %v848
      %v850 = vld [vmem:[%s837 + $0xc] sm:$0xf]
      %v851 = vsel %vm840, %v700, %v850
      %852 = vst [vmem:[%s837 + $0xc] sm:$0xf] %v851
      %853 = vst [vmem:[%s837 + $0x10] sm:$0xf] %v709
      %v854 = vld [vmem:[%s837 + $0x14] sm:$0x1]
      %v855 = vsel %vm846, %v710, %v854
      %856 = vst [vmem:[%s837 + $0x14] sm:$0x1] %v855
      %v857 = vld [vmem:[%s837 + $0x18] sm:$0xf]
      %v858 = vsel %vm840, %v717, %v857
      %859 = vst [vmem:[%s837 + $0x18] sm:$0xf] %v858
      %860 = vst [vmem:[%s837 + $0x1c] sm:$0xf] %v726
      %v861 = vld [vmem:[%s837 + $0x20] sm:$0x1]
      %v862 = vsel %vm846, %v727, %v861
      %863 = vst [vmem:[%s837 + $0x20] sm:$0x1] %v862
      %v864 = vld [vmem:[%s837 + $0x24] sm:$0xf]
      %v865 = vsel %vm840, %v734, %v864
      %866 = vst [vmem:[%s837 + $0x24] sm:$0xf] %v865
      %867 = vst [vmem:[%s837 + $0x28] sm:$0xf] %v743
      %v868 = vld [vmem:[%s837 + $0x2c] sm:$0x1]
      %v869 = vsel %vm846, %v744, %v868
      %870 = vst [vmem:[%s837 + $0x2c] sm:$0x1] %v869
      %v871 = vld [vmem:[%s837 + $0x30] sm:$0xf]
      %v872 = vsel %vm840, %v751, %v871
      %873 = vst [vmem:[%s837 + $0x30] sm:$0xf] %v872
      %874 = vst [vmem:[%s837 + $0x34] sm:$0xf] %v760
      %v875 = vld [vmem:[%s837 + $0x38] sm:$0x1]
      %v876 = vsel %vm846, %v761, %v875
      %877 = vst [vmem:[%s837 + $0x38] sm:$0x1] %v876
      %v878 = vld [vmem:[%s837 + $0x3c] sm:$0xf]
      %v879 = vsel %vm840, %v768, %v878
      %880 = vst [vmem:[%s837 + $0x3c] sm:$0xf] %v879
      %881 = vst [vmem:[%s837 + $0x40] sm:$0xf] %v777
      %v882 = vld [vmem:[%s837 + $0x44] sm:$0x1]
      %v883 = vsel %vm846, %v778, %v882
      %884 = vst [vmem:[%s837 + $0x44] sm:$0x1] %v883
      %v885 = vld [vmem:[%s837 + $0x48] sm:$0xf]
      %v886 = vsel %vm840, %v785, %v885
      %887 = vst [vmem:[%s837 + $0x48] sm:$0xf] %v886
      %888 = vst [vmem:[%s837 + $0x4c] sm:$0xf] %v794
      %v889 = vld [vmem:[%s837 + $0x50] sm:$0x1]
      %v890 = vsel %vm846, %v795, %v889
      %891 = vst [vmem:[%s837 + $0x50] sm:$0x1] %v890
      %v892 = vld [vmem:[%s837 + $0x54] sm:$0xf]
      %v893 = vsel %vm840, %v802, %v892
      %894 = vst [vmem:[%s837 + $0x54] sm:$0xf] %v893
      %895 = vst [vmem:[%s837 + $0x58] sm:$0xf] %v811
      %v896 = vld [vmem:[%s837 + $0x5c] sm:$0x1]
      %v897 = vsel %vm846, %v812, %v896
      %898 = vst [vmem:[%s837 + $0x5c] sm:$0x1] %v897
      %p899 = scmp.gt.s32.totalorder %s24, 0
      // Predicated region
      $region45: #{upconv_block_forward.6} parent=43 // pred_check
        %p900 = pneg %p899
      $region46: #{upconv_block_forward.6} parent=43 // pred_check_branch
        %902 = sbr.rel (%p900) target = $region48
      $region47: #{upconv_block_forward.6} parent=43 // pred_region
        %v903 = vld [vmem:[%s427] sm:$0xf]
        %v904 = vld [vmem:[%s427 + $0x4] sm:$0xf]
        %v905 = vunpack.c.l.bf16 %v903
        %v906 = vunpack.c.l.bf16 %v904
        %v907 = vmul.f32 %v905, %v537
        %v908 = vmul.f32 %v906, %v537
        %v909 = vadd.f32 %v907, %v557
        %v910 = vadd.f32 %v908, %v557
        %vm911 = vcmp.ge.f32.partialorder %v909, 0.0
        %vm912 = vcmp.ge.f32.partialorder %v910, 0.0
        %v913 = vmul.f32 %v909, %v593
        %v914 = vmul.f32 %v910, %v593
        %v915 = vsel %vm911, %v909, %v913
        %v916 = vsel %vm912, %v910, %v914
        %v917 = vpack.c.bf16 %v916, %v915
        %v919 = vunpack.c.l.b16 %v917
        %v920 = vunpack.c.h.b16 %v917
        %v921 = vpack.c.b16 %v919, %v919
        %v922 = vpack.c.b16 %v920, %v920
        %v924 = vshrl.u32 %v921, 16
        %v926 = vrot.slane %v924, 7
        %v927 = vshll.u32 %v921, 16
        %v929 = vor.u32 %v926, %v927
        %v930 = vrot.slane %v926, 4
        %v932 = vshrl.u32 %v922, 16
        %v934 = vrot.slane %v932, 7
        %v935 = vshll.u32 %v922, 16
        %v937 = vor.u32 %v934, %v935
        %v938 = vsel %vm676, %v930, %v937
        %v939 = vrot.slane %v934, 4
        %v943 = vld [vmem:[#allocation2] sm:$0xf]
        %v944 = vsel %vm840, %v929, %v943
        %945 = vst [vmem:[#allocation2] sm:$0xf] %v944
        %946 = vst [vmem:[#allocation2 + $0x4] sm:$0xf] %v938
        %v947 = vld [vmem:[#allocation2 + $0x8] sm:$0x1]
        %v948 = vsel %vm846, %v939, %v947
        %949 = vst [vmem:[#allocation2 + $0x8] sm:$0x1] %v948
      $region48: #{upconv_block_forward.6} parent=43 // pred_fallthru
        _
      %p950 = scmp.lt.s32.totalorder %s24, 1
      // Predicated region
      $region49: #{upconv_block_forward.6} parent=43 // pred_check
        %p951 = pneg %p950
      $region50: #{upconv_block_forward.6} parent=43 // pred_check_branch
        %953 = sbr.rel (%p951) target = $region52
      $region51: #{upconv_block_forward.6} parent=43 // pred_region
        %v954 = vld [vmem:[%s444] sm:$0xf]
        %v955 = vld [vmem:[%s444 + $0x4] sm:$0xf]
        %v956 = vunpack.c.l.bf16 %v954
        %v957 = vunpack.c.l.bf16 %v955
        %v958 = vmul.f32 %v956, %v537
        %v959 = vmul.f32 %v957, %v537
        %v960 = vadd.f32 %v958, %v557
        %v961 = vadd.f32 %v959, %v557
        %vm962 = vcmp.ge.f32.partialorder %v960, 0.0
        %vm963 = vcmp.ge.f32.partialorder %v961, 0.0
        %v964 = vmul.f32 %v960, %v593
        %v965 = vmul.f32 %v961, %v593
        %v966 = vsel %vm962, %v960, %v964
        %v967 = vsel %vm963, %v961, %v965
        %v968 = vpack.c.bf16 %v967, %v966
        %v970 = vunpack.c.l.b16 %v968
        %v971 = vunpack.c.h.b16 %v968
        %v972 = vpack.c.b16 %v970, %v970
        %v973 = vpack.c.b16 %v971, %v971
        %v975 = vshrl.u32 %v972, 16
        %v977 = vrot.slane %v975, 7
        %v978 = vshll.u32 %v972, 16
        %v980 = vor.u32 %v977, %v978
        %v981 = vrot.slane %v977, 4
        %v983 = vshrl.u32 %v973, 16
        %v985 = vrot.slane %v983, 7
        %v986 = vshll.u32 %v973, 16
        %v988 = vor.u32 %v985, %v986
        %v989 = vsel %vm676, %v981, %v988
        %v990 = vrot.slane %v985, 4
        %s994 = scalar_lea.vmem [#allocation2], 108
        %v995 = vld [vmem:[%s994] sm:$0xf]
        %v996 = vsel %vm840, %v980, %v995
        %997 = vst [vmem:[%s994] sm:$0xf] %v996
        %998 = vst [vmem:[%s994 + $0x4] sm:$0xf] %v989
        %v999 = vld [vmem:[%s994 + $0x8] sm:$0x1]
        %v1000 = vsel %vm846, %v990, %v999
        %1001 = vst [vmem:[%s994 + $0x8] sm:$0x1] %v1000
      $region52: #{upconv_block_forward.6} parent=43 // pred_fallthru
        _
      %v1002 = vld [vmem:[%s4] sm:$0x1]
      loop: start=0, step=1, limit=8
      $region53: #{upconv_block_forward.6} parent=43 // loop_pre_header
        _
      $region54: #{upconv_block_forward.6} parent=43 // loop_header
        %s1004 = sphi 0, %s1008
        %p1005 = scmp.ge.s32.totalorder %s1004, 8
        %v1009 = vphi 0.0, %v2106
        %v1010 = vphi 0.0, %v2116
      $region55: #{upconv_block_forward.6} parent=43 // loop_header_branch
        %1007 = sbr.rel (%p1005) target = $region59
      $region56: #{upconv_block_forward.6} parent=43 // loop_body
        %s1011 = smul.u32 %s1004, 3
        %s1012 = smul.addr %s1011, 4
        %s1013 = scalar_lea.vmem [#allocation2], %s1012
        %v1014 = vld [vmem:[%s1013] sm:$0xf]
        %v1015 = vld [vmem:[%s1013 + $0x4] sm:$0xf]
        %v1016 = vld [vmem:[%s1013 + $0x8] sm:$0x1]
        %v1017 = vld [vmem:[%s3] sm:$0xf]
        %v1018 = vld [vmem:[%s3 + $0x4] sm:$0xf]
        %v1019 = vld [vmem:[%s3 + $0x8] sm:$0xf]
        %v1020 = vld [vmem:[%s3 + $0xc] sm:$0xf]
        %v1021 = vld [vmem:[%s3 + $0x10] sm:$0xf]
        %v1022 = vld [vmem:[%s3 + $0x14] sm:$0xf]
        %v1023 = vld [vmem:[%s3 + $0x18] sm:$0xf]
        %v1024 = vld [vmem:[%s3 + $0x1c] sm:$0xf]
        %v1025 = vld [vmem:[%s3 + $0x20] sm:$0xf]
        %v1026 = vld [vmem:[%s3 + $0x24] sm:$0xf]
        %v1027 = vld [vmem:[%s3 + $0x28] sm:$0xf]
        %v1028 = vld [vmem:[%s3 + $0x2c] sm:$0xf]
        %v1029 = vld [vmem:[%s3 + $0x30] sm:$0xf]
        %v1030 = vld [vmem:[%s3 + $0x34] sm:$0xf]
        %v1031 = vld [vmem:[%s3 + $0x38] sm:$0xf]
        %v1032 = vld [vmem:[%s3 + $0x3c] sm:$0xf]
        %s1033 = scalar_lea.vmem %s3, 64
        %v1034 = vld [vmem:[%s1033] sm:$0xf]
        %v1035 = vld [vmem:[%s1033 + $0x4] sm:$0xf]
        %v1036 = vld [vmem:[%s1033 + $0x8] sm:$0xf]
        %v1037 = vld [vmem:[%s1033 + $0xc] sm:$0xf]
        %v1038 = vld [vmem:[%s1033 + $0x10] sm:$0xf]
        %v1039 = vld [vmem:[%s1033 + $0x14] sm:$0xf]
        %v1040 = vld [vmem:[%s1033 + $0x18] sm:$0xf]
        %v1041 = vld [vmem:[%s1033 + $0x1c] sm:$0xf]
        %v1042 = vld [vmem:[%s1033 + $0x20] sm:$0xf]
        %v1043 = vld [vmem:[%s1033 + $0x24] sm:$0xf]
        %v1044 = vld [vmem:[%s1033 + $0x28] sm:$0xf]
        %v1045 = vld [vmem:[%s1033 + $0x2c] sm:$0xf]
        %v1046 = vld [vmem:[%s1033 + $0x30] sm:$0xf]
        %v1047 = vld [vmem:[%s1033 + $0x34] sm:$0xf]
        %v1048 = vld [vmem:[%s1033 + $0x38] sm:$0xf]
        %v1049 = vld [vmem:[%s1033 + $0x3c] sm:$0xf]
        %v1053 = vunpack.c.l.b16 %v1014
        %v1054 = vunpack.c.l.b16 %v1015
        %v1055 = vunpack.c.l.b16 %v1016
        %v1056 = vpack.c.b16 %v1054, %v1053
        %v1057 = vpack.c.b16 %v1055, %v1055
        %vm1058 = vsmask.f32 7424
        %v1060 = vshrl.u32 %v1056, 16
        %v1062 = vshll.u32 %v1056, 16
        %v1064 = vrot.slane %v1062, 1
        %v1065 = vor.u32 %v1060, %v1064
        %v1067 = vshll.u32 %v1057, 16
        %v1069 = vrot.slane %v1067, 1
        %v1070 = vsel %vm1058, %v1065, %v1069
        %v1088 = vunpack.c.l.b16 %v1034
        %v1089 = vunpack.c.l.b16 %v1035
        %v1090 = vunpack.c.l.b16 %v1036
        %v1091 = vunpack.c.l.b16 %v1037
        %v1092 = vunpack.c.l.b16 %v1038
        %v1093 = vunpack.c.l.b16 %v1039
        %v1094 = vunpack.c.l.b16 %v1040
        %v1095 = vunpack.c.l.b16 %v1041
        %v1096 = vunpack.c.l.b16 %v1042
        %v1097 = vunpack.c.l.b16 %v1043
        %v1098 = vunpack.c.l.b16 %v1044
        %v1099 = vunpack.c.l.b16 %v1045
        %v1100 = vunpack.c.l.b16 %v1046
        %v1101 = vunpack.c.l.b16 %v1047
        %v1102 = vunpack.c.l.b16 %v1048
        %v1103 = vunpack.c.l.b16 %v1049
        %v1104 = vpack.c.b16 %v1089, %v1088
        %v1105 = vpack.c.b16 %v1091, %v1090
        %v1106 = vpack.c.b16 %v1093, %v1092
        %v1107 = vpack.c.b16 %v1095, %v1094
        %v1108 = vpack.c.b16 %v1097, %v1096
        %v1109 = vpack.c.b16 %v1099, %v1098
        %v1110 = vpack.c.b16 %v1101, %v1100
        %v1111 = vpack.c.b16 %v1103, %v1102
        %1120 = vmatprep.subr.bf16.mxu0 0
        %1121 = vmatpush1.bf16.msra.mxu0 %v1104
        %1122 = vmatprep.subr.bf16.mxu0 0
        %1123 = vmatpush1.bf16.msra.mxu0 %v1105
        %1124 = vmatprep.subr.bf16.mxu0 0
        %1125 = vmatpush1.bf16.msra.mxu0 %v1106
        %1126 = vmatprep.subr.bf16.mxu0 0
        %1127 = vmatpush1.bf16.msra.mxu0 %v1107
        %1128 = vmatprep.subr.bf16.mxu0 0
        %1129 = vmatpush1.bf16.msra.mxu0 %v1108
        %1130 = vmatprep.subr.bf16.mxu0 0
        %1131 = vmatpush1.bf16.msra.mxu0 %v1109
        %1132 = vmatprep.subr.bf16.mxu0 0
        %1133 = vmatpush1.bf16.msra.mxu0 %v1110
        %1134 = vmatprep.subr.bf16.mxu0 0
        %1135 = vmatpush1.bf16.msra.mxu0 %v1111
        %1136 = vmatprep.subr.bf16.mxu0 0
        %1137 = vmatpush1.bf16.msra.mxu0 0
        %1138 = vmatprep.subr.bf16.mxu0 0
        %1139 = vmatpush1.bf16.msra.mxu0 0
        %1140 = vmatprep.subr.bf16.mxu0 0
        %1141 = vmatpush1.bf16.msra.mxu0 0
        %1142 = vmatprep.subr.bf16.mxu0 0
        %1143 = vmatpush1.bf16.msra.mxu0 0
        %1144 = vmatprep.subr.bf16.mxu0 0
        %1145 = vmatpush1.bf16.msra.mxu0 0
        %1146 = vmatprep.subr.bf16.mxu0 0
        %1147 = vmatpush1.bf16.msra.mxu0 0
        %1148 = vmatprep.subr.bf16.mxu0 0
        %1149 = vmatpush1.bf16.msra.mxu0 0
        %1150 = vmatprep.subr.bf16.mxu0 0
        %1151 = vmatpush1.bf16.msra.mxu0 0
        %1152 = vmatprep.mubr.bf16.mxu0 0
        %1153 = vmatmul.mubr.bf16.gmra.mrb[0].mxu0 %v1070
        %v1154 = vpop.f32.mrb[0].mxu0
        %v1155 = vadd.f32 0.0, %v1154
        %v1156 = vpop.f32.mrb[0].mxu0
        %v1157 = vpop.f32.mrb[0].mxu0
        %v1158 = vadd.f32 0.0, %v1157
        %v1159 = vpop.f32.mrb[0].mxu0
        %1160 = vdwg.mxu0
        %v1178 = vunpack.c.l.b16 %v1017
        %v1179 = vunpack.c.l.b16 %v1018
        %v1180 = vunpack.c.l.b16 %v1019
        %v1181 = vunpack.c.l.b16 %v1020
        %v1182 = vunpack.c.l.b16 %v1021
        %v1183 = vunpack.c.l.b16 %v1022
        %v1184 = vunpack.c.l.b16 %v1023
        %v1185 = vunpack.c.l.b16 %v1024
        %v1186 = vunpack.c.l.b16 %v1025
        %v1187 = vunpack.c.l.b16 %v1026
        %v1188 = vunpack.c.l.b16 %v1027
        %v1189 = vunpack.c.l.b16 %v1028
        %v1190 = vunpack.c.l.b16 %v1029
        %v1191 = vunpack.c.l.b16 %v1030
        %v1192 = vunpack.c.l.b16 %v1031
        %v1193 = vunpack.c.l.b16 %v1032
        %v1194 = vpack.c.b16 %v1179, %v1178
        %v1195 = vpack.c.b16 %v1181, %v1180
        %v1196 = vpack.c.b16 %v1183, %v1182
        %v1197 = vpack.c.b16 %v1185, %v1184
        %v1198 = vpack.c.b16 %v1187, %v1186
        %v1199 = vpack.c.b16 %v1189, %v1188
        %v1200 = vpack.c.b16 %v1191, %v1190
        %v1201 = vpack.c.b16 %v1193, %v1192
        %1210 = vmatprep.subr.bf16.mxu0 0
        %1211 = vmatpush1.bf16.msra.mxu0 %v1194
        %1212 = vmatprep.subr.bf16.mxu0 0
        %1213 = vmatpush1.bf16.msra.mxu0 %v1195
        %1214 = vmatprep.subr.bf16.mxu0 0
        %1215 = vmatpush1.bf16.msra.mxu0 %v1196
        %1216 = vmatprep.subr.bf16.mxu0 0
        %1217 = vmatpush1.bf16.msra.mxu0 %v1197
        %1218 = vmatprep.subr.bf16.mxu0 0
        %1219 = vmatpush1.bf16.msra.mxu0 %v1198
        %1220 = vmatprep.subr.bf16.mxu0 0
        %1221 = vmatpush1.bf16.msra.mxu0 %v1199
        %1222 = vmatprep.subr.bf16.mxu0 0
        %1223 = vmatpush1.bf16.msra.mxu0 %v1200
        %1224 = vmatprep.subr.bf16.mxu0 0
        %1225 = vmatpush1.bf16.msra.mxu0 %v1201
        %1226 = vmatprep.subr.bf16.mxu0 0
        %1227 = vmatpush1.bf16.msra.mxu0 0
        %1228 = vmatprep.subr.bf16.mxu0 0
        %1229 = vmatpush1.bf16.msra.mxu0 0
        %1230 = vmatprep.subr.bf16.mxu0 0
        %1231 = vmatpush1.bf16.msra.mxu0 0
        %1232 = vmatprep.subr.bf16.mxu0 0
        %1233 = vmatpush1.bf16.msra.mxu0 0
        %1234 = vmatprep.subr.bf16.mxu0 0
        %1235 = vmatpush1.bf16.msra.mxu0 0
        %1236 = vmatprep.subr.bf16.mxu0 0
        %1237 = vmatpush1.bf16.msra.mxu0 0
        %1238 = vmatprep.subr.bf16.mxu0 0
        %1239 = vmatpush1.bf16.msra.mxu0 0
        %1240 = vmatprep.subr.bf16.mxu0 0
        %1241 = vmatpush1.bf16.msra.mxu0 0
        %1242 = vmatprep.mubr.bf16.mxu0 0
        %1243 = vmatmul.mubr.bf16.gmra.mrb[0].mxu0 %v1056
        %v1244 = vpop.f32.mrb[0].mxu0
        %v1245 = vadd.f32 %v1155, %v1244
        %v1246 = vpop.f32.mrb[0].mxu0
        %v1247 = vpop.f32.mrb[0].mxu0
        %v1248 = vadd.f32 %v1158, %v1247
        %v1249 = vpop.f32.mrb[0].mxu0
        %1250 = vdwg.mxu0
        %s1251 = scalar_lea.vmem %s3, 128
        %v1252 = vld [vmem:[%s1251] sm:$0xf]
        %v1253 = vld [vmem:[%s1251 + $0x4] sm:$0xf]
        %v1254 = vld [vmem:[%s1251 + $0x8] sm:$0xf]
        %v1255 = vld [vmem:[%s1251 + $0xc] sm:$0xf]
        %v1256 = vld [vmem:[%s1251 + $0x10] sm:$0xf]
        %v1257 = vld [vmem:[%s1251 + $0x14] sm:$0xf]
        %v1258 = vld [vmem:[%s1251 + $0x18] sm:$0xf]
        %v1259 = vld [vmem:[%s1251 + $0x1c] sm:$0xf]
        %v1260 = vld [vmem:[%s1251 + $0x20] sm:$0xf]
        %v1261 = vld [vmem:[%s1251 + $0x24] sm:$0xf]
        %v1262 = vld [vmem:[%s1251 + $0x28] sm:$0xf]
        %v1263 = vld [vmem:[%s1251 + $0x2c] sm:$0xf]
        %v1264 = vld [vmem:[%s1251 + $0x30] sm:$0xf]
        %v1265 = vld [vmem:[%s1251 + $0x34] sm:$0xf]
        %v1266 = vld [vmem:[%s1251 + $0x38] sm:$0xf]
        %v1267 = vld [vmem:[%s1251 + $0x3c] sm:$0xf]
        %vm1268 = vcmask 1046528
        %v1269 = vrot.slane %v1056, 1
        %v1270 = vrot.slane %v1057, 1
        %v1271 = vsel %vm1268, %v1269, %v1270
        %v1289 = vunpack.c.l.b16 %v1252
        %v1290 = vunpack.c.l.b16 %v1253
        %v1291 = vunpack.c.l.b16 %v1254
        %v1292 = vunpack.c.l.b16 %v1255
        %v1293 = vunpack.c.l.b16 %v1256
        %v1294 = vunpack.c.l.b16 %v1257
        %v1295 = vunpack.c.l.b16 %v1258
        %v1296 = vunpack.c.l.b16 %v1259
        %v1297 = vunpack.c.l.b16 %v1260
        %v1298 = vunpack.c.l.b16 %v1261
        %v1299 = vunpack.c.l.b16 %v1262
        %v1300 = vunpack.c.l.b16 %v1263
        %v1301 = vunpack.c.l.b16 %v1264
        %v1302 = vunpack.c.l.b16 %v1265
        %v1303 = vunpack.c.l.b16 %v1266
        %v1304 = vunpack.c.l.b16 %v1267
        %v1305 = vpack.c.b16 %v1290, %v1289
        %v1306 = vpack.c.b16 %v1292, %v1291
        %v1307 = vpack.c.b16 %v1294, %v1293
        %v1308 = vpack.c.b16 %v1296, %v1295
        %v1309 = vpack.c.b16 %v1298, %v1297
        %v1310 = vpack.c.b16 %v1300, %v1299
        %v1311 = vpack.c.b16 %v1302, %v1301
        %v1312 = vpack.c.b16 %v1304, %v1303
        %1321 = vmatprep.subr.bf16.mxu0 0
        %1322 = vmatpush1.bf16.msra.mxu0 %v1305
        %1323 = vmatprep.subr.bf16.mxu0 0
        %1324 = vmatpush1.bf16.msra.mxu0 %v1306
        %1325 = vmatprep.subr.bf16.mxu0 0
        %1326 = vmatpush1.bf16.msra.mxu0 %v1307
        %1327 = vmatprep.subr.bf16.mxu0 0
        %1328 = vmatpush1.bf16.msra.mxu0 %v1308
        %1329 = vmatprep.subr.bf16.mxu0 0
        %1330 = vmatpush1.bf16.msra.mxu0 %v1309
        %1331 = vmatprep.subr.bf16.mxu0 0
        %1332 = vmatpush1.bf16.msra.mxu0 %v1310
        %1333 = vmatprep.subr.bf16.mxu0 0
        %1334 = vmatpush1.bf16.msra.mxu0 %v1311
        %1335 = vmatprep.subr.bf16.mxu0 0
        %1336 = vmatpush1.bf16.msra.mxu0 %v1312
        %1337 = vmatprep.subr.bf16.mxu0 0
        %1338 = vmatpush1.bf16.msra.mxu0 0
        %1339 = vmatprep.subr.bf16.mxu0 0
        %1340 = vmatpush1.bf16.msra.mxu0 0
        %1341 = vmatprep.subr.bf16.mxu0 0
        %1342 = vmatpush1.bf16.msra.mxu0 0
        %1343 = vmatprep.subr.bf16.mxu0 0
        %1344 = vmatpush1.bf16.msra.mxu0 0
        %1345 = vmatprep.subr.bf16.mxu0 0
        %1346 = vmatpush1.bf16.msra.mxu0 0
        %1347 = vmatprep.subr.bf16.mxu0 0
        %1348 = vmatpush1.bf16.msra.mxu0 0
        %1349 = vmatprep.subr.bf16.mxu0 0
        %1350 = vmatpush1.bf16.msra.mxu0 0
        %1351 = vmatprep.subr.bf16.mxu0 0
        %1352 = vmatpush1.bf16.msra.mxu0 0
        %1353 = vmatprep.mubr.bf16.mxu0 0
        %1354 = vmatmul.mubr.bf16.gmra.mrb[0].mxu0 %v1271
        %v1355 = vpop.f32.mrb[0].mxu0
        %v1356 = vadd.f32 0.0, %v1355
        %v1357 = vpop.f32.mrb[0].mxu0
        %v1358 = vpop.f32.mrb[0].mxu0
        %v1359 = vadd.f32 0.0, %v1358
        %v1360 = vpop.f32.mrb[0].mxu0
        %1361 = vdwg.mxu0
        %v1362 = vadd.f32 %v1245, %v1356
        %v1363 = vadd.f32 %v1248, %v1359
        %s1364 = sadd.s32 %s1004, 1
        %s1365 = smul.u32 %s1364, 3
        %s1366 = smul.addr %s1365, 4
        %s1367 = scalar_lea.vmem [#allocation2], %s1366
        %v1368 = vld [vmem:[%s1367] sm:$0xf]
        %v1369 = vld [vmem:[%s1367 + $0x4] sm:$0xf]
        %v1370 = vld [vmem:[%s1367 + $0x8] sm:$0x1]
        %s1371 = scalar_lea.vmem %s3, 192
        %v1372 = vld [vmem:[%s1371] sm:$0xf]
        %v1373 = vld [vmem:[%s1371 + $0x4] sm:$0xf]
        %v1374 = vld [vmem:[%s1371 + $0x8] sm:$0xf]
        %v1375 = vld [vmem:[%s1371 + $0xc] sm:$0xf]
        %v1376 = vld [vmem:[%s1371 + $0x10] sm:$0xf]
        %v1377 = vld [vmem:[%s1371 + $0x14] sm:$0xf]
        %v1378 = vld [vmem:[%s1371 + $0x18] sm:$0xf]
        %v1379 = vld [vmem:[%s1371 + $0x1c] sm:$0xf]
        %v1380 = vld [vmem:[%s1371 + $0x20] sm:$0xf]
        %v1381 = vld [vmem:[%s1371 + $0x24] sm:$0xf]
        %v1382 = vld [vmem:[%s1371 + $0x28] sm:$0xf]
        %v1383 = vld [vmem:[%s1371 + $0x2c] sm:$0xf]
        %v1384 = vld [vmem:[%s1371 + $0x30] sm:$0xf]
        %v1385 = vld [vmem:[%s1371 + $0x34] sm:$0xf]
        %v1386 = vld [vmem:[%s1371 + $0x38] sm:$0xf]
        %v1387 = vld [vmem:[%s1371 + $0x3c] sm:$0xf]
        %v1390 = vunpack.c.l.b16 %v1368
        %v1391 = vunpack.c.l.b16 %v1369
        %v1392 = vpack.c.b16 %v1391, %v1390
        %v1410 = vunpack.c.l.b16 %v1372
        %v1411 = vunpack.c.l.b16 %v1373
        %v1412 = vunpack.c.l.b16 %v1374
        %v1413 = vunpack.c.l.b16 %v1375
        %v1414 = vunpack.c.l.b16 %v1376
        %v1415 = vunpack.c.l.b16 %v1377
        %v1416 = vunpack.c.l.b16 %v1378
        %v1417 = vunpack.c.l.b16 %v1379
        %v1418 = vunpack.c.l.b16 %v1380
        %v1419 = vunpack.c.l.b16 %v1381
        %v1420 = vunpack.c.l.b16 %v1382
        %v1421 = vunpack.c.l.b16 %v1383
        %v1422 = vunpack.c.l.b16 %v1384
        %v1423 = vunpack.c.l.b16 %v1385
        %v1424 = vunpack.c.l.b16 %v1386
        %v1425 = vunpack.c.l.b16 %v1387
        %v1426 = vpack.c.b16 %v1411, %v1410
        %v1427 = vpack.c.b16 %v1413, %v1412
        %v1428 = vpack.c.b16 %v1415, %v1414
        %v1429 = vpack.c.b16 %v1417, %v1416
        %v1430 = vpack.c.b16 %v1419, %v1418
        %v1431 = vpack.c.b16 %v1421, %v1420
        %v1432 = vpack.c.b16 %v1423, %v1422
        %v1433 = vpack.c.b16 %v1425, %v1424
        %1442 = vmatprep.subr.bf16.mxu0 0
        %1443 = vmatpush1.bf16.msra.mxu0 %v1426
        %1444 = vmatprep.subr.bf16.mxu0 0
        %1445 = vmatpush1.bf16.msra.mxu0 %v1427
        %1446 = vmatprep.subr.bf16.mxu0 0
        %1447 = vmatpush1.bf16.msra.mxu0 %v1428
        %1448 = vmatprep.subr.bf16.mxu0 0
        %1449 = vmatpush1.bf16.msra.mxu0 %v1429
        %1450 = vmatprep.subr.bf16.mxu0 0
        %1451 = vmatpush1.bf16.msra.mxu0 %v1430
        %1452 = vmatprep.subr.bf16.mxu0 0
        %1453 = vmatpush1.bf16.msra.mxu0 %v1431
        %1454 = vmatprep.subr.bf16.mxu0 0
        %1455 = vmatpush1.bf16.msra.mxu0 %v1432
        %1456 = vmatprep.subr.bf16.mxu0 0
        %1457 = vmatpush1.bf16.msra.mxu0 %v1433
        %1458 = vmatprep.subr.bf16.mxu0 0
        %1459 = vmatpush1.bf16.msra.mxu0 0
        %1460 = vmatprep.subr.bf16.mxu0 0
        %1461 = vmatpush1.bf16.msra.mxu0 0
        %1462 = vmatprep.subr.bf16.mxu0 0
        %1463 = vmatpush1.bf16.msra.mxu0 0
        %1464 = vmatprep.subr.bf16.mxu0 0
        %1465 = vmatpush1.bf16.msra.mxu0 0
        %1466 = vmatprep.subr.bf16.mxu0 0
        %1467 = vmatpush1.bf16.msra.mxu0 0
        %1468 = vmatprep.subr.bf16.mxu0 0
        %1469 = vmatpush1.bf16.msra.mxu0 0
        %1470 = vmatprep.subr.bf16.mxu0 0
        %1471 = vmatpush1.bf16.msra.mxu0 0
        %1472 = vmatprep.subr.bf16.mxu0 0
        %1473 = vmatpush1.bf16.msra.mxu0 0
        %1474 = vmatprep.mubr.bf16.mxu0 0
        %1475 = vmatmul.mubr.bf16.gmra.mrb[0].mxu0 %v1392
        %v1476 = vpop.f32.mrb[0].mxu0
        %v1477 = vadd.f32 0.0, %v1476
        %v1478 = vpop.f32.mrb[0].mxu0
        %v1479 = vpop.f32.mrb[0].mxu0
        %v1480 = vadd.f32 0.0, %v1479
        %v1481 = vpop.f32.mrb[0].mxu0
        %1482 = vdwg.mxu0
        %v1483 = vadd.f32 %v1362, %v1477
        %v1484 = vadd.f32 %v1363, %v1480
        %s1485 = scalar_lea.vmem %s3, 256
        %v1486 = vld [vmem:[%s1485] sm:$0xf]
        %v1487 = vld [vmem:[%s1485 + $0x4] sm:$0xf]
        %v1488 = vld [vmem:[%s1485 + $0x8] sm:$0xf]
        %v1489 = vld [vmem:[%s1485 + $0xc] sm:$0xf]
        %v1490 = vld [vmem:[%s1485 + $0x10] sm:$0xf]
        %v1491 = vld [vmem:[%s1485 + $0x14] sm:$0xf]
        %v1492 = vld [vmem:[%s1485 + $0x18] sm:$0xf]
        %v1493 = vld [vmem:[%s1485 + $0x1c] sm:$0xf]
        %v1494 = vld [vmem:[%s1485 + $0x20] sm:$0xf]
        %v1495 = vld [vmem:[%s1485 + $0x24] sm:$0xf]
        %v1496 = vld [vmem:[%s1485 + $0x28] sm:$0xf]
        %v1497 = vld [vmem:[%s1485 + $0x2c] sm:$0xf]
        %v1498 = vld [vmem:[%s1485 + $0x30] sm:$0xf]
        %v1499 = vld [vmem:[%s1485 + $0x34] sm:$0xf]
        %v1500 = vld [vmem:[%s1485 + $0x38] sm:$0xf]
        %v1501 = vld [vmem:[%s1485 + $0x3c] sm:$0xf]
        %v1503 = vunpack.c.l.b16 %v1370
        %v1504 = vpack.c.b16 %v1503, %v1503
        %v1506 = vshrl.u32 %v1392, 16
        %v1508 = vshll.u32 %v1392, 16
        %v1510 = vrot.slane %v1508, 1
        %v1511 = vor.u32 %v1506, %v1510
        %v1513 = vshll.u32 %v1504, 16
        %v1515 = vrot.slane %v1513, 1
        %v1516 = vsel %vm1058, %v1511, %v1515
        %v1534 = vunpack.c.l.b16 %v1486
        %v1535 = vunpack.c.l.b16 %v1487
        %v1536 = vunpack.c.l.b16 %v1488
        %v1537 = vunpack.c.l.b16 %v1489
        %v1538 = vunpack.c.l.b16 %v1490
        %v1539 = vunpack.c.l.b16 %v1491
        %v1540 = vunpack.c.l.b16 %v1492
        %v1541 = vunpack.c.l.b16 %v1493
        %v1542 = vunpack.c.l.b16 %v1494
        %v1543 = vunpack.c.l.b16 %v1495
        %v1544 = vunpack.c.l.b16 %v1496
        %v1545 = vunpack.c.l.b16 %v1497
        %v1546 = vunpack.c.l.b16 %v1498
        %v1547 = vunpack.c.l.b16 %v1499
        %v1548 = vunpack.c.l.b16 %v1500
        %v1549 = vunpack.c.l.b16 %v1501
        %v1550 = vpack.c.b16 %v1535, %v1534
        %v1551 = vpack.c.b16 %v1537, %v1536
        %v1552 = vpack.c.b16 %v1539, %v1538
        %v1553 = vpack.c.b16 %v1541, %v1540
        %v1554 = vpack.c.b16 %v1543, %v1542
        %v1555 = vpack.c.b16 %v1545, %v1544
        %v1556 = vpack.c.b16 %v1547, %v1546
        %v1557 = vpack.c.b16 %v1549, %v1548
        %1566 = vmatprep.subr.bf16.mxu0 0
        %1567 = vmatpush1.bf16.msra.mxu0 %v1550
        %1568 = vmatprep.subr.bf16.mxu0 0
        %1569 = vmatpush1.bf16.msra.mxu0 %v1551
        %1570 = vmatprep.subr.bf16.mxu0 0
        %1571 = vmatpush1.bf16.msra.mxu0 %v1552
        %1572 = vmatprep.subr.bf16.mxu0 0
        %1573 = vmatpush1.bf16.msra.mxu0 %v1553
        %1574 = vmatprep.subr.bf16.mxu0 0
        %1575 = vmatpush1.bf16.msra.mxu0 %v1554
        %1576 = vmatprep.subr.bf16.mxu0 0
        %1577 = vmatpush1.bf16.msra.mxu0 %v1555
        %1578 = vmatprep.subr.bf16.mxu0 0
        %1579 = vmatpush1.bf16.msra.mxu0 %v1556
        %1580 = vmatprep.subr.bf16.mxu0 0
        %1581 = vmatpush1.bf16.msra.mxu0 %v1557
        %1582 = vmatprep.subr.bf16.mxu0 0
        %1583 = vmatpush1.bf16.msra.mxu0 0
        %1584 = vmatprep.subr.bf16.mxu0 0
        %1585 = vmatpush1.bf16.msra.mxu0 0
        %1586 = vmatprep.subr.bf16.mxu0 0
        %1587 = vmatpush1.bf16.msra.mxu0 0
        %1588 = vmatprep.subr.bf16.mxu0 0
        %1589 = vmatpush1.bf16.msra.mxu0 0
        %1590 = vmatprep.subr.bf16.mxu0 0
        %1591 = vmatpush1.bf16.msra.mxu0 0
        %1592 = vmatprep.subr.bf16.mxu0 0
        %1593 = vmatpush1.bf16.msra.mxu0 0
        %1594 = vmatprep.subr.bf16.mxu0 0
        %1595 = vmatpush1.bf16.msra.mxu0 0
        %1596 = vmatprep.subr.bf16.mxu0 0
        %1597 = vmatpush1.bf16.msra.mxu0 0
        %1598 = vmatprep.mubr.bf16.mxu0 0
        %1599 = vmatmul.mubr.bf16.gmra.mrb[0].mxu0 %v1516
        %v1600 = vpop.f32.mrb[0].mxu0
        %v1601 = vadd.f32 0.0, %v1600
        %v1602 = vpop.f32.mrb[0].mxu0
        %v1603 = vpop.f32.mrb[0].mxu0
        %v1604 = vadd.f32 0.0, %v1603
        %v1605 = vpop.f32.mrb[0].mxu0
        %1606 = vdwg.mxu0
        %v1607 = vadd.f32 %v1483, %v1601
        %v1608 = vadd.f32 %v1484, %v1604
        %s1609 = scalar_lea.vmem %s3, 320
        %v1610 = vld [vmem:[%s1609] sm:$0xf]
        %v1611 = vld [vmem:[%s1609 + $0x4] sm:$0xf]
        %v1612 = vld [vmem:[%s1609 + $0x8] sm:$0xf]
        %v1613 = vld [vmem:[%s1609 + $0xc] sm:$0xf]
        %v1614 = vld [vmem:[%s1609 + $0x10] sm:$0xf]
        %v1615 = vld [vmem:[%s1609 + $0x14] sm:$0xf]
        %v1616 = vld [vmem:[%s1609 + $0x18] sm:$0xf]
        %v1617 = vld [vmem:[%s1609 + $0x1c] sm:$0xf]
        %v1618 = vld [vmem:[%s1609 + $0x20] sm:$0xf]
        %v1619 = vld [vmem:[%s1609 + $0x24] sm:$0xf]
        %v1620 = vld [vmem:[%s1609 + $0x28] sm:$0xf]
        %v1621 = vld [vmem:[%s1609 + $0x2c] sm:$0xf]
        %v1622 = vld [vmem:[%s1609 + $0x30] sm:$0xf]
        %v1623 = vld [vmem:[%s1609 + $0x34] sm:$0xf]
        %v1624 = vld [vmem:[%s1609 + $0x38] sm:$0xf]
        %v1625 = vld [vmem:[%s1609 + $0x3c] sm:$0xf]
        %v1626 = vrot.slane %v1392, 1
        %v1627 = vrot.slane %v1504, 1
        %v1628 = vsel %vm1268, %v1626, %v1627
        %v1646 = vunpack.c.l.b16 %v1610
        %v1647 = vunpack.c.l.b16 %v1611
        %v1648 = vunpack.c.l.b16 %v1612
        %v1649 = vunpack.c.l.b16 %v1613
        %v1650 = vunpack.c.l.b16 %v1614
        %v1651 = vunpack.c.l.b16 %v1615
        %v1652 = vunpack.c.l.b16 %v1616
        %v1653 = vunpack.c.l.b16 %v1617
        %v1654 = vunpack.c.l.b16 %v1618
        %v1655 = vunpack.c.l.b16 %v1619
        %v1656 = vunpack.c.l.b16 %v1620
        %v1657 = vunpack.c.l.b16 %v1621
        %v1658 = vunpack.c.l.b16 %v1622
        %v1659 = vunpack.c.l.b16 %v1623
        %v1660 = vunpack.c.l.b16 %v1624
        %v1661 = vunpack.c.l.b16 %v1625
        %v1662 = vpack.c.b16 %v1647, %v1646
        %v1663 = vpack.c.b16 %v1649, %v1648
        %v1664 = vpack.c.b16 %v1651, %v1650
        %v1665 = vpack.c.b16 %v1653, %v1652
        %v1666 = vpack.c.b16 %v1655, %v1654
        %v1667 = vpack.c.b16 %v1657, %v1656
        %v1668 = vpack.c.b16 %v1659, %v1658
        %v1669 = vpack.c.b16 %v1661, %v1660
        %1678 = vmatprep.subr.bf16.mxu0 0
        %1679 = vmatpush1.bf16.msra.mxu0 %v1662
        %1680 = vmatprep.subr.bf16.mxu0 0
        %1681 = vmatpush1.bf16.msra.mxu0 %v1663
        %1682 = vmatprep.subr.bf16.mxu0 0
        %1683 = vmatpush1.bf16.msra.mxu0 %v1664
        %1684 = vmatprep.subr.bf16.mxu0 0
        %1685 = vmatpush1.bf16.msra.mxu0 %v1665
        %1686 = vmatprep.subr.bf16.mxu0 0
        %1687 = vmatpush1.bf16.msra.mxu0 %v1666
        %1688 = vmatprep.subr.bf16.mxu0 0
        %1689 = vmatpush1.bf16.msra.mxu0 %v1667
        %1690 = vmatprep.subr.bf16.mxu0 0
        %1691 = vmatpush1.bf16.msra.mxu0 %v1668
        %1692 = vmatprep.subr.bf16.mxu0 0
        %1693 = vmatpush1.bf16.msra.mxu0 %v1669
        %1694 = vmatprep.subr.bf16.mxu0 0
        %1695 = vmatpush1.bf16.msra.mxu0 0
        %1696 = vmatprep.subr.bf16.mxu0 0
        %1697 = vmatpush1.bf16.msra.mxu0 0
        %1698 = vmatprep.subr.bf16.mxu0 0
        %1699 = vmatpush1.bf16.msra.mxu0 0
        %1700 = vmatprep.subr.bf16.mxu0 0
        %1701 = vmatpush1.bf16.msra.mxu0 0
        %1702 = vmatprep.subr.bf16.mxu0 0
        %1703 = vmatpush1.bf16.msra.mxu0 0
        %1704 = vmatprep.subr.bf16.mxu0 0
        %1705 = vmatpush1.bf16.msra.mxu0 0
        %1706 = vmatprep.subr.bf16.mxu0 0
        %1707 = vmatpush1.bf16.msra.mxu0 0
        %1708 = vmatprep.subr.bf16.mxu0 0
        %1709 = vmatpush1.bf16.msra.mxu0 0
        %1710 = vmatprep.mubr.bf16.mxu0 0
        %1711 = vmatmul.mubr.bf16.gmra.mrb[0].mxu0 %v1628
        %v1712 = vpop.f32.mrb[0].mxu0
        %v1713 = vadd.f32 0.0, %v1712
        %v1714 = vpop.f32.mrb[0].mxu0
        %v1715 = vpop.f32.mrb[0].mxu0
        %v1716 = vadd.f32 0.0, %v1715
        %v1717 = vpop.f32.mrb[0].mxu0
        %1718 = vdwg.mxu0
        %v1719 = vadd.f32 %v1607, %v1713
        %v1720 = vadd.f32 %v1608, %v1716
        %s1721 = sadd.s32 %s1004, 2
        %s1722 = smul.u32 %s1721, 3
        %s1723 = smul.addr %s1722, 4
        %s1724 = scalar_lea.vmem [#allocation2], %s1723
        %v1725 = vld [vmem:[%s1724] sm:$0xf]
        %v1726 = vld [vmem:[%s1724 + $0x4] sm:$0xf]
        %v1727 = vld [vmem:[%s1724 + $0x8] sm:$0x1]
        %s1728 = scalar_lea.vmem %s3, 384
        %v1729 = vld [vmem:[%s1728] sm:$0xf]
        %v1730 = vld [vmem:[%s1728 + $0x4] sm:$0xf]
        %v1731 = vld [vmem:[%s1728 + $0x8] sm:$0xf]
        %v1732 = vld [vmem:[%s1728 + $0xc] sm:$0xf]
        %v1733 = vld [vmem:[%s1728 + $0x10] sm:$0xf]
        %v1734 = vld [vmem:[%s1728 + $0x14] sm:$0xf]
        %v1735 = vld [vmem:[%s1728 + $0x18] sm:$0xf]
        %v1736 = vld [vmem:[%s1728 + $0x1c] sm:$0xf]
        %v1737 = vld [vmem:[%s1728 + $0x20] sm:$0xf]
        %v1738 = vld [vmem:[%s1728 + $0x24] sm:$0xf]
        %v1739 = vld [vmem:[%s1728 + $0x28] sm:$0xf]
        %v1740 = vld [vmem:[%s1728 + $0x2c] sm:$0xf]
        %v1741 = vld [vmem:[%s1728 + $0x30] sm:$0xf]
        %v1742 = vld [vmem:[%s1728 + $0x34] sm:$0xf]
        %v1743 = vld [vmem:[%s1728 + $0x38] sm:$0xf]
        %v1744 = vld [vmem:[%s1728 + $0x3c] sm:$0xf]
        %v1747 = vunpack.c.l.b16 %v1725
        %v1748 = vunpack.c.l.b16 %v1726
        %v1749 = vpack.c.b16 %v1748, %v1747
        %v1767 = vunpack.c.l.b16 %v1729
        %v1768 = vunpack.c.l.b16 %v1730
        %v1769 = vunpack.c.l.b16 %v1731
        %v1770 = vunpack.c.l.b16 %v1732
        %v1771 = vunpack.c.l.b16 %v1733
        %v1772 = vunpack.c.l.b16 %v1734
        %v1773 = vunpack.c.l.b16 %v1735
        %v1774 = vunpack.c.l.b16 %v1736
        %v1775 = vunpack.c.l.b16 %v1737
        %v1776 = vunpack.c.l.b16 %v1738
        %v1777 = vunpack.c.l.b16 %v1739
        %v1778 = vunpack.c.l.b16 %v1740
        %v1779 = vunpack.c.l.b16 %v1741
        %v1780 = vunpack.c.l.b16 %v1742
        %v1781 = vunpack.c.l.b16 %v1743
        %v1782 = vunpack.c.l.b16 %v1744
        %v1783 = vpack.c.b16 %v1768, %v1767
        %v1784 = vpack.c.b16 %v1770, %v1769
        %v1785 = vpack.c.b16 %v1772, %v1771
        %v1786 = vpack.c.b16 %v1774, %v1773
        %v1787 = vpack.c.b16 %v1776, %v1775
        %v1788 = vpack.c.b16 %v1778, %v1777
        %v1789 = vpack.c.b16 %v1780, %v1779
        %v1790 = vpack.c.b16 %v1782, %v1781
        %1799 = vmatprep.subr.bf16.mxu0 0
        %1800 = vmatpush1.bf16.msra.mxu0 %v1783
        %1801 = vmatprep.subr.bf16.mxu0 0
        %1802 = vmatpush1.bf16.msra.mxu0 %v1784
        %1803 = vmatprep.subr.bf16.mxu0 0
        %1804 = vmatpush1.bf16.msra.mxu0 %v1785
        %1805 = vmatprep.subr.bf16.mxu0 0
        %1806 = vmatpush1.bf16.msra.mxu0 %v1786
        %1807 = vmatprep.subr.bf16.mxu0 0
        %1808 = vmatpush1.bf16.msra.mxu0 %v1787
        %1809 = vmatprep.subr.bf16.mxu0 0
        %1810 = vmatpush1.bf16.msra.mxu0 %v1788
        %1811 = vmatprep.subr.bf16.mxu0 0
        %1812 = vmatpush1.bf16.msra.mxu0 %v1789
        %1813 = vmatprep.subr.bf16.mxu0 0
        %1814 = vmatpush1.bf16.msra.mxu0 %v1790
        %1815 = vmatprep.subr.bf16.mxu0 0
        %1816 = vmatpush1.bf16.msra.mxu0 0
        %1817 = vmatprep.subr.bf16.mxu0 0
        %1818 = vmatpush1.bf16.msra.mxu0 0
        %1819 = vmatprep.subr.bf16.mxu0 0
        %1820 = vmatpush1.bf16.msra.mxu0 0
        %1821 = vmatprep.subr.bf16.mxu0 0
        %1822 = vmatpush1.bf16.msra.mxu0 0
        %1823 = vmatprep.subr.bf16.mxu0 0
        %1824 = vmatpush1.bf16.msra.mxu0 0
        %1825 = vmatprep.subr.bf16.mxu0 0
        %1826 = vmatpush1.bf16.msra.mxu0 0
        %1827 = vmatprep.subr.bf16.mxu0 0
        %1828 = vmatpush1.bf16.msra.mxu0 0
        %1829 = vmatprep.subr.bf16.mxu0 0
        %1830 = vmatpush1.bf16.msra.mxu0 0
        %1831 = vmatprep.mubr.bf16.mxu0 0
        %1832 = vmatmul.mubr.bf16.gmra.mrb[0].mxu0 %v1749
        %v1833 = vpop.f32.mrb[0].mxu0
        %v1834 = vadd.f32 0.0, %v1833
        %v1835 = vpop.f32.mrb[0].mxu0
        %v1836 = vpop.f32.mrb[0].mxu0
        %v1837 = vadd.f32 0.0, %v1836
        %v1838 = vpop.f32.mrb[0].mxu0
        %1839 = vdwg.mxu0
        %v1840 = vadd.f32 %v1719, %v1834
        %v1841 = vadd.f32 %v1720, %v1837
        %s1842 = scalar_lea.vmem %s3, 448
        %v1843 = vld [vmem:[%s1842] sm:$0xf]
        %v1844 = vld [vmem:[%s1842 + $0x4] sm:$0xf]
        %v1845 = vld [vmem:[%s1842 + $0x8] sm:$0xf]
        %v1846 = vld [vmem:[%s1842 + $0xc] sm:$0xf]
        %v1847 = vld [vmem:[%s1842 + $0x10] sm:$0xf]
        %v1848 = vld [vmem:[%s1842 + $0x14] sm:$0xf]
        %v1849 = vld [vmem:[%s1842 + $0x18] sm:$0xf]
        %v1850 = vld [vmem:[%s1842 + $0x1c] sm:$0xf]
        %v1851 = vld [vmem:[%s1842 + $0x20] sm:$0xf]
        %v1852 = vld [vmem:[%s1842 + $0x24] sm:$0xf]
        %v1853 = vld [vmem:[%s1842 + $0x28] sm:$0xf]
        %v1854 = vld [vmem:[%s1842 + $0x2c] sm:$0xf]
        %v1855 = vld [vmem:[%s1842 + $0x30] sm:$0xf]
        %v1856 = vld [vmem:[%s1842 + $0x34] sm:$0xf]
        %v1857 = vld [vmem:[%s1842 + $0x38] sm:$0xf]
        %v1858 = vld [vmem:[%s1842 + $0x3c] sm:$0xf]
        %v1860 = vunpack.c.l.b16 %v1727
        %v1861 = vpack.c.b16 %v1860, %v1860
        %v1863 = vshrl.u32 %v1749, 16
        %v1865 = vshll.u32 %v1749, 16
        %v1867 = vrot.slane %v1865, 1
        %v1868 = vor.u32 %v1863, %v1867
        %v1870 = vshll.u32 %v1861, 16
        %v1872 = vrot.slane %v1870, 1
        %v1873 = vsel %vm1058, %v1868, %v1872
        %v1891 = vunpack.c.l.b16 %v1843
        %v1892 = vunpack.c.l.b16 %v1844
        %v1893 = vunpack.c.l.b16 %v1845
        %v1894 = vunpack.c.l.b16 %v1846
        %v1895 = vunpack.c.l.b16 %v1847
        %v1896 = vunpack.c.l.b16 %v1848
        %v1897 = vunpack.c.l.b16 %v1849
        %v1898 = vunpack.c.l.b16 %v1850
        %v1899 = vunpack.c.l.b16 %v1851
        %v1900 = vunpack.c.l.b16 %v1852
        %v1901 = vunpack.c.l.b16 %v1853
        %v1902 = vunpack.c.l.b16 %v1854
        %v1903 = vunpack.c.l.b16 %v1855
        %v1904 = vunpack.c.l.b16 %v1856
        %v1905 = vunpack.c.l.b16 %v1857
        %v1906 = vunpack.c.l.b16 %v1858
        %v1907 = vpack.c.b16 %v1892, %v1891
        %v1908 = vpack.c.b16 %v1894, %v1893
        %v1909 = vpack.c.b16 %v1896, %v1895
        %v1910 = vpack.c.b16 %v1898, %v1897
        %v1911 = vpack.c.b16 %v1900, %v1899
        %v1912 = vpack.c.b16 %v1902, %v1901
        %v1913 = vpack.c.b16 %v1904, %v1903
        %v1914 = vpack.c.b16 %v1906, %v1905
        %1923 = vmatprep.subr.bf16.mxu0 0
        %1924 = vmatpush1.bf16.msra.mxu0 %v1907
        %1925 = vmatprep.subr.bf16.mxu0 0
        %1926 = vmatpush1.bf16.msra.mxu0 %v1908
        %1927 = vmatprep.subr.bf16.mxu0 0
        %1928 = vmatpush1.bf16.msra.mxu0 %v1909
        %1929 = vmatprep.subr.bf16.mxu0 0
        %1930 = vmatpush1.bf16.msra.mxu0 %v1910
        %1931 = vmatprep.subr.bf16.mxu0 0
        %1932 = vmatpush1.bf16.msra.mxu0 %v1911
        %1933 = vmatprep.subr.bf16.mxu0 0
        %1934 = vmatpush1.bf16.msra.mxu0 %v1912
        %1935 = vmatprep.subr.bf16.mxu0 0
        %1936 = vmatpush1.bf16.msra.mxu0 %v1913
        %1937 = vmatprep.subr.bf16.mxu0 0
        %1938 = vmatpush1.bf16.msra.mxu0 %v1914
        %1939 = vmatprep.subr.bf16.mxu0 0
        %1940 = vmatpush1.bf16.msra.mxu0 0
        %1941 = vmatprep.subr.bf16.mxu0 0
        %1942 = vmatpush1.bf16.msra.mxu0 0
        %1943 = vmatprep.subr.bf16.mxu0 0
        %1944 = vmatpush1.bf16.msra.mxu0 0
        %1945 = vmatprep.subr.bf16.mxu0 0
        %1946 = vmatpush1.bf16.msra.mxu0 0
        %1947 = vmatprep.subr.bf16.mxu0 0
        %1948 = vmatpush1.bf16.msra.mxu0 0
        %1949 = vmatprep.subr.bf16.mxu0 0
        %1950 = vmatpush1.bf16.msra.mxu0 0
        %1951 = vmatprep.subr.bf16.mxu0 0
        %1952 = vmatpush1.bf16.msra.mxu0 0
        %1953 = vmatprep.subr.bf16.mxu0 0
        %1954 = vmatpush1.bf16.msra.mxu0 0
        %1955 = vmatprep.mubr.bf16.mxu0 0
        %1956 = vmatmul.mubr.bf16.gmra.mrb[0].mxu0 %v1873
        %v1957 = vpop.f32.mrb[0].mxu0
        %v1958 = vadd.f32 0.0, %v1957
        %v1959 = vpop.f32.mrb[0].mxu0
        %v1960 = vpop.f32.mrb[0].mxu0
        %v1961 = vadd.f32 0.0, %v1960
        %v1962 = vpop.f32.mrb[0].mxu0
        %1963 = vdwg.mxu0
        %v1964 = vadd.f32 %v1840, %v1958
        %v1965 = vadd.f32 %v1841, %v1961
        %s1966 = scalar_lea.vmem %s3, 512
        %v1967 = vld [vmem:[%s1966] sm:$0xf]
        %v1968 = vld [vmem:[%s1966 + $0x4] sm:$0xf]
        %v1969 = vld [vmem:[%s1966 + $0x8] sm:$0xf]
        %v1970 = vld [vmem:[%s1966 + $0xc] sm:$0xf]
        %v1971 = vld [vmem:[%s1966 + $0x10] sm:$0xf]
        %v1972 = vld [vmem:[%s1966 + $0x14] sm:$0xf]
        %v1973 = vld [vmem:[%s1966 + $0x18] sm:$0xf]
        %v1974 = vld [vmem:[%s1966 + $0x1c] sm:$0xf]
        %v1975 = vld [vmem:[%s1966 + $0x20] sm:$0xf]
        %v1976 = vld [vmem:[%s1966 + $0x24] sm:$0xf]
        %v1977 = vld [vmem:[%s1966 + $0x28] sm:$0xf]
        %v1978 = vld [vmem:[%s1966 + $0x2c] sm:$0xf]
        %v1979 = vld [vmem:[%s1966 + $0x30] sm:$0xf]
        %v1980 = vld [vmem:[%s1966 + $0x34] sm:$0xf]
        %v1981 = vld [vmem:[%s1966 + $0x38] sm:$0xf]
        %v1982 = vld [vmem:[%s1966 + $0x3c] sm:$0xf]
        %v1983 = vrot.slane %v1749, 1
        %v1984 = vrot.slane %v1861, 1
        %v1985 = vsel %vm1268, %v1983, %v1984
        %v2003 = vunpack.c.l.b16 %v1967
        %v2004 = vunpack.c.l.b16 %v1968
        %v2005 = vunpack.c.l.b16 %v1969
        %v2006 = vunpack.c.l.b16 %v1970
        %v2007 = vunpack.c.l.b16 %v1971
        %v2008 = vunpack.c.l.b16 %v1972
        %v2009 = vunpack.c.l.b16 %v1973
        %v2010 = vunpack.c.l.b16 %v1974
        %v2011 = vunpack.c.l.b16 %v1975
        %v2012 = vunpack.c.l.b16 %v1976
        %v2013 = vunpack.c.l.b16 %v1977
        %v2014 = vunpack.c.l.b16 %v1978
        %v2015 = vunpack.c.l.b16 %v1979
        %v2016 = vunpack.c.l.b16 %v1980
        %v2017 = vunpack.c.l.b16 %v1981
        %v2018 = vunpack.c.l.b16 %v1982
        %v2019 = vpack.c.b16 %v2004, %v2003
        %v2020 = vpack.c.b16 %v2006, %v2005
        %v2021 = vpack.c.b16 %v2008, %v2007
        %v2022 = vpack.c.b16 %v2010, %v2009
        %v2023 = vpack.c.b16 %v2012, %v2011
        %v2024 = vpack.c.b16 %v2014, %v2013
        %v2025 = vpack.c.b16 %v2016, %v2015
        %v2026 = vpack.c.b16 %v2018, %v2017
        %2035 = vmatprep.subr.bf16.mxu0 0
        %2036 = vmatpush1.bf16.msra.mxu0 %v2019
        %2037 = vmatprep.subr.bf16.mxu0 0
        %2038 = vmatpush1.bf16.msra.mxu0 %v2020
        %2039 = vmatprep.subr.bf16.mxu0 0
        %2040 = vmatpush1.bf16.msra.mxu0 %v2021
        %2041 = vmatprep.subr.bf16.mxu0 0
        %2042 = vmatpush1.bf16.msra.mxu0 %v2022
        %2043 = vmatprep.subr.bf16.mxu0 0
        %2044 = vmatpush1.bf16.msra.mxu0 %v2023
        %2045 = vmatprep.subr.bf16.mxu0 0
        %2046 = vmatpush1.bf16.msra.mxu0 %v2024
        %2047 = vmatprep.subr.bf16.mxu0 0
        %2048 = vmatpush1.bf16.msra.mxu0 %v2025
        %2049 = vmatprep.subr.bf16.mxu0 0
        %2050 = vmatpush1.bf16.msra.mxu0 %v2026
        %2051 = vmatprep.subr.bf16.mxu0 0
        %2052 = vmatpush1.bf16.msra.mxu0 0
        %2053 = vmatprep.subr.bf16.mxu0 0
        %2054 = vmatpush1.bf16.msra.mxu0 0
        %2055 = vmatprep.subr.bf16.mxu0 0
        %2056 = vmatpush1.bf16.msra.mxu0 0
        %2057 = vmatprep.subr.bf16.mxu0 0
        %2058 = vmatpush1.bf16.msra.mxu0 0
        %2059 = vmatprep.subr.bf16.mxu0 0
        %2060 = vmatpush1.bf16.msra.mxu0 0
        %2061 = vmatprep.subr.bf16.mxu0 0
        %2062 = vmatpush1.bf16.msra.mxu0 0
        %2063 = vmatprep.subr.bf16.mxu0 0
        %2064 = vmatpush1.bf16.msra.mxu0 0
        %2065 = vmatprep.subr.bf16.mxu0 0
        %2066 = vmatpush1.bf16.msra.mxu0 0
        %2067 = vmatprep.mubr.bf16.mxu0 0
        %2068 = vmatmul.mubr.bf16.gmra.mrb[0].mxu0 %v1985
        %v2069 = vpop.f32.mrb[0].mxu0
        %v2070 = vadd.f32 0.0, %v2069
        %v2071 = vpop.f32.mrb[0].mxu0
        %v2072 = vpop.f32.mrb[0].mxu0
        %v2073 = vadd.f32 0.0, %v2072
        %v2074 = vpop.f32.mrb[0].mxu0
        %2075 = vdwg.mxu0
        %v2076 = vadd.f32 %v1964, %v2070
        %v2077 = vadd.f32 %v1965, %v2073
        %v2079 = vlaneseq
        %v2080 = vshrl.u32 %v2079, 7
        %v2081 = vsub.s32 0, %v2080
        %v2082 = vrot.slane %v1002, %v2081
        %v2084 = vadd.f32 %v2076, %v2082
        %v2085 = vadd.f32 %v2077, %v2082
        %v2086 = vpack.c.bf16 %v2085, %v2084
        %v2088 = vunpack.c.l.b16 %v2086
        %v2089 = vunpack.c.h.b16 %v2086
        %v2090 = vpack.c.b16 %v2088, %v2088
        %v2091 = vpack.c.b16 %v2089, %v2089
        %s2094 = smul.u32 %s1004, 2
        %s2095 = smul.addr %s2094, 4
        %s2096 = scalar_lea.vmem %s458, %s2095
        %2097 = vst [vmem:[%s2096] sm:$0xf] %v2090
        %2098 = vst [vmem:[%s2096 + $0x4] sm:$0xf] %v2091
        %v2099 = vadd.f32 %v2084, %v2085
        %v2100 = vrot.slane %v2099, 4
        %v2101 = vadd.f32 %v2099, %v2100
        %v2102 = vrot.slane %v2101, 2
        %v2103 = vadd.f32 %v2101, %v2102
        %v2104 = vrot.slane %v2103, 1
        %v2105 = vadd.f32 %v2103, %v2104
        %v2106 = vadd.f32 %v1009, %v2105
        %v2107 = vmul.f32 %v2084, %v2084
        %v2108 = vmul.f32 %v2085, %v2085
        %v2109 = vadd.f32 %v2107, %v2108
        %v2110 = vrot.slane %v2109, 4
        %v2111 = vadd.f32 %v2109, %v2110
        %v2112 = vrot.slane %v2111, 2
        %v2113 = vadd.f32 %v2111, %v2112
        %v2114 = vrot.slane %v2113, 1
        %v2115 = vadd.f32 %v2113, %v2114
        %v2116 = vadd.f32 %v1010, %v2115
      $region57: #{upconv_block_forward.6} parent=43 // loop_footer
        %s1008 = sadd.s32 1, %s1004
      $region58: #{upconv_block_forward.6} parent=43 // loop_footer_branch
        %1003 = sbr.rel target = $region54
      $region59: #{upconv_block_forward.6} parent=43 // loop_exit
        _
      %2117 = vst [vmem:[%s467] sm:$0x1] %v1009
      %2118 = vst [vmem:[%s467 + $0x1] sm:$0x1] %v1010
      %s2119 = smul.u32 8, %s24
      %p2120 = scmp.lt.s32.totalorder %s23, 1
      %s2121 = scalar_select %p2120, %s23, 1
      %p2122 = scmp.lt.s32.totalorder %s2119, 15
      %s2123 = scalar_select %p2122, %s2119, 15
      %s2124 = smul.addr %s2123, 2
      %s2125 = smul.addr %s2121, 32
      %s2126 = sadd.s32 %s2124, %s2125
      %s2127 = smul.addr %s2126, 4
      %s2128 = scalar_lea.vmem %s6, %s2127
      %p2129 = scmp.lt.s32.totalorder %s23, 1
      %s2130 = scalar_select %p2129, %s23, 1
      %p2131 = scmp.lt.s32.totalorder %s24, 1
      %s2132 = scalar_select %p2131, %s24, 1
      %s2133 = smul.addr %s2130, 2
      %s2134 = sadd.s32 %s2132, %s2133
      %s2135 = smul.addr %s2134, 2
      %s2136 = scalar_lea.vmem %s7, %s2135
      // Predicated region
      $region60: #{upconv_block_forward.6} parent=43 // pred_check
        %p2137 = pneg %p214
      $region61: #{upconv_block_forward.6} parent=43 // pred_check_branch
        %2139 = sbr.rel (%p2137) target = $region63
      $region62: #{upconv_block_forward.6} parent=43 // pred_region
        %s2140 = smul.u32 8, %s24
      $region63: #{upconv_block_forward.6} parent=43 // pred_fallthru
        _
      // Predicated region
      $region64: #{upconv_block_forward.6} parent=43 // pred_check
        %p2141 = pneg %p242
      $region65: #{upconv_block_forward.6} parent=43 // pred_check_branch
        %2143 = sbr.rel (%p2141) target = $region67
      $region66: #{upconv_block_forward.6} parent=43 // pred_region
        _
      $region67: #{upconv_block_forward.6} parent=43 // pred_fallthru
        _
    $region44: #{upconv_block_forward.6} parent=5 // pred_fallthru
      _
    %p2144 = scmp.le.s32.totalorder 2, %s14
    // Predicated region
    $region68: #{upconv_block_forward.6} parent=5 // pred_check
      %p2145 = pneg %p2144
    $region69: #{upconv_block_forward.6} parent=5 // pred_check_branch
      %2147 = sbr.rel (%p2145) target = $region71
    $region70: #{upconv_block_forward.6} parent=5 // pred_region
      %s2148 = ssub.s32 %s14, 2
      // Predicated region
      $region72: #{upconv_block_forward.6} parent=70 // pred_check
        %p2149 = pneg %p220
      $region73: #{upconv_block_forward.6} parent=70 // pred_check_branch
        %2151 = sbr.rel (%p2149) target = $region75
      $region74: #{upconv_block_forward.6} parent=70 // pred_region
        %s2152 = smul.u32 8, %s26
        %p2153 = scmp.lt.s32.totalorder %s25, 1
        %s2154 = scalar_select %p2153, %s25, 1
        %p2155 = scmp.lt.s32.totalorder %s2152, 15
        %s2156 = scalar_select %p2155, %s2152, 15
        %s2157 = smul.addr %s2156, 2
        %s2158 = smul.addr %s2154, 32
        %s2159 = sadd.s32 %s2157, %s2158
        %s2160 = smul.addr %s2159, 4
        %s2161 = scalar_lea.vmem %s6, %s2160
      $region75: #{upconv_block_forward.6} parent=70 // pred_fallthru
        _
      // Predicated region
      $region76: #{upconv_block_forward.6} parent=70 // pred_check
        %p2162 = pneg %p248
      $region77: #{upconv_block_forward.6} parent=70 // pred_check_branch
        %2164 = sbr.rel (%p2162) target = $region79
      $region78: #{upconv_block_forward.6} parent=70 // pred_region
        %p2165 = scmp.lt.s32.totalorder %s25, 1
        %s2166 = scalar_select %p2165, %s25, 1
        %p2167 = scmp.lt.s32.totalorder %s26, 1
        %s2168 = scalar_select %p2167, %s26, 1
        %s2169 = smul.addr %s2166, 2
        %s2170 = sadd.s32 %s2168, %s2169
        %s2171 = smul.addr %s2170, 2
        %s2172 = scalar_lea.vmem %s7, %s2171
      $region79: #{upconv_block_forward.6} parent=70 // pred_fallthru
        _
    $region71: #{upconv_block_forward.6} parent=5 // pred_fallthru
      _
  $region6: #{upconv_block_forward.6} parent=0 // loop_footer
    %s18 = sadd.s32 1, %s14
  $region7: #{upconv_block_forward.6} parent=0 // loop_footer_branch
    %13 = sbr.rel target = $region3
  $region8: #{upconv_block_forward.6} parent=0 // loop_exit
    _

</llo_original>
